<compile_context>
chip_gen: v6e
topology: v6e:2x2x1
jax: 0.10.0
libtpu: 0.0.40
codegen_flags: <defaults>
</compile_context>

<pallas_src>
import functools

import jax
import jax.numpy as jnp
from jax.experimental import pallas as pl
from jax.experimental.pallas import tpu as pltpu

_DILATIONS = (1, 2, 4, 8)
_PMAX = max(_DILATIONS)      # halo width of the padded VMEM scratch
_SMALL_C_MAX = 8             # lane-dense VPU path for C <= this


def _vmem_limit_bytes():
    """~3/4 of physical VMEM (128 MiB on v5e/v6e, 64 MiB on v7x)."""
    try:
        cap = pltpu.get_tpu_info().vmem_capacity_bytes
    except Exception:
        cap = 64 * 1024 * 1024
    return int(min(cap * 3 // 4, 100 * 1024 * 1024))


# ----------------------------------------------------------------------------
# Path A: lane-dense VPU kernel for small channel counts (C <= _SMALL_C_MAX).
# Data layout inside the kernel: (H, W*C) with W*C on lanes; padded scratch is
# (H + 2*PMAX, (W + 2*PMAX)*C).  Conv = sum over (tap, channel-delta) of
# roll(slab) * lane-periodic-weight-row.
# ----------------------------------------------------------------------------
def _dblock_kernel_lane(x_ref, w_ref, o_ref, pad_ref, acc_ref, *, H, W, C):
    f32 = jnp.float32
    WpC = (W + 2 * _PMAX) * C          # padded lane width
    WC = W * C                         # interior lane width
    lo = _PMAX * C                     # interior start lane

    # Zero only the halo ring; the interior is rewritten every stage.
    pad_ref[0:_PMAX, :] = jnp.zeros((_PMAX, WpC), f32)
    pad_ref[_PMAX + H:2 * _PMAX + H, :] = jnp.zeros((_PMAX, WpC), f32)
    pad_ref[_PMAX:_PMAX + H, 0:lo] = jnp.zeros((H, lo), f32)
    pad_ref[_PMAX:_PMAX + H, lo + WC:WpC] = jnp.zeros((H, lo), f32)

    x = x_ref[0].astype(f32)                       # (H, W*C), lane-dense
    acc_ref[...] = x                               # residual accumulator (VMEM)
    pad_ref[_PMAX:_PMAX + H, lo:lo + WC] = x       # stage-0 conv input

    for si, d in enumerate(_DILATIONS):
        conv = None                                # (H, WpC), built from 1st term
        for kh in range(3):
            r0 = _PMAX + (kh - 1) * d
            slab = pad_ref[r0:r0 + H, :]           # one full-width load per kh
            for kw in range(3):
                t = kh * 3 + kw
                base = (kw - 1) * d * C
                w_tap = w_ref[si, t]               # (2C-1, WpC) lane-periodic rows
                for dix in range(2 * C - 1):
                    delta = dix - (C - 1)          # ci - co
                    shift = base + delta
                    rolled = slab if shift == 0 else pltpu.roll(
                        slab, shift=(-shift) % WpC, axis=1)
                    wrow = w_tap[dix:dix + 1, :]   # (1, WpC)
                    term = rolled * wrow           # broadcast-MAC on the VPU
                    conv = term if conv is None else conv + term
        cur = conv[:, lo:lo + WC]                  # (H, W*C) stage output
        acc_ref[...] += cur
        if si + 1 < len(_DILATIONS):
            pad_ref[_PMAX:_PMAX + H, lo:lo + WC] = cur

    o_ref[0] = acc_ref[...].astype(o_ref.dtype)


def _forward_lane_dense(x_nhwc, w_all):
    B, H, W, C = x_nhwc.shape
    Wp = W + 2 * _PMAX
    WpC = Wp * C

    # Lane-dense presentation of input / output (free contiguous reshapes).
    x_flat = x_nhwc.reshape(B, H, W * C)

    # Lane-periodic weight rows:
    #   w_lane[s, t, delta + C-1, col*C + co] = w_all[s, t, co + delta, co]
    # (zero where co + delta falls outside [0, C)).
    w_all_f32 = w_all.astype(jnp.float32)
    deltas = jnp.arange(-(C - 1), C)                       # (2C-1,)
    co = jnp.arange(C)                                     # (C,)
    ci = co[None, :] + deltas[:, None]                     # (2C-1, C)
    valid = (ci >= 0) & (ci < C)
    gathered = w_all_f32[:, :, jnp.clip(ci, 0, C - 1), co]  # (4, 9, 2C-1, C)
    w_period = jnp.where(valid[None, None], gathered, 0.0)
    w_lane = jnp.tile(w_period, (1, 1, 1, Wp))             # (4, 9, 2C-1, WpC)

    kernel = functools.partial(_dblock_kernel_lane, H=H, W=W, C=C)
    out = pl.pallas_call(
        kernel,
        out_shape=jax.ShapeDtypeStruct((B, H, W * C), x_nhwc.dtype),
        grid_spec=pltpu.PrefetchScalarGridSpec(
            num_scalar_prefetch=0,
            grid=(B,),
            in_specs=[
                pl.BlockSpec((1, H, W * C), lambda b: (b, 0, 0)),
                pl.BlockSpec((4, 9, 2 * C - 1, WpC), lambda b: (0, 0, 0, 0)),
            ],
            out_specs=pl.BlockSpec((1, H, W * C), lambda b: (b, 0, 0)),
            scratch_shapes=[
                pltpu.VMEM((H + 2 * _PMAX, WpC), jnp.float32),  # zero-halo slab
                pltpu.VMEM((H, W * C), jnp.float32),            # residual acc
            ],
        ),
        compiler_params=pltpu.CompilerParams(
            dimension_semantics=("parallel",),
            vmem_limit_bytes=_vmem_limit_bytes(),
        ),
    )(x_flat, w_lane)
    return out.reshape(B, H, W, C)


# ----------------------------------------------------------------------------
# Path B: MXU kernel for larger channel counts (bf16 operands, f32 accumulate).
# ----------------------------------------------------------------------------
def _dblock_kernel_mxu(x_ref, w_ref, o_ref, pad_ref, acc_ref, mm_ref, *, H, W, C):
    Wp = W + 2 * _PMAX
    zdt = pad_ref.dtype   # bf16 padded slab (MXU operand dtype)

    # Zero only the halo ring.
    pad_ref[0:_PMAX, :, :] = jnp.zeros((_PMAX, Wp, C), zdt)
    pad_ref[_PMAX + H:2 * _PMAX + H, :, :] = jnp.zeros((_PMAX, Wp, C), zdt)
    pad_ref[_PMAX:_PMAX + H, 0:_PMAX, :] = jnp.zeros((H, _PMAX, C), zdt)
    pad_ref[_PMAX:_PMAX + H, _PMAX + W:Wp, :] = jnp.zeros((H, _PMAX, C), zdt)

    x = x_ref[0].astype(jnp.float32)                       # (H, W, C)
    acc_ref[...] = x.reshape(H * W, C)                     # residual acc (f32 VMEM)
    pad_ref[_PMAX:_PMAX + H, _PMAX:_PMAX + W, :] = x.astype(zdt)

    for si, d in enumerate(_DILATIONS):
        first = True
        for kh in range(3):
            r0 = _PMAX + (kh - 1) * d
            for kw in range(3):
                c0 = _PMAX + (kw - 1) * d
                patch = pad_ref[r0:r0 + H, c0:c0 + W, :].reshape(H * W, C)  # bf16
                t = jnp.dot(patch, w_ref[si, kh * 3 + kw],                  # bf16
                            preferred_element_type=jnp.float32)
                if first:
                    mm_ref[...] = t          # start from the first tap (no zeros)
                    first = False
                else:
                    mm_ref[...] += t
        cur = mm_ref[...]                                   # (H*W, C) f32
        acc_ref[...] += cur
        if si + 1 < len(_DILATIONS):
            pad_ref[_PMAX:_PMAX + H, _PMAX:_PMAX + W, :] = (
                cur.reshape(H, W, C).astype(zdt))

    o_ref[0] = acc_ref[...].reshape(H, W, C).astype(o_ref.dtype)


def _forward_mxu(x_nhwc, w_all):
    B, H, W, C = x_nhwc.shape
    w_bf16 = w_all.astype(jnp.bfloat16)                    # (4, 9, Cin, Cout)

    kernel = functools.partial(_dblock_kernel_mxu, H=H, W=W, C=C)
    out = pl.pallas_call(
        kernel,
        out_shape=jax.ShapeDtypeStruct((B, H, W, C), x_nhwc.dtype),
        grid_spec=pltpu.PrefetchScalarGridSpec(
            num_scalar_prefetch=0,
            grid=(B,),
            in_specs=[
                pl.BlockSpec((1, H, W, C), lambda b: (b, 0, 0, 0)),
                pl.BlockSpec((4, 9, C, C), lambda b: (0, 0, 0, 0)),
            ],
            out_specs=pl.BlockSpec((1, H, W, C), lambda b: (b, 0, 0, 0)),
            scratch_shapes=[
                pltpu.VMEM((H + 2 * _PMAX, W + 2 * _PMAX, C), jnp.bfloat16),
                pltpu.VMEM((H * W, C), jnp.float32),        # residual accumulator
                pltpu.VMEM((H * W, C), jnp.float32),        # per-stage conv acc
            ],
        ),
        compiler_params=pltpu.CompilerParams(
            dimension_semantics=("parallel",),
            vmem_limit_bytes=_vmem_limit_bytes(),
        ),
    )(x_nhwc, w_bf16)
    return out


# ----------------------------------------------------------------------------
# Dblock forward (NCHW in / NCHW out, matching the PyTorch module)
# ----------------------------------------------------------------------------
def dblock_forward(x_nchw, w_all):
    """x_nchw: (B, C, H, W); w_all: (4, 9, Cin, Cout) tap-major conv weights."""
    x = jnp.transpose(x_nchw, (0, 2, 3, 1))   # -> NHWC
    C = x.shape[-1]
    if C <= _SMALL_C_MAX:
        out = _forward_lane_dense(x, w_all)   # full-f32 VPU path
    else:
        out = _forward_mxu(x, w_all)          # bf16-operand MXU path
    return jnp.transpose(out, (0, 3, 1, 2))   # -> NCHW


# ----------------------------------------------------------------------------
# Parameter init (deterministic) + pure-JAX reference for validation
# ----------------------------------------------------------------------------
def init_params(key, channel, scale=0.1):
    """Returns (w_all, w_pt_list): tap-major (4,9,Cin,Cout) + PyTorch-layout list.
    Dblock zero-initialises its biases, so biases are omitted entirely."""
    w_pt_list, w_tap_list = [], []
    for k in jax.random.split(key, 4):
        w_pt = scale * jax.random.normal(k, (channel, channel, 3, 3), jnp.float32)
        w_pt_list.append(w_pt)
        w_tap_list.append(
            jnp.transpose(w_pt, (2, 3, 1, 0)).reshape(9, channel, channel))
    return jnp.stack(w_tap_list), w_pt_list


def dblock_reference(x_nchw, w_pt_list, operand_dtype=jnp.float32):
    """lax.conv reference; operand_dtype=bfloat16 mimics the MXU path's operands."""
    x = jnp.transpose(x_nchw, (0, 2, 3, 1)).astype(jnp.float32)
    prec = (jax.lax.Precision.HIGHEST if operand_dtype == jnp.float32
            else jax.lax.Precision.DEFAULT)
    out, d = x, x
    for w_pt, dil in zip(w_pt_list, _DILATIONS):
        w_hwio = jnp.transpose(w_pt, (2, 3, 1, 0)).astype(operand_dtype)
        d = jax.lax.conv_general_dilated(
            d.astype(operand_dtype), w_hwio, window_strides=(1, 1),
            padding=((dil, dil), (dil, dil)), rhs_dilation=(dil, dil),
            dimension_numbers=("NHWC", "HWIO", "NHWC"),
            preferred_element_type=jnp.float32, precision=prec)
        out = out + d
    return jnp.transpose(out, (0, 3, 1, 2))


if __name__ == "__main__":
    key = jax.random.PRNGKey(0)
    k1, k2, k3, k4 = jax.random.split(key, 4)

    # --- Toy size from the module spec: exercises the lane-dense VPU path ----
    B, C, H, W = 2, 4, 16, 16
    x = jax.random.normal(k1, (B, C, H, W), jnp.float32)      # NCHW like PyTorch
    w_all, w_pt_list = init_params(k2, C)

    out = jax.block_until_ready(dblock_forward(x, w_all))
    ref = jax.block_until_ready(dblock_reference(x, w_pt_list))
    assert out.shape == (B, C, H, W)
    assert jnp.allclose(out, ref, rtol=1e-4, atol=1e-4), "small-C mismatch"

    # --- Larger channel count: exercises the bf16 MXU path -------------------
    B2, C2, H2, W2 = 1, 128, 16, 16
    x2 = jax.random.normal(k3, (B2, C2, H2, W2), jnp.float32)
    w_all2, w_pt_list2 = init_params(k4, C2, scale=0.02)

    out2 = jax.block_until_ready(dblock_forward(x2, w_all2))
    ref2 = jax.block_until_ready(
        dblock_reference(x2, w_pt_list2, operand_dtype=jnp.bfloat16))
    assert out2.shape == (B2, C2, H2, W2)
    assert jnp.allclose(out2, ref2, rtol=1e-2, atol=1e-2), "MXU-path mismatch"

    print("KERNEL_OK")
</pallas_src>

<mosaic_0001>
module attributes {stable_mosaic.version = 11 : i64} {
  func.func @_dblock_kernel_lane(%arg0: i32, %arg1: memref<1x16x64xf32, #tpu.memory_space<vmem>>, %arg2: memref<4x9x7x128xf32, #tpu.memory_space<vmem>>, %arg3: memref<1x16x64xf32, #tpu.memory_space<vmem>>, %arg4: memref<32x128xf32, #tpu.memory_space<vmem>>, %arg5: memref<16x64xf32, #tpu.memory_space<vmem>>) attributes {dimension_semantics = [#tpu.dimension_semantics<parallel>], iteration_bounds = array<i64: 2>, scalar_prefetch = 0 : i64, scratch_operands = 2 : i64, tpu.core_type = #tpu.core_type<tc>, window_params = [{transform_indices = @transform_0, window_bounds = array<i64: 1, 16, 64>}, {pipeline_mode = #tpu.pipeline_mode<synchronous>, transform_indices = @transform_1, window_bounds = array<i64: 4, 9, 7, 128>}, {transform_indices = @transform_2, window_bounds = array<i64: 1, 16, 64>}]} {
    %cst = arith.constant 0.000000e+00 : f32
    %0 = vector.broadcast %cst : f32 to vector<8x128xf32>
    %c0 = arith.constant 0 : index
    %c0_0 = arith.constant 0 : index
    %1 = vector.load %arg4[%c0, %c0_0] : memref<32x128xf32, #tpu.memory_space<vmem>>, vector<8x128xf32>
    tpu.vector_store %arg4[%c0, %c0_0], %0 {strides = array<i32>} : memref<32x128xf32, #tpu.memory_space<vmem>>, vector<8x128xf32>,
    %cst_1 = arith.constant 0.000000e+00 : f32
    %2 = vector.broadcast %cst_1 : f32 to vector<8x128xf32>
    %c24 = arith.constant 24 : index
    %c0_2 = arith.constant 0 : index
    %3 = vector.load %arg4[%c24, %c0_2] : memref<32x128xf32, #tpu.memory_space<vmem>>, vector<8x128xf32>
    tpu.vector_store %arg4[%c24, %c0_2], %2 {strides = array<i32>} : memref<32x128xf32, #tpu.memory_space<vmem>>, vector<8x128xf32>,
    %cst_3 = arith.constant 0.000000e+00 : f32
    %4 = vector.broadcast %cst_3 : f32 to vector<16x32xf32>
    %c8 = arith.constant 8 : index
    %c0_4 = arith.constant 0 : index
    %5 = vector.load %arg4[%c8, %c0_4] : memref<32x128xf32, #tpu.memory_space<vmem>>, vector<16x32xf32>
    tpu.vector_store %arg4[%c8, %c0_4], %4 {strides = array<i32>} : memref<32x128xf32, #tpu.memory_space<vmem>>, vector<16x32xf32>,
    %cst_5 = arith.constant 0.000000e+00 : f32
    %6 = vector.broadcast %cst_5 : f32 to vector<16x32xf32>
    %c8_6 = arith.constant 8 : index
    %c96 = arith.constant 96 : index
    %7 = vector.load %arg4[%c8_6, %c96] : memref<32x128xf32, #tpu.memory_space<vmem>>, vector<16x32xf32>
    tpu.vector_store %arg4[%c8_6, %c96], %6 {strides = array<i32>} : memref<32x128xf32, #tpu.memory_space<vmem>>, vector<16x32xf32>,
    %c0_7 = arith.constant 0 : index
    %c0_8 = arith.constant 0 : index
    %c0_9 = arith.constant 0 : index
    %8 = vector.load %arg1[%c0_7, %c0_8, %c0_9] : memref<1x16x64xf32, #tpu.memory_space<vmem>>, vector<1x16x64xf32>
    %9 = vector.shape_cast %8 : vector<1x16x64xf32> to vector<16x64xf32>
    %c0_10 = arith.constant 0 : index
    %c0_11 = arith.constant 0 : index
    %10 = vector.load %arg5[%c0_10, %c0_11] : memref<16x64xf32, #tpu.memory_space<vmem>>, vector<16x64xf32>
    tpu.vector_store %arg5[%c0_10, %c0_11], %9 {strides = array<i32>} : memref<16x64xf32, #tpu.memory_space<vmem>>, vector<16x64xf32>,
    %c8_12 = arith.constant 8 : index
    %c32 = arith.constant 32 : index
    %11 = vector.load %arg4[%c8_12, %c32] : memref<32x128xf32, #tpu.memory_space<vmem>>, vector<16x64xf32>
    tpu.vector_store %arg4[%c8_12, %c32], %9 {strides = array<i32>} : memref<32x128xf32, #tpu.memory_space<vmem>>, vector<16x64xf32>,
    %c7 = arith.constant 7 : index
    %c0_13 = arith.constant 0 : index
    %12 = vector.load %arg4[%c7, %c0_13] : memref<32x128xf32, #tpu.memory_space<vmem>>, vector<16x128xf32>
    %c0_14 = arith.constant 0 : index
    %c0_15 = arith.constant 0 : index
    %c0_16 = arith.constant 0 : index
    %c0_17 = arith.constant 0 : index
    %13 = vector.load %arg2[%c0_14, %c0_15, %c0_16, %c0_17] : memref<4x9x7x128xf32, #tpu.memory_space<vmem>>, vector<1x1x7x128xf32>
    %14 = vector.shape_cast %13 : vector<1x1x7x128xf32> to vector<7x128xf32>
    %c7_i32 = arith.constant 7 : i32
    %15 = tpu.dynamic_rotate %12 by %c7_i32 dim 1 : vector<16x128xf32>, i32 -> vector<16x128xf32>
    %16 = vector.extract_strided_slice %14 {offsets = [0, 0], sizes = [1, 128], strides = [1, 1]} : vector<7x128xf32> to vector<1x128xf32>
    %17 = vector.broadcast %16 : vector<1x128xf32> to vector<16x128xf32>
    %18 = arith.mulf %15, %17 : vector<16x128xf32>
    %c6_i32 = arith.constant 6 : i32
    %19 = tpu.dynamic_rotate %12 by %c6_i32 dim 1 : vector<16x128xf32>, i32 -> vector<16x128xf32>
    %20 = vector.extract_strided_slice %14 {offsets = [1, 0], sizes = [1, 128], strides = [1, 1]} : vector<7x128xf32> to vector<1x128xf32>
    %21 = vector.broadcast %20 : vector<1x128xf32> to vector<16x128xf32>
    %22 = arith.mulf %19, %21 : vector<16x128xf32>
    %23 = arith.addf %18, %22 : vector<16x128xf32>
    %c5_i32 = arith.constant 5 : i32
    %24 = tpu.dynamic_rotate %12 by %c5_i32 dim 1 : vector<16x128xf32>, i32 -> vector<16x128xf32>
    %25 = vector.extract_strided_slice %14 {offsets = [2, 0], sizes = [1, 128], strides = [1, 1]} : vector<7x128xf32> to vector<1x128xf32>
    %26 = vector.broadcast %25 : vector<1x128xf32> to vector<16x128xf32>
    %27 = arith.mulf %24, %26 : vector<16x128xf32>
    %28 = arith.addf %23, %27 : vector<16x128xf32>
    %c4_i32 = arith.constant 4 : i32
    %29 = tpu.dynamic_rotate %12 by %c4_i32 dim 1 : vector<16x128xf32>, i32 -> vector<16x128xf32>
    %30 = vector.extract_strided_slice %14 {offsets = [3, 0], sizes = [1, 128], strides = [1, 1]} : vector<7x128xf32> to vector<1x128xf32>
    %31 = vector.broadcast %30 : vector<1x128xf32> to vector<16x128xf32>
    %32 = arith.mulf %29, %31 : vector<16x128xf32>
    %33 = arith.addf %28, %32 : vector<16x128xf32>
    %c3_i32 = arith.constant 3 : i32
    %34 = tpu.dynamic_rotate %12 by %c3_i32 dim 1 : vector<16x128xf32>, i32 -> vector<16x128xf32>
    %35 = vector.extract_strided_slice %14 {offsets = [4, 0], sizes = [1, 128], strides = [1, 1]} : vector<7x128xf32> to vector<1x128xf32>
    %36 = vector.broadcast %35 : vector<1x128xf32> to vector<16x128xf32>
    %37 = arith.mulf %34, %36 : vector<16x128xf32>
    %38 = arith.addf %33, %37 : vector<16x128xf32>
    %c2_i32 = arith.constant 2 : i32
    %39 = tpu.dynamic_rotate %12 by %c2_i32 dim 1 : vector<16x128xf32>, i32 -> vector<16x128xf32>
    %40 = vector.extract_strided_slice %14 {offsets = [5, 0], sizes = [1, 128], strides = [1, 1]} : vector<7x128xf32> to vector<1x128xf32>
    %41 = vector.broadcast %40 : vector<1x128xf32> to vector<16x128xf32>
    %42 = arith.mulf %39, %41 : vector<16x128xf32>
    %43 = arith.addf %38, %42 : vector<16x128xf32>
    %c1_i32 = arith.constant 1 : i32
    %44 = tpu.dynamic_rotate %12 by %c1_i32 dim 1 : vector<16x128xf32>, i32 -> vector<16x128xf32>
    %45 = vector.extract_strided_slice %14 {offsets = [6, 0], sizes = [1, 128], strides = [1, 1]} : vector<7x128xf32> to vector<1x128xf32>
    %46 = vector.broadcast %45 : vector<1x128xf32> to vector<16x128xf32>
    %47 = arith.mulf %44, %46 : vector<16x128xf32>
    %48 = arith.addf %43, %47 : vector<16x128xf32>
    %c0_18 = arith.constant 0 : index
    %c1 = arith.constant 1 : index
    %c0_19 = arith.constant 0 : index
    %c0_20 = arith.constant 0 : index
    %49 = vector.load %arg2[%c0_18, %c1, %c0_19, %c0_20] : memref<4x9x7x128xf32, #tpu.memory_space<vmem>>, vector<1x1x7x128xf32>
    %50 = vector.shape_cast %49 : vector<1x1x7x128xf32> to vector<7x128xf32>
    %c3_i32_21 = arith.constant 3 : i32
    %51 = tpu.dynamic_rotate %12 by %c3_i32_21 dim 1 : vector<16x128xf32>, i32 -> vector<16x128xf32>
    %52 = vector.extract_strided_slice %50 {offsets = [0, 0], sizes = [1, 128], strides = [1, 1]} : vector<7x128xf32> to vector<1x128xf32>
    %53 = vector.broadcast %52 : vector<1x128xf32> to vector<16x128xf32>
    %54 = arith.mulf %51, %53 : vector<16x128xf32>
    %55 = arith.addf %48, %54 : vector<16x128xf32>
    %c2_i32_22 = arith.constant 2 : i32
    %56 = tpu.dynamic_rotate %12 by %c2_i32_22 dim 1 : vector<16x128xf32>, i32 -> vector<16x128xf32>
    %57 = vector.extract_strided_slice %50 {offsets = [1, 0], sizes = [1, 128], strides = [1, 1]} : vector<7x128xf32> to vector<1x128xf32>
    %58 = vector.broadcast %57 : vector<1x128xf32> to vector<16x128xf32>
    %59 = arith.mulf %56, %58 : vector<16x128xf32>
    %60 = arith.addf %55, %59 : vector<16x128xf32>
    %c1_i32_23 = arith.constant 1 : i32
    %61 = tpu.dynamic_rotate %12 by %c1_i32_23 dim 1 : vector<16x128xf32>, i32 -> vector<16x128xf32>
    %62 = vector.extract_strided_slice %50 {offsets = [2, 0], sizes = [1, 128], strides = [1, 1]} : vector<7x128xf32> to vector<1x128xf32>
    %63 = vector.broadcast %62 : vector<1x128xf32> to vector<16x128xf32>
    %64 = arith.mulf %61, %63 : vector<16x128xf32>
    %65 = arith.addf %60, %64 : vector<16x128xf32>
    %66 = vector.extract_strided_slice %50 {offsets = [3, 0], sizes = [1, 128], strides = [1, 1]} : vector<7x128xf32> to vector<1x128xf32>
    %67 = vector.broadcast %66 : vector<1x128xf32> to vector<16x128xf32>
    %68 = arith.mulf %12, %67 : vector<16x128xf32>
    %69 = arith.addf %65, %68 : vector<16x128xf32>
    %c127_i32 = arith.constant 127 : i32
    %70 = tpu.dynamic_rotate %12 by %c127_i32 dim 1 : vector<16x128xf32>, i32 -> vector<16x128xf32>
    %71 = vector.extract_strided_slice %50 {offsets = [4, 0], sizes = [1, 128], strides = [1, 1]} : vector<7x128xf32> to vector<1x128xf32>
    %72 = vector.broadcast %71 : vector<1x128xf32> to vector<16x128xf32>
    %73 = arith.mulf %70, %72 : vector<16x128xf32>
    %74 = arith.addf %69, %73 : vector<16x128xf32>
    %c126_i32 = arith.constant 126 : i32
    %75 = tpu.dynamic_rotate %12 by %c126_i32 dim 1 : vector<16x128xf32>, i32 -> vector<16x128xf32>
    %76 = vector.extract_strided_slice %50 {offsets = [5, 0], sizes = [1, 128], strides = [1, 1]} : vector<7x128xf32> to vector<1x128xf32>
    %77 = vector.broadcast %76 : vector<1x128xf32> to vector<16x128xf32>
    %78 = arith.mulf %75, %77 : vector<16x128xf32>
    %79 = arith.addf %74, %78 : vector<16x128xf32>
    %c125_i32 = arith.constant 125 : i32
    %80 = tpu.dynamic_rotate %12 by %c125_i32 dim 1 : vector<16x128xf32>, i32 -> vector<16x128xf32>
    %81 = vector.extract_strided_slice %50 {offsets = [6, 0], sizes = [1, 128], strides = [1, 1]} : vector<7x128xf32> to vector<1x128xf32>
    %82 = vector.broadcast %81 : vector<1x128xf32> to vector<16x128xf32>
    %83 = arith.mulf %80, %82 : vector<16x128xf32>
    %84 = arith.addf %79, %83 : vector<16x128xf32>
    %c0_24 = arith.constant 0 : index
    %c2 = arith.constant 2 : index
    %c0_25 = arith.constant 0 : index
    %c0_26 = arith.constant 0 : index
    %85 = vector.load %arg2[%c0_24, %c2, %c0_25, %c0_26] : memref<4x9x7x128xf32, #tpu.memory_space<vmem>>, vector<1x1x7x128xf32>
    %86 = vector.shape_cast %85 : vector<1x1x7x128xf32> to vector<7x128xf32>
    %c127_i32_27 = arith.constant 127 : i32
    %87 = tpu.dynamic_rotate %12 by %c127_i32_27 dim 1 : vector<16x128xf32>, i32 -> vector<16x128xf32>
    %88 = vector.extract_strided_slice %86 {offsets = [0, 0], sizes = [1, 128], strides = [1, 1]} : vector<7x128xf32> to vector<1x128xf32>
    %89 = vector.broadcast %88 : vector<1x128xf32> to vector<16x128xf32>
    %90 = arith.mulf %87, %89 : vector<16x128xf32>
    %91 = arith.addf %84, %90 : vector<16x128xf32>
    %c126_i32_28 = arith.constant 126 : i32
    %92 = tpu.dynamic_rotate %12 by %c126_i32_28 dim 1 : vector<16x128xf32>, i32 -> vector<16x128xf32>
    %93 = vector.extract_strided_slice %86 {offsets = [1, 0], sizes = [1, 128], strides = [1, 1]} : vector<7x128xf32> to vector<1x128xf32>
    %94 = vector.broadcast %93 : vector<1x128xf32> to vector<16x128xf32>
    %95 = arith.mulf %92, %94 : vector<16x128xf32>
    %96 = arith.addf %91, %95 : vector<16x128xf32>
    %c125_i32_29 = arith.constant 125 : i32
    %97 = tpu.dynamic_rotate %12 by %c125_i32_29 dim 1 : vector<16x128xf32>, i32 -> vector<16x128xf32>
    %98 = vector.extract_strided_slice %86 {offsets = [2, 0], sizes = [1, 128], strides = [1, 1]} : vector<7x128xf32> to vector<1x128xf32>
    %99 = vector.broadcast %98 : vector<1x128xf32> to vector<16x128xf32>
    %100 = arith.mulf %97, %99 : vector<16x128xf32>
    %101 = arith.addf %96, %100 : vector<16x128xf32>
    %c124_i32 = arith.constant 124 : i32
    %102 = tpu.dynamic_rotate %12 by %c124_i32 dim 1 : vector<16x128xf32>, i32 -> vector<16x128xf32>
    %103 = vector.extract_strided_slice %86 {offsets = [3, 0], sizes = [1, 128], strides = [1, 1]} : vector<7x128xf32> to vector<1x128xf32>
    %104 = vector.broadcast %103 : vector<1x128xf32> to vector<16x128xf32>
    %105 = arith.mulf %102, %104 : vector<16x128xf32>
    %106 = arith.addf %101, %105 : vector<16x128xf32>
    %c123_i32 = arith.constant 123 : i32
    %107 = tpu.dynamic_rotate %12 by %c123_i32 dim 1 : vector<16x128xf32>, i32 -> vector<16x128xf32>
    %108 = vector.extract_strided_slice %86 {offsets = [4, 0], sizes = [1, 128], strides = [1, 1]} : vector<7x128xf32> to vector<1x128xf32>
    %109 = vector.broadcast %108 : vector<1x128xf32> to vector<16x128xf32>
    %110 = arith.mulf %107, %109 : vector<16x128xf32>
    %111 = arith.addf %106, %110 : vector<16x128xf32>
    %c122_i32 = arith.constant 122 : i32
    %112 = tpu.dynamic_rotate %12 by %c122_i32 dim 1 : vector<16x128xf32>, i32 -> vector<16x128xf32>
    %113 = vector.extract_strided_slice %86 {offsets = [5, 0], sizes = [1, 128], strides = [1, 1]} : vector<7x128xf32> to vector<1x128xf32>
    %114 = vector.broadcast %113 : vector<1x128xf32> to vector<16x128xf32>
    %115 = arith.mulf %112, %114 : vector<16x128xf32>
    %116 = arith.addf %111, %115 : vector<16x128xf32>
    %c121_i32 = arith.constant 121 : i32
    %117 = tpu.dynamic_rotate %12 by %c121_i32 dim 1 : vector<16x128xf32>, i32 -> vector<16x128xf32>
    %118 = vector.extract_strided_slice %86 {offsets = [6, 0], sizes = [1, 128], strides = [1, 1]} : vector<7x128xf32> to vector<1x128xf32>
    %119 = vector.broadcast %118 : vector<1x128xf32> to vector<16x128xf32>
    %120 = arith.mulf %117, %119 : vector<16x128xf32>
    %121 = arith.addf %116, %120 : vector<16x128xf32>
    %c8_30 = arith.constant 8 : index
    %c0_31 = arith.constant 0 : index
    %122 = vector.load %arg4[%c8_30, %c0_31] : memref<32x128xf32, #tpu.memory_space<vmem>>, vector<16x128xf32>
    %c0_32 = arith.constant 0 : index
    %c3 = arith.constant 3 : index
    %c0_33 = arith.constant 0 : index
    %c0_34 = arith.constant 0 : index
    %123 = vector.load %arg2[%c0_32, %c3, %c0_33, %c0_34] : memref<4x9x7x128xf32, #tpu.memory_space<vmem>>, vector<1x1x7x128xf32>
    %124 = vector.shape_cast %123 : vector<1x1x7x128xf32> to vector<7x128xf32>
    %c7_i32_35 = arith.constant 7 : i32
    %125 = tpu.dynamic_rotate %122 by %c7_i32_35 dim 1 : vector<16x128xf32>, i32 -> vector<16x128xf32>
    %126 = vector.extract_strided_slice %124 {offsets = [0, 0], sizes = [1, 128], strides = [1, 1]} : vector<7x128xf32> to vector<1x128xf32>
    %127 = vector.broadcast %126 : vector<1x128xf32> to vector<16x128xf32>
    %128 = arith.mulf %125, %127 : vector<16x128xf32>
    %129 = arith.addf %121, %128 : vector<16x128xf32>
    %c6_i32_36 = arith.constant 6 : i32
    %130 = tpu.dynamic_rotate %122 by %c6_i32_36 dim 1 : vector<16x128xf32>, i32 -> vector<16x128xf32>
    %131 = vector.extract_strided_slice %124 {offsets = [1, 0], sizes = [1, 128], strides = [1, 1]} : vector<7x128xf32> to vector<1x128xf32>
    %132 = vector.broadcast %131 : vector<1x128xf32> to vector<16x128xf32>
    %133 = arith.mulf %130, %132 : vector<16x128xf32>
    %134 = arith.addf %129, %133 : vector<16x128xf32>
    %c5_i32_37 = arith.constant 5 : i32
    %135 = tpu.dynamic_rotate %122 by %c5_i32_37 dim 1 : vector<16x128xf32>, i32 -> vector<16x128xf32>
    %136 = vector.extract_strided_slice %124 {offsets = [2, 0], sizes = [1, 128], strides = [1, 1]} : vector<7x128xf32> to vector<1x128xf32>
    %137 = vector.broadcast %136 : vector<1x128xf32> to vector<16x128xf32>
    %138 = arith.mulf %135, %137 : vector<16x128xf32>
    %139 = arith.addf %134, %138 : vector<16x128xf32>
    %c4_i32_38 = arith.constant 4 : i32
    %140 = tpu.dynamic_rotate %122 by %c4_i32_38 dim 1 : vector<16x128xf32>, i32 -> vector<16x128xf32>
    %141 = vector.extract_strided_slice %124 {offsets = [3, 0], sizes = [1, 128], strides = [1, 1]} : vector<7x128xf32> to vector<1x128xf32>
    %142 = vector.broadcast %141 : vector<1x128xf32> to vector<16x128xf32>
    %143 = arith.mulf %140, %142 : vector<16x128xf32>
    %144 = arith.addf %139, %143 : vector<16x128xf32>
    %c3_i32_39 = arith.constant 3 : i32
    %145 = tpu.dynamic_rotate %122 by %c3_i32_39 dim 1 : vector<16x128xf32>, i32 -> vector<16x128xf32>
    %146 = vector.extract_strided_slice %124 {offsets = [4, 0], sizes = [1, 128], strides = [1, 1]} : vector<7x128xf32> to vector<1x128xf32>
    %147 = vector.broadcast %146 : vector<1x128xf32> to vector<16x128xf32>
    %148 = arith.mulf %145, %147 : vector<16x128xf32>
    %149 = arith.addf %144, %148 : vector<16x128xf32>
    %c2_i32_40 = arith.constant 2 : i32
    %150 = tpu.dynamic_rotate %122 by %c2_i32_40 dim 1 : vector<16x128xf32>, i32 -> vector<16x128xf32>
    %151 = vector.extract_strided_slice %124 {offsets = [5, 0], sizes = [1, 128], strides = [1, 1]} : vector<7x128xf32> to vector<1x128xf32>
    %152 = vector.broadcast %151 : vector<1x128xf32> to vector<16x128xf32>
    %153 = arith.mulf %150, %152 : vector<16x128xf32>
    %154 = arith.addf %149, %153 : vector<16x128xf32>
    %c1_i32_41 = arith.constant 1 : i32
    %155 = tpu.dynamic_rotate %122 by %c1_i32_41 dim 1 : vector<16x128xf32>, i32 -> vector<16x128xf32>
    %156 = vector.extract_strided_slice %124 {offsets = [6, 0], sizes = [1, 128], strides = [1, 1]} : vector<7x128xf32> to vector<1x128xf32>
    %157 = vector.broadcast %156 : vector<1x128xf32> to vector<16x128xf32>
    %158 = arith.mulf %155, %157 : vector<16x128xf32>
    %159 = arith.addf %154, %158 : vector<16x128xf32>
    %c0_42 = arith.constant 0 : index
    %c4 = arith.constant 4 : index
    %c0_43 = arith.constant 0 : index
    %c0_44 = arith.constant 0 : index
    %160 = vector.load %arg2[%c0_42, %c4, %c0_43, %c0_44] : memref<4x9x7x128xf32, #tpu.memory_space<vmem>>, vector<1x1x7x128xf32>
    %161 = vector.shape_cast %160 : vector<1x1x7x128xf32> to vector<7x128xf32>
    %c3_i32_45 = arith.constant 3 : i32
    %162 = tpu.dynamic_rotate %122 by %c3_i32_45 dim 1 : vector<16x128xf32>, i32 -> vector<16x128xf32>
    %163 = vector.extract_strided_slice %161 {offsets = [0, 0], sizes = [1, 128], strides = [1, 1]} : vector<7x128xf32> to vector<1x128xf32>
    %164 = vector.broadcast %163 : vector<1x128xf32> to vector<16x128xf32>
    %165 = arith.mulf %162, %164 : vector<16x128xf32>
    %166 = arith.addf %159, %165 : vector<16x128xf32>
    %c2_i32_46 = arith.constant 2 : i32
    %167 = tpu.dynamic_rotate %122 by %c2_i32_46 dim 1 : vector<16x128xf32>, i32 -> vector<16x128xf32>
    %168 = vector.extract_strided_slice %161 {offsets = [1, 0], sizes = [1, 128], strides = [1, 1]} : vector<7x128xf32> to vector<1x128xf32>
    %169 = vector.broadcast %168 : vector<1x128xf32> to vector<16x128xf32>
    %170 = arith.mulf %167, %169 : vector<16x128xf32>
    %171 = arith.addf %166, %170 : vector<16x128xf32>
    %c1_i32_47 = arith.constant 1 : i32
    %172 = tpu.dynamic_rotate %122 by %c1_i32_47 dim 1 : vector<16x128xf32>, i32 -> vector<16x128xf32>
    %173 = vector.extract_strided_slice %161 {offsets = [2, 0], sizes = [1, 128], strides = [1, 1]} : vector<7x128xf32> to vector<1x128xf32>
    %174 = vector.broadcast %173 : vector<1x128xf32> to vector<16x128xf32>
    %175 = arith.mulf %172, %174 : vector<16x128xf32>
    %176 = arith.addf %171, %175 : vector<16x128xf32>
    %177 = vector.extract_strided_slice %161 {offsets = [3, 0], sizes = [1, 128], strides = [1, 1]} : vector<7x128xf32> to vector<1x128xf32>
    %178 = vector.broadcast %177 : vector<1x128xf32> to vector<16x128xf32>
    %179 = arith.mulf %122, %178 : vector<16x128xf32>
    %180 = arith.addf %176, %179 : vector<16x128xf32>
    %c127_i32_48 = arith.constant 127 : i32
    %181 = tpu.dynamic_rotate %122 by %c127_i32_48 dim 1 : vector<16x128xf32>, i32 -> vector<16x128xf32>
    %182 = vector.extract_strided_slice %161 {offsets = [4, 0], sizes = [1, 128], strides = [1, 1]} : vector<7x128xf32> to vector<1x128xf32>
    %183 = vector.broadcast %182 : vector<1x128xf32> to vector<16x128xf32>
    %184 = arith.mulf %181, %183 : vector<16x128xf32>
    %185 = arith.addf %180, %184 : vector<16x128xf32>
    %c126_i32_49 = arith.constant 126 : i32
    %186 = tpu.dynamic_rotate %122 by %c126_i32_49 dim 1 : vector<16x128xf32>, i32 -> vector<16x128xf32>
    %187 = vector.extract_strided_slice %161 {offsets = [5, 0], sizes = [1, 128], strides = [1, 1]} : vector<7x128xf32> to vector<1x128xf32>
    %188 = vector.broadcast %187 : vector<1x128xf32> to vector<16x128xf32>
    %189 = arith.mulf %186, %188 : vector<16x128xf32>
    %190 = arith.addf %185, %189 : vector<16x128xf32>
    %c125_i32_50 = arith.constant 125 : i32
    %191 = tpu.dynamic_rotate %122 by %c125_i32_50 dim 1 : vector<16x128xf32>, i32 -> vector<16x128xf32>
    %192 = vector.extract_strided_slice %161 {offsets = [6, 0], sizes = [1, 128], strides = [1, 1]} : vector<7x128xf32> to vector<1x128xf32>
    %193 = vector.broadcast %192 : vector<1x128xf32> to vector<16x128xf32>
    %194 = arith.mulf %191, %193 : vector<16x128xf32>
    %195 = arith.addf %190, %194 : vector<16x128xf32>
    %c0_51 = arith.constant 0 : index
    %c5 = arith.constant 5 : index
    %c0_52 = arith.constant 0 : index
    %c0_53 = arith.constant 0 : index
    %196 = vector.load %arg2[%c0_51, %c5, %c0_52, %c0_53] : memref<4x9x7x128xf32, #tpu.memory_space<vmem>>, vector<1x1x7x128xf32>
    %197 = vector.shape_cast %196 : vector<1x1x7x128xf32> to vector<7x128xf32>
    %c127_i32_54 = arith.constant 127 : i32
    %198 = tpu.dynamic_rotate %122 by %c127_i32_54 dim 1 : vector<16x128xf32>, i32 -> vector<16x128xf32>
    %199 = vector.extract_strided_slice %197 {offsets = [0, 0], sizes = [1, 128], strides = [1, 1]} : vector<7x128xf32> to vector<1x128xf32>
    %200 = vector.broadcast %199 : vector<1x128xf32> to vector<16x128xf32>
    %201 = arith.mulf %198, %200 : vector<16x128xf32>
    %202 = arith.addf %195, %201 : vector<16x128xf32>
    %c126_i32_55 = arith.constant 126 : i32
    %203 = tpu.dynamic_rotate %122 by %c126_i32_55 dim 1 : vector<16x128xf32>, i32 -> vector<16x128xf32>
    %204 = vector.extract_strided_slice %197 {offsets = [1, 0], sizes = [1, 128], strides = [1, 1]} : vector<7x128xf32> to vector<1x128xf32>
    %205 = vector.broadcast %204 : vector<1x128xf32> to vector<16x128xf32>
    %206 = arith.mulf %203, %205 : vector<16x128xf32>
    %207 = arith.addf %202, %206 : vector<16x128xf32>
    %c125_i32_56 = arith.constant 125 : i32
    %208 = tpu.dynamic_rotate %122 by %c125_i32_56 dim 1 : vector<16x128xf32>, i32 -> vector<16x128xf32>
    %209 = vector.extract_strided_slice %197 {offsets = [2, 0], sizes = [1, 128], strides = [1, 1]} : vector<7x128xf32> to vector<1x128xf32>
    %210 = vector.broadcast %209 : vector<1x128xf32> to vector<16x128xf32>
    %211 = arith.mulf %208, %210 : vector<16x128xf32>
    %212 = arith.addf %207, %211 : vector<16x128xf32>
    %c124_i32_57 = arith.constant 124 : i32
    %213 = tpu.dynamic_rotate %122 by %c124_i32_57 dim 1 : vector<16x128xf32>, i32 -> vector<16x128xf32>
    %214 = vector.extract_strided_slice %197 {offsets = [3, 0], sizes = [1, 128], strides = [1, 1]} : vector<7x128xf32> to vector<1x128xf32>
    %215 = vector.broadcast %214 : vector<1x128xf32> to vector<16x128xf32>
    %216 = arith.mulf %213, %215 : vector<16x128xf32>
    %217 = arith.addf %212, %216 : vector<16x128xf32>
    %c123_i32_58 = arith.constant 123 : i32
    %218 = tpu.dynamic_rotate %122 by %c123_i32_58 dim 1 : vector<16x128xf32>, i32 -> vector<16x128xf32>
    %219 = vector.extract_strided_slice %197 {offsets = [4, 0], sizes = [1, 128], strides = [1, 1]} : vector<7x128xf32> to vector<1x128xf32>
    %220 = vector.broadcast %219 : vector<1x128xf32> to vector<16x128xf32>
    %221 = arith.mulf %218, %220 : vector<16x128xf32>
    %222 = arith.addf %217, %221 : vector<16x128xf32>
    %c122_i32_59 = arith.constant 122 : i32
    %223 = tpu.dynamic_rotate %122 by %c122_i32_59 dim 1 : vector<16x128xf32>, i32 -> vector<16x128xf32>
    %224 = vector.extract_strided_slice %197 {offsets = [5, 0], sizes = [1, 128], strides = [1, 1]} : vector<7x128xf32> to vector<1x128xf32>
    %225 = vector.broadcast %224 : vector<1x128xf32> to vector<16x128xf32>
    %226 = arith.mulf %223, %225 : vector<16x128xf32>
    %227 = arith.addf %222, %226 : vector<16x128xf32>
    %c121_i32_60 = arith.constant 121 : i32
    %228 = tpu.dynamic_rotate %122 by %c121_i32_60 dim 1 : vector<16x128xf32>, i32 -> vector<16x128xf32>
    %229 = vector.extract_strided_slice %197 {offsets = [6, 0], sizes = [1, 128], strides = [1, 1]} : vector<7x128xf32> to vector<1x128xf32>
    %230 = vector.broadcast %229 : vector<1x128xf32> to vector<16x128xf32>
    %231 = arith.mulf %228, %230 : vector<16x128xf32>
    %232 = arith.addf %227, %231 : vector<16x128xf32>
    %c9 = arith.constant 9 : index
    %c0_61 = arith.constant 0 : index
    %233 = vector.load %arg4[%c9, %c0_61] : memref<32x128xf32, #tpu.memory_space<vmem>>, vector<16x128xf32>
    %c0_62 = arith.constant 0 : index
    %c6 = arith.constant 6 : index
    %c0_63 = arith.constant 0 : index
    %c0_64 = arith.constant 0 : index
    %234 = vector.load %arg2[%c0_62, %c6, %c0_63, %c0_64] : memref<4x9x7x128xf32, #tpu.memory_space<vmem>>, vector<1x1x7x128xf32>
    %235 = vector.shape_cast %234 : vector<1x1x7x128xf32> to vector<7x128xf32>
    %c7_i32_65 = arith.constant 7 : i32
    %236 = tpu.dynamic_rotate %233 by %c7_i32_65 dim 1 : vector<16x128xf32>, i32 -> vector<16x128xf32>
    %237 = vector.extract_strided_slice %235 {offsets = [0, 0], sizes = [1, 128], strides = [1, 1]} : vector<7x128xf32> to vector<1x128xf32>
    %238 = vector.broadcast %237 : vector<1x128xf32> to vector<16x128xf32>
    %239 = arith.mulf %236, %238 : vector<16x128xf32>
    %240 = arith.addf %232, %239 : vector<16x128xf32>
    %c6_i32_66 = arith.constant 6 : i32
    %241 = tpu.dynamic_rotate %233 by %c6_i32_66 dim 1 : vector<16x128xf32>, i32 -> vector<16x128xf32>
    %242 = vector.extract_strided_slice %235 {offsets = [1, 0], sizes = [1, 128], strides = [1, 1]} : vector<7x128xf32> to vector<1x128xf32>
    %243 = vector.broadcast %242 : vector<1x128xf32> to vector<16x128xf32>
    %244 = arith.mulf %241, %243 : vector<16x128xf32>
    %245 = arith.addf %240, %244 : vector<16x128xf32>
    %c5_i32_67 = arith.constant 5 : i32
    %246 = tpu.dynamic_rotate %233 by %c5_i32_67 dim 1 : vector<16x128xf32>, i32 -> vector<16x128xf32>
    %247 = vector.extract_strided_slice %235 {offsets = [2, 0], sizes = [1, 128], strides = [1, 1]} : vector<7x128xf32> to vector<1x128xf32>
    %248 = vector.broadcast %247 : vector<1x128xf32> to vector<16x128xf32>
    %249 = arith.mulf %246, %248 : vector<16x128xf32>
    %250 = arith.addf %245, %249 : vector<16x128xf32>
    %c4_i32_68 = arith.constant 4 : i32
    %251 = tpu.dynamic_rotate %233 by %c4_i32_68 dim 1 : vector<16x128xf32>, i32 -> vector<16x128xf32>
    %252 = vector.extract_strided_slice %235 {offsets = [3, 0], sizes = [1, 128], strides = [1, 1]} : vector<7x128xf32> to vector<1x128xf32>
    %253 = vector.broadcast %252 : vector<1x128xf32> to vector<16x128xf32>
    %254 = arith.mulf %251, %253 : vector<16x128xf32>
    %255 = arith.addf %250, %254 : vector<16x128xf32>
    %c3_i32_69 = arith.constant 3 : i32
    %256 = tpu.dynamic_rotate %233 by %c3_i32_69 dim 1 : vector<16x128xf32>, i32 -> vector<16x128xf32>
    %257 = vector.extract_strided_slice %235 {offsets = [4, 0], sizes = [1, 128], strides = [1, 1]} : vector<7x128xf32> to vector<1x128xf32>
    %258 = vector.broadcast %257 : vector<1x128xf32> to vector<16x128xf32>
    %259 = arith.mulf %256, %258 : vector<16x128xf32>
    %260 = arith.addf %255, %259 : vector<16x128xf32>
    %c2_i32_70 = arith.constant 2 : i32
    %261 = tpu.dynamic_rotate %233 by %c2_i32_70 dim 1 : vector<16x128xf32>, i32 -> vector<16x128xf32>
    %262 = vector.extract_strided_slice %235 {offsets = [5, 0], sizes = [1, 128], strides = [1, 1]} : vector<7x128xf32> to vector<1x128xf32>
    %263 = vector.broadcast %262 : vector<1x128xf32> to vector<16x128xf32>
    %264 = arith.mulf %261, %263 : vector<16x128xf32>
    %265 = arith.addf %260, %264 : vector<16x128xf32>
    %c1_i32_71 = arith.constant 1 : i32
    %266 = tpu.dynamic_rotate %233 by %c1_i32_71 dim 1 : vector<16x128xf32>, i32 -> vector<16x128xf32>
    %267 = vector.extract_strided_slice %235 {offsets = [6, 0], sizes = [1, 128], strides = [1, 1]} : vector<7x128xf32> to vector<1x128xf32>
    %268 = vector.broadcast %267 : vector<1x128xf32> to vector<16x128xf32>
    %269 = arith.mulf %266, %268 : vector<16x128xf32>
    %270 = arith.addf %265, %269 : vector<16x128xf32>
    %c0_72 = arith.constant 0 : index
    %c7_73 = arith.constant 7 : index
    %c0_74 = arith.constant 0 : index
    %c0_75 = arith.constant 0 : index
    %271 = vector.load %arg2[%c0_72, %c7_73, %c0_74, %c0_75] : memref<4x9x7x128xf32, #tpu.memory_space<vmem>>, vector<1x1x7x128xf32>
    %272 = vector.shape_cast %271 : vector<1x1x7x128xf32> to vector<7x128xf32>
    %c3_i32_76 = arith.constant 3 : i32
    %273 = tpu.dynamic_rotate %233 by %c3_i32_76 dim 1 : vector<16x128xf32>, i32 -> vector<16x128xf32>
    %274 = vector.extract_strided_slice %272 {offsets = [0, 0], sizes = [1, 128], strides = [1, 1]} : vector<7x128xf32> to vector<1x128xf32>
    %275 = vector.broadcast %274 : vector<1x128xf32> to vector<16x128xf32>
    %276 = arith.mulf %273, %275 : vector<16x128xf32>
    %277 = arith.addf %270, %276 : vector<16x128xf32>
    %c2_i32_77 = arith.constant 2 : i32
    %278 = tpu.dynamic_rotate %233 by %c2_i32_77 dim 1 : vector<16x128xf32>, i32 -> vector<16x128xf32>
    %279 = vector.extract_strided_slice %272 {offsets = [1, 0], sizes = [1, 128], strides = [1, 1]} : vector<7x128xf32> to vector<1x128xf32>
    %280 = vector.broadcast %279 : vector<1x128xf32> to vector<16x128xf32>
    %281 = arith.mulf %278, %280 : vector<16x128xf32>
    %282 = arith.addf %277, %281 : vector<16x128xf32>
    %c1_i32_78 = arith.constant 1 : i32
    %283 = tpu.dynamic_rotate %233 by %c1_i32_78 dim 1 : vector<16x128xf32>, i32 -> vector<16x128xf32>
    %284 = vector.extract_strided_slice %272 {offsets = [2, 0], sizes = [1, 128], strides = [1, 1]} : vector<7x128xf32> to vector<1x128xf32>
    %285 = vector.broadcast %284 : vector<1x128xf32> to vector<16x128xf32>
    %286 = arith.mulf %283, %285 : vector<16x128xf32>
    %287 = arith.addf %282, %286 : vector<16x128xf32>
    %288 = vector.extract_strided_slice %272 {offsets = [3, 0], sizes = [1, 128], strides = [1, 1]} : vector<7x128xf32> to vector<1x128xf32>
    %289 = vector.broadcast %288 : vector<1x128xf32> to vector<16x128xf32>
    %290 = arith.mulf %233, %289 : vector<16x128xf32>
    %291 = arith.addf %287, %290 : vector<16x128xf32>
    %c127_i32_79 = arith.constant 127 : i32
    %292 = tpu.dynamic_rotate %233 by %c127_i32_79 dim 1 : vector<16x128xf32>, i32 -> vector<16x128xf32>
    %293 = vector.extract_strided_slice %272 {offsets = [4, 0], sizes = [1, 128], strides = [1, 1]} : vector<7x128xf32> to vector<1x128xf32>
    %294 = vector.broadcast %293 : vector<1x128xf32> to vector<16x128xf32>
    %295 = arith.mulf %292, %294 : vector<16x128xf32>
    %296 = arith.addf %291, %295 : vector<16x128xf32>
    %c126_i32_80 = arith.constant 126 : i32
    %297 = tpu.dynamic_rotate %233 by %c126_i32_80 dim 1 : vector<16x128xf32>, i32 -> vector<16x128xf32>
    %298 = vector.extract_strided_slice %272 {offsets = [5, 0], sizes = [1, 128], strides = [1, 1]} : vector<7x128xf32> to vector<1x128xf32>
    %299 = vector.broadcast %298 : vector<1x128xf32> to vector<16x128xf32>
    %300 = arith.mulf %297, %299 : vector<16x128xf32>
    %301 = arith.addf %296, %300 : vector<16x128xf32>
    %c125_i32_81 = arith.constant 125 : i32
    %302 = tpu.dynamic_rotate %233 by %c125_i32_81 dim 1 : vector<16x128xf32>, i32 -> vector<16x128xf32>
    %303 = vector.extract_strided_slice %272 {offsets = [6, 0], sizes = [1, 128], strides = [1, 1]} : vector<7x128xf32> to vector<1x128xf32>
    %304 = vector.broadcast %303 : vector<1x128xf32> to vector<16x128xf32>
    %305 = arith.mulf %302, %304 : vector<16x128xf32>
    %306 = arith.addf %301, %305 : vector<16x128xf32>
    %c0_82 = arith.constant 0 : index
    %c8_83 = arith.constant 8 : index
    %c0_84 = arith.constant 0 : index
    %c0_85 = arith.constant 0 : index
    %307 = vector.load %arg2[%c0_82, %c8_83, %c0_84, %c0_85] : memref<4x9x7x128xf32, #tpu.memory_space<vmem>>, vector<1x1x7x128xf32>
    %308 = vector.shape_cast %307 : vector<1x1x7x128xf32> to vector<7x128xf32>
    %c127_i32_86 = arith.constant 127 : i32
    %309 = tpu.dynamic_rotate %233 by %c127_i32_86 dim 1 : vector<16x128xf32>, i32 -> vector<16x128xf32>
    %310 = vector.extract_strided_slice %308 {offsets = [0, 0], sizes = [1, 128], strides = [1, 1]} : vector<7x128xf32> to vector<1x128xf32>
    %311 = vector.broadcast %310 : vector<1x128xf32> to vector<16x128xf32>
    %312 = arith.mulf %309, %311 : vector<16x128xf32>
    %313 = arith.addf %306, %312 : vector<16x128xf32>
    %c126_i32_87 = arith.constant 126 : i32
    %314 = tpu.dynamic_rotate %233 by %c126_i32_87 dim 1 : vector<16x128xf32>, i32 -> vector<16x128xf32>
    %315 = vector.extract_strided_slice %308 {offsets = [1, 0], sizes = [1, 128], strides = [1, 1]} : vector<7x128xf32> to vector<1x128xf32>
    %316 = vector.broadcast %315 : vector<1x128xf32> to vector<16x128xf32>
    %317 = arith.mulf %314, %316 : vector<16x128xf32>
    %318 = arith.addf %313, %317 : vector<16x128xf32>
    %c125_i32_88 = arith.constant 125 : i32
    %319 = tpu.dynamic_rotate %233 by %c125_i32_88 dim 1 : vector<16x128xf32>, i32 -> vector<16x128xf32>
    %320 = vector.extract_strided_slice %308 {offsets = [2, 0], sizes = [1, 128], strides = [1, 1]} : vector<7x128xf32> to vector<1x128xf32>
    %321 = vector.broadcast %320 : vector<1x128xf32> to vector<16x128xf32>
    %322 = arith.mulf %319, %321 : vector<16x128xf32>
    %323 = arith.addf %318, %322 : vector<16x128xf32>
    %c124_i32_89 = arith.constant 124 : i32
    %324 = tpu.dynamic_rotate %233 by %c124_i32_89 dim 1 : vector<16x128xf32>, i32 -> vector<16x128xf32>
    %325 = vector.extract_strided_slice %308 {offsets = [3, 0], sizes = [1, 128], strides = [1, 1]} : vector<7x128xf32> to vector<1x128xf32>
    %326 = vector.broadcast %325 : vector<1x128xf32> to vector<16x128xf32>
    %327 = arith.mulf %324, %326 : vector<16x128xf32>
    %328 = arith.addf %323, %327 : vector<16x128xf32>
    %c123_i32_90 = arith.constant 123 : i32
    %329 = tpu.dynamic_rotate %233 by %c123_i32_90 dim 1 : vector<16x128xf32>, i32 -> vector<16x128xf32>
    %330 = vector.extract_strided_slice %308 {offsets = [4, 0], sizes = [1, 128], strides = [1, 1]} : vector<7x128xf32> to vector<1x128xf32>
    %331 = vector.broadcast %330 : vector<1x128xf32> to vector<16x128xf32>
    %332 = arith.mulf %329, %331 : vector<16x128xf32>
    %333 = arith.addf %328, %332 : vector<16x128xf32>
    %c122_i32_91 = arith.constant 122 : i32
    %334 = tpu.dynamic_rotate %233 by %c122_i32_91 dim 1 : vector<16x128xf32>, i32 -> vector<16x128xf32>
    %335 = vector.extract_strided_slice %308 {offsets = [5, 0], sizes = [1, 128], strides = [1, 1]} : vector<7x128xf32> to vector<1x128xf32>
    %336 = vector.broadcast %335 : vector<1x128xf32> to vector<16x128xf32>
    %337 = arith.mulf %334, %336 : vector<16x128xf32>
    %338 = arith.addf %333, %337 : vector<16x128xf32>
    %c121_i32_92 = arith.constant 121 : i32
    %339 = tpu.dynamic_rotate %233 by %c121_i32_92 dim 1 : vector<16x128xf32>, i32 -> vector<16x128xf32>
    %340 = vector.extract_strided_slice %308 {offsets = [6, 0], sizes = [1, 128], strides = [1, 1]} : vector<7x128xf32> to vector<1x128xf32>
    %341 = vector.broadcast %340 : vector<1x128xf32> to vector<16x128xf32>
    %342 = arith.mulf %339, %341 : vector<16x128xf32>
    %343 = arith.addf %338, %342 : vector<16x128xf32>
    %344 = vector.extract_strided_slice %343 {offsets = [0, 32], sizes = [16, 64], strides = [1, 1]} : vector<16x128xf32> to vector<16x64xf32>
    %c0_93 = arith.constant 0 : index
    %c0_94 = arith.constant 0 : index
    %345 = vector.load %arg5[%c0_93, %c0_94] : memref<16x64xf32, #tpu.memory_space<vmem>>, vector<16x64xf32>
    %346 = arith.addf %345, %344 : vector<16x64xf32>
    %c0_95 = arith.constant 0 : index
    %c0_96 = arith.constant 0 : index
    %347 = vector.load %arg5[%c0_95, %c0_96] : memref<16x64xf32, #tpu.memory_space<vmem>>, vector<16x64xf32>
    tpu.vector_store %arg5[%c0_95, %c0_96], %346 {strides = array<i32>} : memref<16x64xf32, #tpu.memory_space<vmem>>, vector<16x64xf32>,
    %c8_97 = arith.constant 8 : index
    %c32_98 = arith.constant 32 : index
    %348 = vector.load %arg4[%c8_97, %c32_98] : memref<32x128xf32, #tpu.memory_space<vmem>>, vector<16x64xf32>
    tpu.vector_store %arg4[%c8_97, %c32_98], %344 {strides = array<i32>} : memref<32x128xf32, #tpu.memory_space<vmem>>, vector<16x64xf32>,
    %c6_99 = arith.constant 6 : index
    %c0_100 = arith.constant 0 : index
    %349 = vector.load %arg4[%c6_99, %c0_100] : memref<32x128xf32, #tpu.memory_space<vmem>>, vector<16x128xf32>
    %c1_101 = arith.constant 1 : index
    %c0_102 = arith.constant 0 : index
    %c0_103 = arith.constant 0 : index
    %c0_104 = arith.constant 0 : index
    %350 = vector.load %arg2[%c1_101, %c0_102, %c0_103, %c0_104] : memref<4x9x7x128xf32, #tpu.memory_space<vmem>>, vector<1x1x7x128xf32>
    %351 = vector.shape_cast %350 : vector<1x1x7x128xf32> to vector<7x128xf32>
    %c11_i32 = arith.constant 11 : i32
    %352 = tpu.dynamic_rotate %349 by %c11_i32 dim 1 : vector<16x128xf32>, i32 -> vector<16x128xf32>
    %353 = vector.extract_strided_slice %351 {offsets = [0, 0], sizes = [1, 128], strides = [1, 1]} : vector<7x128xf32> to vector<1x128xf32>
    %354 = vector.broadcast %353 : vector<1x128xf32> to vector<16x128xf32>
    %355 = arith.mulf %352, %354 : vector<16x128xf32>
    %c10_i32 = arith.constant 10 : i32
    %356 = tpu.dynamic_rotate %349 by %c10_i32 dim 1 : vector<16x128xf32>, i32 -> vector<16x128xf32>
    %357 = vector.extract_strided_slice %351 {offsets = [1, 0], sizes = [1, 128], strides = [1, 1]} : vector<7x128xf32> to vector<1x128xf32>
    %358 = vector.broadcast %357 : vector<1x128xf32> to vector<16x128xf32>
    %359 = arith.mulf %356, %358 : vector<16x128xf32>
    %360 = arith.addf %355, %359 : vector<16x128xf32>
    %c9_i32 = arith.constant 9 : i32
    %361 = tpu.dynamic_rotate %349 by %c9_i32 dim 1 : vector<16x128xf32>, i32 -> vector<16x128xf32>
    %362 = vector.extract_strided_slice %351 {offsets = [2, 0], sizes = [1, 128], strides = [1, 1]} : vector<7x128xf32> to vector<1x128xf32>
    %363 = vector.broadcast %362 : vector<1x128xf32> to vector<16x128xf32>
    %364 = arith.mulf %361, %363 : vector<16x128xf32>
    %365 = arith.addf %360, %364 : vector<16x128xf32>
    %c8_i32 = arith.constant 8 : i32
    %366 = tpu.dynamic_rotate %349 by %c8_i32 dim 1 : vector<16x128xf32>, i32 -> vector<16x128xf32>
    %367 = vector.extract_strided_slice %351 {offsets = [3, 0], sizes = [1, 128], strides = [1, 1]} : vector<7x128xf32> to vector<1x128xf32>
    %368 = vector.broadcast %367 : vector<1x128xf32> to vector<16x128xf32>
    %369 = arith.mulf %366, %368 : vector<16x128xf32>
    %370 = arith.addf %365, %369 : vector<16x128xf32>
    %c7_i32_105 = arith.constant 7 : i32
    %371 = tpu.dynamic_rotate %349 by %c7_i32_105 dim 1 : vector<16x128xf32>, i32 -> vector<16x128xf32>
    %372 = vector.extract_strided_slice %351 {offsets = [4, 0], sizes = [1, 128], strides = [1, 1]} : vector<7x128xf32> to vector<1x128xf32>
    %373 = vector.broadcast %372 : vector<1x128xf32> to vector<16x128xf32>
    %374 = arith.mulf %371, %373 : vector<16x128xf32>
    %375 = arith.addf %370, %374 : vector<16x128xf32>
    %c6_i32_106 = arith.constant 6 : i32
    %376 = tpu.dynamic_rotate %349 by %c6_i32_106 dim 1 : vector<16x128xf32>, i32 -> vector<16x128xf32>
    %377 = vector.extract_strided_slice %351 {offsets = [5, 0], sizes = [1, 128], strides = [1, 1]} : vector<7x128xf32> to vector<1x128xf32>
    %378 = vector.broadcast %377 : vector<1x128xf32> to vector<16x128xf32>
    %379 = arith.mulf %376, %378 : vector<16x128xf32>
    %380 = arith.addf %375, %379 : vector<16x128xf32>
    %c5_i32_107 = arith.constant 5 : i32
    %381 = tpu.dynamic_rotate %349 by %c5_i32_107 dim 1 : vector<16x128xf32>, i32 -> vector<16x128xf32>
    %382 = vector.extract_strided_slice %351 {offsets = [6, 0], sizes = [1, 128], strides = [1, 1]} : vector<7x128xf32> to vector<1x128xf32>
    %383 = vector.broadcast %382 : vector<1x128xf32> to vector<16x128xf32>
    %384 = arith.mulf %381, %383 : vector<16x128xf32>
    %385 = arith.addf %380, %384 : vector<16x128xf32>
    %c1_108 = arith.constant 1 : index
    %c1_109 = arith.constant 1 : index
    %c0_110 = arith.constant 0 : index
    %c0_111 = arith.constant 0 : index
    %386 = vector.load %arg2[%c1_108, %c1_109, %c0_110, %c0_111] : memref<4x9x7x128xf32, #tpu.memory_space<vmem>>, vector<1x1x7x128xf32>
    %387 = vector.shape_cast %386 : vector<1x1x7x128xf32> to vector<7x128xf32>
    %c3_i32_112 = arith.constant 3 : i32
    %388 = tpu.dynamic_rotate %349 by %c3_i32_112 dim 1 : vector<16x128xf32>, i32 -> vector<16x128xf32>
    %389 = vector.extract_strided_slice %387 {offsets = [0, 0], sizes = [1, 128], strides = [1, 1]} : vector<7x128xf32> to vector<1x128xf32>
    %390 = vector.broadcast %389 : vector<1x128xf32> to vector<16x128xf32>
    %391 = arith.mulf %388, %390 : vector<16x128xf32>
    %392 = arith.addf %385, %391 : vector<16x128xf32>
    %c2_i32_113 = arith.constant 2 : i32
    %393 = tpu.dynamic_rotate %349 by %c2_i32_113 dim 1 : vector<16x128xf32>, i32 -> vector<16x128xf32>
    %394 = vector.extract_strided_slice %387 {offsets = [1, 0], sizes = [1, 128], strides = [1, 1]} : vector<7x128xf32> to vector<1x128xf32>
    %395 = vector.broadcast %394 : vector<1x128xf32> to vector<16x128xf32>
    %396 = arith.mulf %393, %395 : vector<16x128xf32>
    %397 = arith.addf %392, %396 : vector<16x128xf32>
    %c1_i32_114 = arith.constant 1 : i32
    %398 = tpu.dynamic_rotate %349 by %c1_i32_114 dim 1 : vector<16x128xf32>, i32 -> vector<16x128xf32>
    %399 = vector.extract_strided_slice %387 {offsets = [2, 0], sizes = [1, 128], strides = [1, 1]} : vector<7x128xf32> to vector<1x128xf32>
    %400 = vector.broadcast %399 : vector<1x128xf32> to vector<16x128xf32>
    %401 = arith.mulf %398, %400 : vector<16x128xf32>
    %402 = arith.addf %397, %401 : vector<16x128xf32>
    %403 = vector.extract_strided_slice %387 {offsets = [3, 0], sizes = [1, 128], strides = [1, 1]} : vector<7x128xf32> to vector<1x128xf32>
    %404 = vector.broadcast %403 : vector<1x128xf32> to vector<16x128xf32>
    %405 = arith.mulf %349, %404 : vector<16x128xf32>
    %406 = arith.addf %402, %405 : vector<16x128xf32>
    %c127_i32_115 = arith.constant 127 : i32
    %407 = tpu.dynamic_rotate %349 by %c127_i32_115 dim 1 : vector<16x128xf32>, i32 -> vector<16x128xf32>
    %408 = vector.extract_strided_slice %387 {offsets = [4, 0], sizes = [1, 128], strides = [1, 1]} : vector<7x128xf32> to vector<1x128xf32>
    %409 = vector.broadcast %408 : vector<1x128xf32> to vector<16x128xf32>
    %410 = arith.mulf %407, %409 : vector<16x128xf32>
    %411 = arith.addf %406, %410 : vector<16x128xf32>
    %c126_i32_116 = arith.constant 126 : i32
    %412 = tpu.dynamic_rotate %349 by %c126_i32_116 dim 1 : vector<16x128xf32>, i32 -> vector<16x128xf32>
    %413 = vector.extract_strided_slice %387 {offsets = [5, 0], sizes = [1, 128], strides = [1, 1]} : vector<7x128xf32> to vector<1x128xf32>
    %414 = vector.broadcast %413 : vector<1x128xf32> to vector<16x128xf32>
    %415 = arith.mulf %412, %414 : vector<16x128xf32>
    %416 = arith.addf %411, %415 : vector<16x128xf32>
    %c125_i32_117 = arith.constant 125 : i32
    %417 = tpu.dynamic_rotate %349 by %c125_i32_117 dim 1 : vector<16x128xf32>, i32 -> vector<16x128xf32>
    %418 = vector.extract_strided_slice %387 {offsets = [6, 0], sizes = [1, 128], strides = [1, 1]} : vector<7x128xf32> to vector<1x128xf32>
    %419 = vector.broadcast %418 : vector<1x128xf32> to vector<16x128xf32>
    %420 = arith.mulf %417, %419 : vector<16x128xf32>
    %421 = arith.addf %416, %420 : vector<16x128xf32>
    %c1_118 = arith.constant 1 : index
    %c2_119 = arith.constant 2 : index
    %c0_120 = arith.constant 0 : index
    %c0_121 = arith.constant 0 : index
    %422 = vector.load %arg2[%c1_118, %c2_119, %c0_120, %c0_121] : memref<4x9x7x128xf32, #tpu.memory_space<vmem>>, vector<1x1x7x128xf32>
    %423 = vector.shape_cast %422 : vector<1x1x7x128xf32> to vector<7x128xf32>
    %c123_i32_122 = arith.constant 123 : i32
    %424 = tpu.dynamic_rotate %349 by %c123_i32_122 dim 1 : vector<16x128xf32>, i32 -> vector<16x128xf32>
    %425 = vector.extract_strided_slice %423 {offsets = [0, 0], sizes = [1, 128], strides = [1, 1]} : vector<7x128xf32> to vector<1x128xf32>
    %426 = vector.broadcast %425 : vector<1x128xf32> to vector<16x128xf32>
    %427 = arith.mulf %424, %426 : vector<16x128xf32>
    %428 = arith.addf %421, %427 : vector<16x128xf32>
    %c122_i32_123 = arith.constant 122 : i32
    %429 = tpu.dynamic_rotate %349 by %c122_i32_123 dim 1 : vector<16x128xf32>, i32 -> vector<16x128xf32>
    %430 = vector.extract_strided_slice %423 {offsets = [1, 0], sizes = [1, 128], strides = [1, 1]} : vector<7x128xf32> to vector<1x128xf32>
    %431 = vector.broadcast %430 : vector<1x128xf32> to vector<16x128xf32>
    %432 = arith.mulf %429, %431 : vector<16x128xf32>
    %433 = arith.addf %428, %432 : vector<16x128xf32>
    %c121_i32_124 = arith.constant 121 : i32
    %434 = tpu.dynamic_rotate %349 by %c121_i32_124 dim 1 : vector<16x128xf32>, i32 -> vector<16x128xf32>
    %435 = vector.extract_strided_slice %423 {offsets = [2, 0], sizes = [1, 128], strides = [1, 1]} : vector<7x128xf32> to vector<1x128xf32>
    %436 = vector.broadcast %435 : vector<1x128xf32> to vector<16x128xf32>
    %437 = arith.mulf %434, %436 : vector<16x128xf32>
    %438 = arith.addf %433, %437 : vector<16x128xf32>
    %c120_i32 = arith.constant 120 : i32
    %439 = tpu.dynamic_rotate %349 by %c120_i32 dim 1 : vector<16x128xf32>, i32 -> vector<16x128xf32>
    %440 = vector.extract_strided_slice %423 {offsets = [3, 0], sizes = [1, 128], strides = [1, 1]} : vector<7x128xf32> to vector<1x128xf32>
    %441 = vector.broadcast %440 : vector<1x128xf32> to vector<16x128xf32>
    %442 = arith.mulf %439, %441 : vector<16x128xf32>
    %443 = arith.addf %438, %442 : vector<16x128xf32>
    %c119_i32 = arith.constant 119 : i32
    %444 = tpu.dynamic_rotate %349 by %c119_i32 dim 1 : vector<16x128xf32>, i32 -> vector<16x128xf32>
    %445 = vector.extract_strided_slice %423 {offsets = [4, 0], sizes = [1, 128], strides = [1, 1]} : vector<7x128xf32> to vector<1x128xf32>
    %446 = vector.broadcast %445 : vector<1x128xf32> to vector<16x128xf32>
    %447 = arith.mulf %444, %446 : vector<16x128xf32>
    %448 = arith.addf %443, %447 : vector<16x128xf32>
    %c118_i32 = arith.constant 118 : i32
    %449 = tpu.dynamic_rotate %349 by %c118_i32 dim 1 : vector<16x128xf32>, i32 -> vector<16x128xf32>
    %450 = vector.extract_strided_slice %423 {offsets = [5, 0], sizes = [1, 128], strides = [1, 1]} : vector<7x128xf32> to vector<1x128xf32>
    %451 = vector.broadcast %450 : vector<1x128xf32> to vector<16x128xf32>
    %452 = arith.mulf %449, %451 : vector<16x128xf32>
    %453 = arith.addf %448, %452 : vector<16x128xf32>
    %c117_i32 = arith.constant 117 : i32
    %454 = tpu.dynamic_rotate %349 by %c117_i32 dim 1 : vector<16x128xf32>, i32 -> vector<16x128xf32>
    %455 = vector.extract_strided_slice %423 {offsets = [6, 0], sizes = [1, 128], strides = [1, 1]} : vector<7x128xf32> to vector<1x128xf32>
    %456 = vector.broadcast %455 : vector<1x128xf32> to vector<16x128xf32>
    %457 = arith.mulf %454, %456 : vector<16x128xf32>
    %458 = arith.addf %453, %457 : vector<16x128xf32>
    %c8_125 = arith.constant 8 : index
    %c0_126 = arith.constant 0 : index
    %459 = vector.load %arg4[%c8_125, %c0_126] : memref<32x128xf32, #tpu.memory_space<vmem>>, vector<16x128xf32>
    %c1_127 = arith.constant 1 : index
    %c3_128 = arith.constant 3 : index
    %c0_129 = arith.constant 0 : index
    %c0_130 = arith.constant 0 : index
    %460 = vector.load %arg2[%c1_127, %c3_128, %c0_129, %c0_130] : memref<4x9x7x128xf32, #tpu.memory_space<vmem>>, vector<1x1x7x128xf32>
    %461 = vector.shape_cast %460 : vector<1x1x7x128xf32> to vector<7x128xf32>
    %c11_i32_131 = arith.constant 11 : i32
    %462 = tpu.dynamic_rotate %459 by %c11_i32_131 dim 1 : vector<16x128xf32>, i32 -> vector<16x128xf32>
    %463 = vector.extract_strided_slice %461 {offsets = [0, 0], sizes = [1, 128], strides = [1, 1]} : vector<7x128xf32> to vector<1x128xf32>
    %464 = vector.broadcast %463 : vector<1x128xf32> to vector<16x128xf32>
    %465 = arith.mulf %462, %464 : vector<16x128xf32>
    %466 = arith.addf %458, %465 : vector<16x128xf32>
    %c10_i32_132 = arith.constant 10 : i32
    %467 = tpu.dynamic_rotate %459 by %c10_i32_132 dim 1 : vector<16x128xf32>, i32 -> vector<16x128xf32>
    %468 = vector.extract_strided_slice %461 {offsets = [1, 0], sizes = [1, 128], strides = [1, 1]} : vector<7x128xf32> to vector<1x128xf32>
    %469 = vector.broadcast %468 : vector<1x128xf32> to vector<16x128xf32>
    %470 = arith.mulf %467, %469 : vector<16x128xf32>
    %471 = arith.addf %466, %470 : vector<16x128xf32>
    %c9_i32_133 = arith.constant 9 : i32
    %472 = tpu.dynamic_rotate %459 by %c9_i32_133 dim 1 : vector<16x128xf32>, i32 -> vector<16x128xf32>
    %473 = vector.extract_strided_slice %461 {offsets = [2, 0], sizes = [1, 128], strides = [1, 1]} : vector<7x128xf32> to vector<1x128xf32>
    %474 = vector.broadcast %473 : vector<1x128xf32> to vector<16x128xf32>
    %475 = arith.mulf %472, %474 : vector<16x128xf32>
    %476 = arith.addf %471, %475 : vector<16x128xf32>
    %c8_i32_134 = arith.constant 8 : i32
    %477 = tpu.dynamic_rotate %459 by %c8_i32_134 dim 1 : vector<16x128xf32>, i32 -> vector<16x128xf32>
    %478 = vector.extract_strided_slice %461 {offsets = [3, 0], sizes = [1, 128], strides = [1, 1]} : vector<7x128xf32> to vector<1x128xf32>
    %479 = vector.broadcast %478 : vector<1x128xf32> to vector<16x128xf32>
    %480 = arith.mulf %477, %479 : vector<16x128xf32>
    %481 = arith.addf %476, %480 : vector<16x128xf32>
    %c7_i32_135 = arith.constant 7 : i32
    %482 = tpu.dynamic_rotate %459 by %c7_i32_135 dim 1 : vector<16x128xf32>, i32 -> vector<16x128xf32>
    %483 = vector.extract_strided_slice %461 {offsets = [4, 0], sizes = [1, 128], strides = [1, 1]} : vector<7x128xf32> to vector<1x128xf32>
    %484 = vector.broadcast %483 : vector<1x128xf32> to vector<16x128xf32>
    %485 = arith.mulf %482, %484 : vector<16x128xf32>
    %486 = arith.addf %481, %485 : vector<16x128xf32>
    %c6_i32_136 = arith.constant 6 : i32
    %487 = tpu.dynamic_rotate %459 by %c6_i32_136 dim 1 : vector<16x128xf32>, i32 -> vector<16x128xf32>
    %488 = vector.extract_strided_slice %461 {offsets = [5, 0], sizes = [1, 128], strides = [1, 1]} : vector<7x128xf32> to vector<1x128xf32>
    %489 = vector.broadcast %488 : vector<1x128xf32> to vector<16x128xf32>
    %490 = arith.mulf %487, %489 : vector<16x128xf32>
    %491 = arith.addf %486, %490 : vector<16x128xf32>
    %c5_i32_137 = arith.constant 5 : i32
    %492 = tpu.dynamic_rotate %459 by %c5_i32_137 dim 1 : vector<16x128xf32>, i32 -> vector<16x128xf32>
    %493 = vector.extract_strided_slice %461 {offsets = [6, 0], sizes = [1, 128], strides = [1, 1]} : vector<7x128xf32> to vector<1x128xf32>
    %494 = vector.broadcast %493 : vector<1x128xf32> to vector<16x128xf32>
    %495 = arith.mulf %492, %494 : vector<16x128xf32>
    %496 = arith.addf %491, %495 : vector<16x128xf32>
    %c1_138 = arith.constant 1 : index
    %c4_139 = arith.constant 4 : index
    %c0_140 = arith.constant 0 : index
    %c0_141 = arith.constant 0 : index
    %497 = vector.load %arg2[%c1_138, %c4_139, %c0_140, %c0_141] : memref<4x9x7x128xf32, #tpu.memory_space<vmem>>, vector<1x1x7x128xf32>
    %498 = vector.shape_cast %497 : vector<1x1x7x128xf32> to vector<7x128xf32>
    %c3_i32_142 = arith.constant 3 : i32
    %499 = tpu.dynamic_rotate %459 by %c3_i32_142 dim 1 : vector<16x128xf32>, i32 -> vector<16x128xf32>
    %500 = vector.extract_strided_slice %498 {offsets = [0, 0], sizes = [1, 128], strides = [1, 1]} : vector<7x128xf32> to vector<1x128xf32>
    %501 = vector.broadcast %500 : vector<1x128xf32> to vector<16x128xf32>
    %502 = arith.mulf %499, %501 : vector<16x128xf32>
    %503 = arith.addf %496, %502 : vector<16x128xf32>
    %c2_i32_143 = arith.constant 2 : i32
    %504 = tpu.dynamic_rotate %459 by %c2_i32_143 dim 1 : vector<16x128xf32>, i32 -> vector<16x128xf32>
    %505 = vector.extract_strided_slice %498 {offsets = [1, 0], sizes = [1, 128], strides = [1, 1]} : vector<7x128xf32> to vector<1x128xf32>
    %506 = vector.broadcast %505 : vector<1x128xf32> to vector<16x128xf32>
    %507 = arith.mulf %504, %506 : vector<16x128xf32>
    %508 = arith.addf %503, %507 : vector<16x128xf32>
    %c1_i32_144 = arith.constant 1 : i32
    %509 = tpu.dynamic_rotate %459 by %c1_i32_144 dim 1 : vector<16x128xf32>, i32 -> vector<16x128xf32>
    %510 = vector.extract_strided_slice %498 {offsets = [2, 0], sizes = [1, 128], strides = [1, 1]} : vector<7x128xf32> to vector<1x128xf32>
    %511 = vector.broadcast %510 : vector<1x128xf32> to vector<16x128xf32>
    %512 = arith.mulf %509, %511 : vector<16x128xf32>
    %513 = arith.addf %508, %512 : vector<16x128xf32>
    %514 = vector.extract_strided_slice %498 {offsets = [3, 0], sizes = [1, 128], strides = [1, 1]} : vector<7x128xf32> to vector<1x128xf32>
    %515 = vector.broadcast %514 : vector<1x128xf32> to vector<16x128xf32>
    %516 = arith.mulf %459, %515 : vector<16x128xf32>
    %517 = arith.addf %513, %516 : vector<16x128xf32>
    %c127_i32_145 = arith.constant 127 : i32
    %518 = tpu.dynamic_rotate %459 by %c127_i32_145 dim 1 : vector<16x128xf32>, i32 -> vector<16x128xf32>
    %519 = vector.extract_strided_slice %498 {offsets = [4, 0], sizes = [1, 128], strides = [1, 1]} : vector<7x128xf32> to vector<1x128xf32>
    %520 = vector.broadcast %519 : vector<1x128xf32> to vector<16x128xf32>
    %521 = arith.mulf %518, %520 : vector<16x128xf32>
    %522 = arith.addf %517, %521 : vector<16x128xf32>
    %c126_i32_146 = arith.constant 126 : i32
    %523 = tpu.dynamic_rotate %459 by %c126_i32_146 dim 1 : vector<16x128xf32>, i32 -> vector<16x128xf32>
    %524 = vector.extract_strided_slice %498 {offsets = [5, 0], sizes = [1, 128], strides = [1, 1]} : vector<7x128xf32> to vector<1x128xf32>
    %525 = vector.broadcast %524 : vector<1x128xf32> to vector<16x128xf32>
    %526 = arith.mulf %523, %525 : vector<16x128xf32>
    %527 = arith.addf %522, %526 : vector<16x128xf32>
    %c125_i32_147 = arith.constant 125 : i32
    %528 = tpu.dynamic_rotate %459 by %c125_i32_147 dim 1 : vector<16x128xf32>, i32 -> vector<16x128xf32>
    %529 = vector.extract_strided_slice %498 {offsets = [6, 0], sizes = [1, 128], strides = [1, 1]} : vector<7x128xf32> to vector<1x128xf32>
    %530 = vector.broadcast %529 : vector<1x128xf32> to vector<16x128xf32>
    %531 = arith.mulf %528, %530 : vector<16x128xf32>
    %532 = arith.addf %527, %531 : vector<16x128xf32>
    %c1_148 = arith.constant 1 : index
    %c5_149 = arith.constant 5 : index
    %c0_150 = arith.constant 0 : index
    %c0_151 = arith.constant 0 : index
    %533 = vector.load %arg2[%c1_148, %c5_149, %c0_150, %c0_151] : memref<4x9x7x128xf32, #tpu.memory_space<vmem>>, vector<1x1x7x128xf32>
    %534 = vector.shape_cast %533 : vector<1x1x7x128xf32> to vector<7x128xf32>
    %c123_i32_152 = arith.constant 123 : i32
    %535 = tpu.dynamic_rotate %459 by %c123_i32_152 dim 1 : vector<16x128xf32>, i32 -> vector<16x128xf32>
    %536 = vector.extract_strided_slice %534 {offsets = [0, 0], sizes = [1, 128], strides = [1, 1]} : vector<7x128xf32> to vector<1x128xf32>
    %537 = vector.broadcast %536 : vector<1x128xf32> to vector<16x128xf32>
    %538 = arith.mulf %535, %537 : vector<16x128xf32>
    %539 = arith.addf %532, %538 : vector<16x128xf32>
    %c122_i32_153 = arith.constant 122 : i32
    %540 = tpu.dynamic_rotate %459 by %c122_i32_153 dim 1 : vector<16x128xf32>, i32 -> vector<16x128xf32>
    %541 = vector.extract_strided_slice %534 {offsets = [1, 0], sizes = [1, 128], strides = [1, 1]} : vector<7x128xf32> to vector<1x128xf32>
    %542 = vector.broadcast %541 : vector<1x128xf32> to vector<16x128xf32>
    %543 = arith.mulf %540, %542 : vector<16x128xf32>
    %544 = arith.addf %539, %543 : vector<16x128xf32>
    %c121_i32_154 = arith.constant 121 : i32
    %545 = tpu.dynamic_rotate %459 by %c121_i32_154 dim 1 : vector<16x128xf32>, i32 -> vector<16x128xf32>
    %546 = vector.extract_strided_slice %534 {offsets = [2, 0], sizes = [1, 128], strides = [1, 1]} : vector<7x128xf32> to vector<1x128xf32>
    %547 = vector.broadcast %546 : vector<1x128xf32> to vector<16x128xf32>
    %548 = arith.mulf %545, %547 : vector<16x128xf32>
    %549 = arith.addf %544, %548 : vector<16x128xf32>
    %c120_i32_155 = arith.constant 120 : i32
    %550 = tpu.dynamic_rotate %459 by %c120_i32_155 dim 1 : vector<16x128xf32>, i32 -> vector<16x128xf32>
    %551 = vector.extract_strided_slice %534 {offsets = [3, 0], sizes = [1, 128], strides = [1, 1]} : vector<7x128xf32> to vector<1x128xf32>
    %552 = vector.broadcast %551 : vector<1x128xf32> to vector<16x128xf32>
    %553 = arith.mulf %550, %552 : vector<16x128xf32>
    %554 = arith.addf %549, %553 : vector<16x128xf32>
    %c119_i32_156 = arith.constant 119 : i32
    %555 = tpu.dynamic_rotate %459 by %c119_i32_156 dim 1 : vector<16x128xf32>, i32 -> vector<16x128xf32>
    %556 = vector.extract_strided_slice %534 {offsets = [4, 0], sizes = [1, 128], strides = [1, 1]} : vector<7x128xf32> to vector<1x128xf32>
    %557 = vector.broadcast %556 : vector<1x128xf32> to vector<16x128xf32>
    %558 = arith.mulf %555, %557 : vector<16x128xf32>
    %559 = arith.addf %554, %558 : vector<16x128xf32>
    %c118_i32_157 = arith.constant 118 : i32
    %560 = tpu.dynamic_rotate %459 by %c118_i32_157 dim 1 : vector<16x128xf32>, i32 -> vector<16x128xf32>
    %561 = vector.extract_strided_slice %534 {offsets = [5, 0], sizes = [1, 128], strides = [1, 1]} : vector<7x128xf32> to vector<1x128xf32>
    %562 = vector.broadcast %561 : vector<1x128xf32> to vector<16x128xf32>
    %563 = arith.mulf %560, %562 : vector<16x128xf32>
    %564 = arith.addf %559, %563 : vector<16x128xf32>
    %c117_i32_158 = arith.constant 117 : i32
    %565 = tpu.dynamic_rotate %459 by %c117_i32_158 dim 1 : vector<16x128xf32>, i32 -> vector<16x128xf32>
    %566 = vector.extract_strided_slice %534 {offsets = [6, 0], sizes = [1, 128], strides = [1, 1]} : vector<7x128xf32> to vector<1x128xf32>
    %567 = vector.broadcast %566 : vector<1x128xf32> to vector<16x128xf32>
    %568 = arith.mulf %565, %567 : vector<16x128xf32>
    %569 = arith.addf %564, %568 : vector<16x128xf32>
    %c10 = arith.constant 10 : index
    %c0_159 = arith.constant 0 : index
    %570 = vector.load %arg4[%c10, %c0_159] : memref<32x128xf32, #tpu.memory_space<vmem>>, vector<16x128xf32>
    %c1_160 = arith.constant 1 : index
    %c6_161 = arith.constant 6 : index
    %c0_162 = arith.constant 0 : index
    %c0_163 = arith.constant 0 : index
    %571 = vector.load %arg2[%c1_160, %c6_161, %c0_162, %c0_163] : memref<4x9x7x128xf32, #tpu.memory_space<vmem>>, vector<1x1x7x128xf32>
    %572 = vector.shape_cast %571 : vector<1x1x7x128xf32> to vector<7x128xf32>
    %c11_i32_164 = arith.constant 11 : i32
    %573 = tpu.dynamic_rotate %570 by %c11_i32_164 dim 1 : vector<16x128xf32>, i32 -> vector<16x128xf32>
    %574 = vector.extract_strided_slice %572 {offsets = [0, 0], sizes = [1, 128], strides = [1, 1]} : vector<7x128xf32> to vector<1x128xf32>
    %575 = vector.broadcast %574 : vector<1x128xf32> to vector<16x128xf32>
    %576 = arith.mulf %573, %575 : vector<16x128xf32>
    %577 = arith.addf %569, %576 : vector<16x128xf32>
    %c10_i32_165 = arith.constant 10 : i32
    %578 = tpu.dynamic_rotate %570 by %c10_i32_165 dim 1 : vector<16x128xf32>, i32 -> vector<16x128xf32>
    %579 = vector.extract_strided_slice %572 {offsets = [1, 0], sizes = [1, 128], strides = [1, 1]} : vector<7x128xf32> to vector<1x128xf32>
    %580 = vector.broadcast %579 : vector<1x128xf32> to vector<16x128xf32>
    %581 = arith.mulf %578, %580 : vector<16x128xf32>
    %582 = arith.addf %577, %581 : vector<16x128xf32>
    %c9_i32_166 = arith.constant 9 : i32
    %583 = tpu.dynamic_rotate %570 by %c9_i32_166 dim 1 : vector<16x128xf32>, i32 -> vector<16x128xf32>
    %584 = vector.extract_strided_slice %572 {offsets = [2, 0], sizes = [1, 128], strides = [1, 1]} : vector<7x128xf32> to vector<1x128xf32>
    %585 = vector.broadcast %584 : vector<1x128xf32> to vector<16x128xf32>
    %586 = arith.mulf %583, %585 : vector<16x128xf32>
    %587 = arith.addf %582, %586 : vector<16x128xf32>
    %c8_i32_167 = arith.constant 8 : i32
    %588 = tpu.dynamic_rotate %570 by %c8_i32_167 dim 1 : vector<16x128xf32>, i32 -> vector<16x128xf32>
    %589 = vector.extract_strided_slice %572 {offsets = [3, 0], sizes = [1, 128], strides = [1, 1]} : vector<7x128xf32> to vector<1x128xf32>
    %590 = vector.broadcast %589 : vector<1x128xf32> to vector<16x128xf32>
    %591 = arith.mulf %588, %590 : vector<16x128xf32>
    %592 = arith.addf %587, %591 : vector<16x128xf32>
    %c7_i32_168 = arith.constant 7 : i32
    %593 = tpu.dynamic_rotate %570 by %c7_i32_168 dim 1 : vector<16x128xf32>, i32 -> vector<16x128xf32>
    %594 = vector.extract_strided_slice %572 {offsets = [4, 0], sizes = [1, 128], strides = [1, 1]} : vector<7x128xf32> to vector<1x128xf32>
    %595 = vector.broadcast %594 : vector<1x128xf32> to vector<16x128xf32>
    %596 = arith.mulf %593, %595 : vector<16x128xf32>
    %597 = arith.addf %592, %596 : vector<16x128xf32>
    %c6_i32_169 = arith.constant 6 : i32
    %598 = tpu.dynamic_rotate %570 by %c6_i32_169 dim 1 : vector<16x128xf32>, i32 -> vector<16x128xf32>
    %599 = vector.extract_strided_slice %572 {offsets = [5, 0], sizes = [1, 128], strides = [1, 1]} : vector<7x128xf32> to vector<1x128xf32>
    %600 = vector.broadcast %599 : vector<1x128xf32> to vector<16x128xf32>
    %601 = arith.mulf %598, %600 : vector<16x128xf32>
    %602 = arith.addf %597, %601 : vector<16x128xf32>
    %c5_i32_170 = arith.constant 5 : i32
    %603 = tpu.dynamic_rotate %570 by %c5_i32_170 dim 1 : vector<16x128xf32>, i32 -> vector<16x128xf32>
    %604 = vector.extract_strided_slice %572 {offsets = [6, 0], sizes = [1, 128], strides = [1, 1]} : vector<7x128xf32> to vector<1x128xf32>
    %605 = vector.broadcast %604 : vector<1x128xf32> to vector<16x128xf32>
    %606 = arith.mulf %603, %605 : vector<16x128xf32>
    %607 = arith.addf %602, %606 : vector<16x128xf32>
    %c1_171 = arith.constant 1 : index
    %c7_172 = arith.constant 7 : index
    %c0_173 = arith.constant 0 : index
    %c0_174 = arith.constant 0 : index
    %608 = vector.load %arg2[%c1_171, %c7_172, %c0_173, %c0_174] : memref<4x9x7x128xf32, #tpu.memory_space<vmem>>, vector<1x1x7x128xf32>
    %609 = vector.shape_cast %608 : vector<1x1x7x128xf32> to vector<7x128xf32>
    %c3_i32_175 = arith.constant 3 : i32
    %610 = tpu.dynamic_rotate %570 by %c3_i32_175 dim 1 : vector<16x128xf32>, i32 -> vector<16x128xf32>
    %611 = vector.extract_strided_slice %609 {offsets = [0, 0], sizes = [1, 128], strides = [1, 1]} : vector<7x128xf32> to vector<1x128xf32>
    %612 = vector.broadcast %611 : vector<1x128xf32> to vector<16x128xf32>
    %613 = arith.mulf %610, %612 : vector<16x128xf32>
    %614 = arith.addf %607, %613 : vector<16x128xf32>
    %c2_i32_176 = arith.constant 2 : i32
    %615 = tpu.dynamic_rotate %570 by %c2_i32_176 dim 1 : vector<16x128xf32>, i32 -> vector<16x128xf32>
    %616 = vector.extract_strided_slice %609 {offsets = [1, 0], sizes = [1, 128], strides = [1, 1]} : vector<7x128xf32> to vector<1x128xf32>
    %617 = vector.broadcast %616 : vector<1x128xf32> to vector<16x128xf32>
    %618 = arith.mulf %615, %617 : vector<16x128xf32>
    %619 = arith.addf %614, %618 : vector<16x128xf32>
    %c1_i32_177 = arith.constant 1 : i32
    %620 = tpu.dynamic_rotate %570 by %c1_i32_177 dim 1 : vector<16x128xf32>, i32 -> vector<16x128xf32>
    %621 = vector.extract_strided_slice %609 {offsets = [2, 0], sizes = [1, 128], strides = [1, 1]} : vector<7x128xf32> to vector<1x128xf32>
    %622 = vector.broadcast %621 : vector<1x128xf32> to vector<16x128xf32>
    %623 = arith.mulf %620, %622 : vector<16x128xf32>
    %624 = arith.addf %619, %623 : vector<16x128xf32>
    %625 = vector.extract_strided_slice %609 {offsets = [3, 0], sizes = [1, 128], strides = [1, 1]} : vector<7x128xf32> to vector<1x128xf32>
    %626 = vector.broadcast %625 : vector<1x128xf32> to vector<16x128xf32>
    %627 = arith.mulf %570, %626 : vector<16x128xf32>
    %628 = arith.addf %624, %627 : vector<16x128xf32>
    %c127_i32_178 = arith.constant 127 : i32
    %629 = tpu.dynamic_rotate %570 by %c127_i32_178 dim 1 : vector<16x128xf32>, i32 -> vector<16x128xf32>
    %630 = vector.extract_strided_slice %609 {offsets = [4, 0], sizes = [1, 128], strides = [1, 1]} : vector<7x128xf32> to vector<1x128xf32>
    %631 = vector.broadcast %630 : vector<1x128xf32> to vector<16x128xf32>
    %632 = arith.mulf %629, %631 : vector<16x128xf32>
    %633 = arith.addf %628, %632 : vector<16x128xf32>
    %c126_i32_179 = arith.constant 126 : i32
    %634 = tpu.dynamic_rotate %570 by %c126_i32_179 dim 1 : vector<16x128xf32>, i32 -> vector<16x128xf32>
    %635 = vector.extract_strided_slice %609 {offsets = [5, 0], sizes = [1, 128], strides = [1, 1]} : vector<7x128xf32> to vector<1x128xf32>
    %636 = vector.broadcast %635 : vector<1x128xf32> to vector<16x128xf32>
    %637 = arith.mulf %634, %636 : vector<16x128xf32>
    %638 = arith.addf %633, %637 : vector<16x128xf32>
    %c125_i32_180 = arith.constant 125 : i32
    %639 = tpu.dynamic_rotate %570 by %c125_i32_180 dim 1 : vector<16x128xf32>, i32 -> vector<16x128xf32>
    %640 = vector.extract_strided_slice %609 {offsets = [6, 0], sizes = [1, 128], strides = [1, 1]} : vector<7x128xf32> to vector<1x128xf32>
    %641 = vector.broadcast %640 : vector<1x128xf32> to vector<16x128xf32>
    %642 = arith.mulf %639, %641 : vector<16x128xf32>
    %643 = arith.addf %638, %642 : vector<16x128xf32>
    %c1_181 = arith.constant 1 : index
    %c8_182 = arith.constant 8 : index
    %c0_183 = arith.constant 0 : index
    %c0_184 = arith.constant 0 : index
    %644 = vector.load %arg2[%c1_181, %c8_182, %c0_183, %c0_184] : memref<4x9x7x128xf32, #tpu.memory_space<vmem>>, vector<1x1x7x128xf32>
    %645 = vector.shape_cast %644 : vector<1x1x7x128xf32> to vector<7x128xf32>
    %c123_i32_185 = arith.constant 123 : i32
    %646 = tpu.dynamic_rotate %570 by %c123_i32_185 dim 1 : vector<16x128xf32>, i32 -> vector<16x128xf32>
    %647 = vector.extract_strided_slice %645 {offsets = [0, 0], sizes = [1, 128], strides = [1, 1]} : vector<7x128xf32> to vector<1x128xf32>
    %648 = vector.broadcast %647 : vector<1x128xf32> to vector<16x128xf32>
    %649 = arith.mulf %646, %648 : vector<16x128xf32>
    %650 = arith.addf %643, %649 : vector<16x128xf32>
    %c122_i32_186 = arith.constant 122 : i32
    %651 = tpu.dynamic_rotate %570 by %c122_i32_186 dim 1 : vector<16x128xf32>, i32 -> vector<16x128xf32>
    %652 = vector.extract_strided_slice %645 {offsets = [1, 0], sizes = [1, 128], strides = [1, 1]} : vector<7x128xf32> to vector<1x128xf32>
    %653 = vector.broadcast %652 : vector<1x128xf32> to vector<16x128xf32>
    %654 = arith.mulf %651, %653 : vector<16x128xf32>
    %655 = arith.addf %650, %654 : vector<16x128xf32>
    %c121_i32_187 = arith.constant 121 : i32
    %656 = tpu.dynamic_rotate %570 by %c121_i32_187 dim 1 : vector<16x128xf32>, i32 -> vector<16x128xf32>
    %657 = vector.extract_strided_slice %645 {offsets = [2, 0], sizes = [1, 128], strides = [1, 1]} : vector<7x128xf32> to vector<1x128xf32>
    %658 = vector.broadcast %657 : vector<1x128xf32> to vector<16x128xf32>
    %659 = arith.mulf %656, %658 : vector<16x128xf32>
    %660 = arith.addf %655, %659 : vector<16x128xf32>
    %c120_i32_188 = arith.constant 120 : i32
    %661 = tpu.dynamic_rotate %570 by %c120_i32_188 dim 1 : vector<16x128xf32>, i32 -> vector<16x128xf32>
    %662 = vector.extract_strided_slice %645 {offsets = [3, 0], sizes = [1, 128], strides = [1, 1]} : vector<7x128xf32> to vector<1x128xf32>
    %663 = vector.broadcast %662 : vector<1x128xf32> to vector<16x128xf32>
    %664 = arith.mulf %661, %663 : vector<16x128xf32>
    %665 = arith.addf %660, %664 : vector<16x128xf32>
    %c119_i32_189 = arith.constant 119 : i32
    %666 = tpu.dynamic_rotate %570 by %c119_i32_189 dim 1 : vector<16x128xf32>, i32 -> vector<16x128xf32>
    %667 = vector.extract_strided_slice %645 {offsets = [4, 0], sizes = [1, 128], strides = [1, 1]} : vector<7x128xf32> to vector<1x128xf32>
    %668 = vector.broadcast %667 : vector<1x128xf32> to vector<16x128xf32>
    %669 = arith.mulf %666, %668 : vector<16x128xf32>
    %670 = arith.addf %665, %669 : vector<16x128xf32>
    %c118_i32_190 = arith.constant 118 : i32
    %671 = tpu.dynamic_rotate %570 by %c118_i32_190 dim 1 : vector<16x128xf32>, i32 -> vector<16x128xf32>
    %672 = vector.extract_strided_slice %645 {offsets = [5, 0], sizes = [1, 128], strides = [1, 1]} : vector<7x128xf32> to vector<1x128xf32>
    %673 = vector.broadcast %672 : vector<1x128xf32> to vector<16x128xf32>
    %674 = arith.mulf %671, %673 : vector<16x128xf32>
    %675 = arith.addf %670, %674 : vector<16x128xf32>
    %c117_i32_191 = arith.constant 117 : i32
    %676 = tpu.dynamic_rotate %570 by %c117_i32_191 dim 1 : vector<16x128xf32>, i32 -> vector<16x128xf32>
    %677 = vector.extract_strided_slice %645 {offsets = [6, 0], sizes = [1, 128], strides = [1, 1]} : vector<7x128xf32> to vector<1x128xf32>
    %678 = vector.broadcast %677 : vector<1x128xf32> to vector<16x128xf32>
    %679 = arith.mulf %676, %678 : vector<16x128xf32>
    %680 = arith.addf %675, %679 : vector<16x128xf32>
    %681 = vector.extract_strided_slice %680 {offsets = [0, 32], sizes = [16, 64], strides = [1, 1]} : vector<16x128xf32> to vector<16x64xf32>
    %c0_192 = arith.constant 0 : index
    %c0_193 = arith.constant 0 : index
    %682 = vector.load %arg5[%c0_192, %c0_193] : memref<16x64xf32, #tpu.memory_space<vmem>>, vector<16x64xf32>
    %683 = arith.addf %682, %681 : vector<16x64xf32>
    %c0_194 = arith.constant 0 : index
    %c0_195 = arith.constant 0 : index
    %684 = vector.load %arg5[%c0_194, %c0_195] : memref<16x64xf32, #tpu.memory_space<vmem>>, vector<16x64xf32>
    tpu.vector_store %arg5[%c0_194, %c0_195], %683 {strides = array<i32>} : memref<16x64xf32, #tpu.memory_space<vmem>>, vector<16x64xf32>,
    %c8_196 = arith.constant 8 : index
    %c32_197 = arith.constant 32 : index
    %685 = vector.load %arg4[%c8_196, %c32_197] : memref<32x128xf32, #tpu.memory_space<vmem>>, vector<16x64xf32>
    tpu.vector_store %arg4[%c8_196, %c32_197], %681 {strides = array<i32>} : memref<32x128xf32, #tpu.memory_space<vmem>>, vector<16x64xf32>,
    %c4_198 = arith.constant 4 : index
    %c0_199 = arith.constant 0 : index
    %686 = vector.load %arg4[%c4_198, %c0_199] : memref<32x128xf32, #tpu.memory_space<vmem>>, vector<16x128xf32>
    %c2_200 = arith.constant 2 : index
    %c0_201 = arith.constant 0 : index
    %c0_202 = arith.constant 0 : index
    %c0_203 = arith.constant 0 : index
    %687 = vector.load %arg2[%c2_200, %c0_201, %c0_202, %c0_203] : memref<4x9x7x128xf32, #tpu.memory_space<vmem>>, vector<1x1x7x128xf32>
    %688 = vector.shape_cast %687 : vector<1x1x7x128xf32> to vector<7x128xf32>
    %c19_i32 = arith.constant 19 : i32
    %689 = tpu.dynamic_rotate %686 by %c19_i32 dim 1 : vector<16x128xf32>, i32 -> vector<16x128xf32>
    %690 = vector.extract_strided_slice %688 {offsets = [0, 0], sizes = [1, 128], strides = [1, 1]} : vector<7x128xf32> to vector<1x128xf32>
    %691 = vector.broadcast %690 : vector<1x128xf32> to vector<16x128xf32>
    %692 = arith.mulf %689, %691 : vector<16x128xf32>
    %c18_i32 = arith.constant 18 : i32
    %693 = tpu.dynamic_rotate %686 by %c18_i32 dim 1 : vector<16x128xf32>, i32 -> vector<16x128xf32>
    %694 = vector.extract_strided_slice %688 {offsets = [1, 0], sizes = [1, 128], strides = [1, 1]} : vector<7x128xf32> to vector<1x128xf32>
    %695 = vector.broadcast %694 : vector<1x128xf32> to vector<16x128xf32>
    %696 = arith.mulf %693, %695 : vector<16x128xf32>
    %697 = arith.addf %692, %696 : vector<16x128xf32>
    %c17_i32 = arith.constant 17 : i32
    %698 = tpu.dynamic_rotate %686 by %c17_i32 dim 1 : vector<16x128xf32>, i32 -> vector<16x128xf32>
    %699 = vector.extract_strided_slice %688 {offsets = [2, 0], sizes = [1, 128], strides = [1, 1]} : vector<7x128xf32> to vector<1x128xf32>
    %700 = vector.broadcast %699 : vector<1x128xf32> to vector<16x128xf32>
    %701 = arith.mulf %698, %700 : vector<16x128xf32>
    %702 = arith.addf %697, %701 : vector<16x128xf32>
    %c16_i32 = arith.constant 16 : i32
    %703 = tpu.dynamic_rotate %686 by %c16_i32 dim 1 : vector<16x128xf32>, i32 -> vector<16x128xf32>
    %704 = vector.extract_strided_slice %688 {offsets = [3, 0], sizes = [1, 128], strides = [1, 1]} : vector<7x128xf32> to vector<1x128xf32>
    %705 = vector.broadcast %704 : vector<1x128xf32> to vector<16x128xf32>
    %706 = arith.mulf %703, %705 : vector<16x128xf32>
    %707 = arith.addf %702, %706 : vector<16x128xf32>
    %c15_i32 = arith.constant 15 : i32
    %708 = tpu.dynamic_rotate %686 by %c15_i32 dim 1 : vector<16x128xf32>, i32 -> vector<16x128xf32>
    %709 = vector.extract_strided_slice %688 {offsets = [4, 0], sizes = [1, 128], strides = [1, 1]} : vector<7x128xf32> to vector<1x128xf32>
    %710 = vector.broadcast %709 : vector<1x128xf32> to vector<16x128xf32>
    %711 = arith.mulf %708, %710 : vector<16x128xf32>
    %712 = arith.addf %707, %711 : vector<16x128xf32>
    %c14_i32 = arith.constant 14 : i32
    %713 = tpu.dynamic_rotate %686 by %c14_i32 dim 1 : vector<16x128xf32>, i32 -> vector<16x128xf32>
    %714 = vector.extract_strided_slice %688 {offsets = [5, 0], sizes = [1, 128], strides = [1, 1]} : vector<7x128xf32> to vector<1x128xf32>
    %715 = vector.broadcast %714 : vector<1x128xf32> to vector<16x128xf32>
    %716 = arith.mulf %713, %715 : vector<16x128xf32>
    %717 = arith.addf %712, %716 : vector<16x128xf32>
    %c13_i32 = arith.constant 13 : i32
    %718 = tpu.dynamic_rotate %686 by %c13_i32 dim 1 : vector<16x128xf32>, i32 -> vector<16x128xf32>
    %719 = vector.extract_strided_slice %688 {offsets = [6, 0], sizes = [1, 128], strides = [1, 1]} : vector<7x128xf32> to vector<1x128xf32>
    %720 = vector.broadcast %719 : vector<1x128xf32> to vector<16x128xf32>
    %721 = arith.mulf %718, %720 : vector<16x128xf32>
    %722 = arith.addf %717, %721 : vector<16x128xf32>
    %c2_204 = arith.constant 2 : index
    %c1_205 = arith.constant 1 : index
    %c0_206 = arith.constant 0 : index
    %c0_207 = arith.constant 0 : index
    %723 = vector.load %arg2[%c2_204, %c1_205, %c0_206, %c0_207] : memref<4x9x7x128xf32, #tpu.memory_space<vmem>>, vector<1x1x7x128xf32>
    %724 = vector.shape_cast %723 : vector<1x1x7x128xf32> to vector<7x128xf32>
    %c3_i32_208 = arith.constant 3 : i32
    %725 = tpu.dynamic_rotate %686 by %c3_i32_208 dim 1 : vector<16x128xf32>, i32 -> vector<16x128xf32>
    %726 = vector.extract_strided_slice %724 {offsets = [0, 0], sizes = [1, 128], strides = [1, 1]} : vector<7x128xf32> to vector<1x128xf32>
    %727 = vector.broadcast %726 : vector<1x128xf32> to vector<16x128xf32>
    %728 = arith.mulf %725, %727 : vector<16x128xf32>
    %729 = arith.addf %722, %728 : vector<16x128xf32>
    %c2_i32_209 = arith.constant 2 : i32
    %730 = tpu.dynamic_rotate %686 by %c2_i32_209 dim 1 : vector<16x128xf32>, i32 -> vector<16x128xf32>
    %731 = vector.extract_strided_slice %724 {offsets = [1, 0], sizes = [1, 128], strides = [1, 1]} : vector<7x128xf32> to vector<1x128xf32>
    %732 = vector.broadcast %731 : vector<1x128xf32> to vector<16x128xf32>
    %733 = arith.mulf %730, %732 : vector<16x128xf32>
    %734 = arith.addf %729, %733 : vector<16x128xf32>
    %c1_i32_210 = arith.constant 1 : i32
    %735 = tpu.dynamic_rotate %686 by %c1_i32_210 dim 1 : vector<16x128xf32>, i32 -> vector<16x128xf32>
    %736 = vector.extract_strided_slice %724 {offsets = [2, 0], sizes = [1, 128], strides = [1, 1]} : vector<7x128xf32> to vector<1x128xf32>
    %737 = vector.broadcast %736 : vector<1x128xf32> to vector<16x128xf32>
    %738 = arith.mulf %735, %737 : vector<16x128xf32>
    %739 = arith.addf %734, %738 : vector<16x128xf32>
    %740 = vector.extract_strided_slice %724 {offsets = [3, 0], sizes = [1, 128], strides = [1, 1]} : vector<7x128xf32> to vector<1x128xf32>
    %741 = vector.broadcast %740 : vector<1x128xf32> to vector<16x128xf32>
    %742 = arith.mulf %686, %741 : vector<16x128xf32>
    %743 = arith.addf %739, %742 : vector<16x128xf32>
    %c127_i32_211 = arith.constant 127 : i32
    %744 = tpu.dynamic_rotate %686 by %c127_i32_211 dim 1 : vector<16x128xf32>, i32 -> vector<16x128xf32>
    %745 = vector.extract_strided_slice %724 {offsets = [4, 0], sizes = [1, 128], strides = [1, 1]} : vector<7x128xf32> to vector<1x128xf32>
    %746 = vector.broadcast %745 : vector<1x128xf32> to vector<16x128xf32>
    %747 = arith.mulf %744, %746 : vector<16x128xf32>
    %748 = arith.addf %743, %747 : vector<16x128xf32>
    %c126_i32_212 = arith.constant 126 : i32
    %749 = tpu.dynamic_rotate %686 by %c126_i32_212 dim 1 : vector<16x128xf32>, i32 -> vector<16x128xf32>
    %750 = vector.extract_strided_slice %724 {offsets = [5, 0], sizes = [1, 128], strides = [1, 1]} : vector<7x128xf32> to vector<1x128xf32>
    %751 = vector.broadcast %750 : vector<1x128xf32> to vector<16x128xf32>
    %752 = arith.mulf %749, %751 : vector<16x128xf32>
    %753 = arith.addf %748, %752 : vector<16x128xf32>
    %c125_i32_213 = arith.constant 125 : i32
    %754 = tpu.dynamic_rotate %686 by %c125_i32_213 dim 1 : vector<16x128xf32>, i32 -> vector<16x128xf32>
    %755 = vector.extract_strided_slice %724 {offsets = [6, 0], sizes = [1, 128], strides = [1, 1]} : vector<7x128xf32> to vector<1x128xf32>
    %756 = vector.broadcast %755 : vector<1x128xf32> to vector<16x128xf32>
    %757 = arith.mulf %754, %756 : vector<16x128xf32>
    %758 = arith.addf %753, %757 : vector<16x128xf32>
    %c2_214 = arith.constant 2 : index
    %c2_215 = arith.constant 2 : index
    %c0_216 = arith.constant 0 : index
    %c0_217 = arith.constant 0 : index
    %759 = vector.load %arg2[%c2_214, %c2_215, %c0_216, %c0_217] : memref<4x9x7x128xf32, #tpu.memory_space<vmem>>, vector<1x1x7x128xf32>
    %760 = vector.shape_cast %759 : vector<1x1x7x128xf32> to vector<7x128xf32>
    %c115_i32 = arith.constant 115 : i32
    %761 = tpu.dynamic_rotate %686 by %c115_i32 dim 1 : vector<16x128xf32>, i32 -> vector<16x128xf32>
    %762 = vector.extract_strided_slice %760 {offsets = [0, 0], sizes = [1, 128], strides = [1, 1]} : vector<7x128xf32> to vector<1x128xf32>
    %763 = vector.broadcast %762 : vector<1x128xf32> to vector<16x128xf32>
    %764 = arith.mulf %761, %763 : vector<16x128xf32>
    %765 = arith.addf %758, %764 : vector<16x128xf32>
    %c114_i32 = arith.constant 114 : i32
    %766 = tpu.dynamic_rotate %686 by %c114_i32 dim 1 : vector<16x128xf32>, i32 -> vector<16x128xf32>
    %767 = vector.extract_strided_slice %760 {offsets = [1, 0], sizes = [1, 128], strides = [1, 1]} : vector<7x128xf32> to vector<1x128xf32>
    %768 = vector.broadcast %767 : vector<1x128xf32> to vector<16x128xf32>
    %769 = arith.mulf %766, %768 : vector<16x128xf32>
    %770 = arith.addf %765, %769 : vector<16x128xf32>
    %c113_i32 = arith.constant 113 : i32
    %771 = tpu.dynamic_rotate %686 by %c113_i32 dim 1 : vector<16x128xf32>, i32 -> vector<16x128xf32>
    %772 = vector.extract_strided_slice %760 {offsets = [2, 0], sizes = [1, 128], strides = [1, 1]} : vector<7x128xf32> to vector<1x128xf32>
    %773 = vector.broadcast %772 : vector<1x128xf32> to vector<16x128xf32>
    %774 = arith.mulf %771, %773 : vector<16x128xf32>
    %775 = arith.addf %770, %774 : vector<16x128xf32>
    %c112_i32 = arith.constant 112 : i32
    %776 = tpu.dynamic_rotate %686 by %c112_i32 dim 1 : vector<16x128xf32>, i32 -> vector<16x128xf32>
    %777 = vector.extract_strided_slice %760 {offsets = [3, 0], sizes = [1, 128], strides = [1, 1]} : vector<7x128xf32> to vector<1x128xf32>
    %778 = vector.broadcast %777 : vector<1x128xf32> to vector<16x128xf32>
    %779 = arith.mulf %776, %778 : vector<16x128xf32>
    %780 = arith.addf %775, %779 : vector<16x128xf32>
    %c111_i32 = arith.constant 111 : i32
    %781 = tpu.dynamic_rotate %686 by %c111_i32 dim 1 : vector<16x128xf32>, i32 -> vector<16x128xf32>
    %782 = vector.extract_strided_slice %760 {offsets = [4, 0], sizes = [1, 128], strides = [1, 1]} : vector<7x128xf32> to vector<1x128xf32>
    %783 = vector.broadcast %782 : vector<1x128xf32> to vector<16x128xf32>
    %784 = arith.mulf %781, %783 : vector<16x128xf32>
    %785 = arith.addf %780, %784 : vector<16x128xf32>
    %c110_i32 = arith.constant 110 : i32
    %786 = tpu.dynamic_rotate %686 by %c110_i32 dim 1 : vector<16x128xf32>, i32 -> vector<16x128xf32>
    %787 = vector.extract_strided_slice %760 {offsets = [5, 0], sizes = [1, 128], strides = [1, 1]} : vector<7x128xf32> to vector<1x128xf32>
    %788 = vector.broadcast %787 : vector<1x128xf32> to vector<16x128xf32>
    %789 = arith.mulf %786, %788 : vector<16x128xf32>
    %790 = arith.addf %785, %789 : vector<16x128xf32>
    %c109_i32 = arith.constant 109 : i32
    %791 = tpu.dynamic_rotate %686 by %c109_i32 dim 1 : vector<16x128xf32>, i32 -> vector<16x128xf32>
    %792 = vector.extract_strided_slice %760 {offsets = [6, 0], sizes = [1, 128], strides = [1, 1]} : vector<7x128xf32> to vector<1x128xf32>
    %793 = vector.broadcast %792 : vector<1x128xf32> to vector<16x128xf32>
    %794 = arith.mulf %791, %793 : vector<16x128xf32>
    %795 = arith.addf %790, %794 : vector<16x128xf32>
    %c8_218 = arith.constant 8 : index
    %c0_219 = arith.constant 0 : index
    %796 = vector.load %arg4[%c8_218, %c0_219] : memref<32x128xf32, #tpu.memory_space<vmem>>, vector<16x128xf32>
    %c2_220 = arith.constant 2 : index
    %c3_221 = arith.constant 3 : index
    %c0_222 = arith.constant 0 : index
    %c0_223 = arith.constant 0 : index
    %797 = vector.load %arg2[%c2_220, %c3_221, %c0_222, %c0_223] : memref<4x9x7x128xf32, #tpu.memory_space<vmem>>, vector<1x1x7x128xf32>
    %798 = vector.shape_cast %797 : vector<1x1x7x128xf32> to vector<7x128xf32>
    %c19_i32_224 = arith.constant 19 : i32
    %799 = tpu.dynamic_rotate %796 by %c19_i32_224 dim 1 : vector<16x128xf32>, i32 -> vector<16x128xf32>
    %800 = vector.extract_strided_slice %798 {offsets = [0, 0], sizes = [1, 128], strides = [1, 1]} : vector<7x128xf32> to vector<1x128xf32>
    %801 = vector.broadcast %800 : vector<1x128xf32> to vector<16x128xf32>
    %802 = arith.mulf %799, %801 : vector<16x128xf32>
    %803 = arith.addf %795, %802 : vector<16x128xf32>
    %c18_i32_225 = arith.constant 18 : i32
    %804 = tpu.dynamic_rotate %796 by %c18_i32_225 dim 1 : vector<16x128xf32>, i32 -> vector<16x128xf32>
    %805 = vector.extract_strided_slice %798 {offsets = [1, 0], sizes = [1, 128], strides = [1, 1]} : vector<7x128xf32> to vector<1x128xf32>
    %806 = vector.broadcast %805 : vector<1x128xf32> to vector<16x128xf32>
    %807 = arith.mulf %804, %806 : vector<16x128xf32>
    %808 = arith.addf %803, %807 : vector<16x128xf32>
    %c17_i32_226 = arith.constant 17 : i32
    %809 = tpu.dynamic_rotate %796 by %c17_i32_226 dim 1 : vector<16x128xf32>, i32 -> vector<16x128xf32>
    %810 = vector.extract_strided_slice %798 {offsets = [2, 0], sizes = [1, 128], strides = [1, 1]} : vector<7x128xf32> to vector<1x128xf32>
    %811 = vector.broadcast %810 : vector<1x128xf32> to vector<16x128xf32>
    %812 = arith.mulf %809, %811 : vector<16x128xf32>
    %813 = arith.addf %808, %812 : vector<16x128xf32>
    %c16_i32_227 = arith.constant 16 : i32
    %814 = tpu.dynamic_rotate %796 by %c16_i32_227 dim 1 : vector<16x128xf32>, i32 -> vector<16x128xf32>
    %815 = vector.extract_strided_slice %798 {offsets = [3, 0], sizes = [1, 128], strides = [1, 1]} : vector<7x128xf32> to vector<1x128xf32>
    %816 = vector.broadcast %815 : vector<1x128xf32> to vector<16x128xf32>
    %817 = arith.mulf %814, %816 : vector<16x128xf32>
    %818 = arith.addf %813, %817 : vector<16x128xf32>
    %c15_i32_228 = arith.constant 15 : i32
    %819 = tpu.dynamic_rotate %796 by %c15_i32_228 dim 1 : vector<16x128xf32>, i32 -> vector<16x128xf32>
    %820 = vector.extract_strided_slice %798 {offsets = [4, 0], sizes = [1, 128], strides = [1, 1]} : vector<7x128xf32> to vector<1x128xf32>
    %821 = vector.broadcast %820 : vector<1x128xf32> to vector<16x128xf32>
    %822 = arith.mulf %819, %821 : vector<16x128xf32>
    %823 = arith.addf %818, %822 : vector<16x128xf32>
    %c14_i32_229 = arith.constant 14 : i32
    %824 = tpu.dynamic_rotate %796 by %c14_i32_229 dim 1 : vector<16x128xf32>, i32 -> vector<16x128xf32>
    %825 = vector.extract_strided_slice %798 {offsets = [5, 0], sizes = [1, 128], strides = [1, 1]} : vector<7x128xf32> to vector<1x128xf32>
    %826 = vector.broadcast %825 : vector<1x128xf32> to vector<16x128xf32>
    %827 = arith.mulf %824, %826 : vector<16x128xf32>
    %828 = arith.addf %823, %827 : vector<16x128xf32>
    %c13_i32_230 = arith.constant 13 : i32
    %829 = tpu.dynamic_rotate %796 by %c13_i32_230 dim 1 : vector<16x128xf32>, i32 -> vector<16x128xf32>
    %830 = vector.extract_strided_slice %798 {offsets = [6, 0], sizes = [1, 128], strides = [1, 1]} : vector<7x128xf32> to vector<1x128xf32>
    %831 = vector.broadcast %830 : vector<1x128xf32> to vector<16x128xf32>
    %832 = arith.mulf %829, %831 : vector<16x128xf32>
    %833 = arith.addf %828, %832 : vector<16x128xf32>
    %c2_231 = arith.constant 2 : index
    %c4_232 = arith.constant 4 : index
    %c0_233 = arith.constant 0 : index
    %c0_234 = arith.constant 0 : index
    %834 = vector.load %arg2[%c2_231, %c4_232, %c0_233, %c0_234] : memref<4x9x7x128xf32, #tpu.memory_space<vmem>>, vector<1x1x7x128xf32>
    %835 = vector.shape_cast %834 : vector<1x1x7x128xf32> to vector<7x128xf32>
    %c3_i32_235 = arith.constant 3 : i32
    %836 = tpu.dynamic_rotate %796 by %c3_i32_235 dim 1 : vector<16x128xf32>, i32 -> vector<16x128xf32>
    %837 = vector.extract_strided_slice %835 {offsets = [0, 0], sizes = [1, 128], strides = [1, 1]} : vector<7x128xf32> to vector<1x128xf32>
    %838 = vector.broadcast %837 : vector<1x128xf32> to vector<16x128xf32>
    %839 = arith.mulf %836, %838 : vector<16x128xf32>
    %840 = arith.addf %833, %839 : vector<16x128xf32>
    %c2_i32_236 = arith.constant 2 : i32
    %841 = tpu.dynamic_rotate %796 by %c2_i32_236 dim 1 : vector<16x128xf32>, i32 -> vector<16x128xf32>
    %842 = vector.extract_strided_slice %835 {offsets = [1, 0], sizes = [1, 128], strides = [1, 1]} : vector<7x128xf32> to vector<1x128xf32>
    %843 = vector.broadcast %842 : vector<1x128xf32> to vector<16x128xf32>
    %844 = arith.mulf %841, %843 : vector<16x128xf32>
    %845 = arith.addf %840, %844 : vector<16x128xf32>
    %c1_i32_237 = arith.constant 1 : i32
    %846 = tpu.dynamic_rotate %796 by %c1_i32_237 dim 1 : vector<16x128xf32>, i32 -> vector<16x128xf32>
    %847 = vector.extract_strided_slice %835 {offsets = [2, 0], sizes = [1, 128], strides = [1, 1]} : vector<7x128xf32> to vector<1x128xf32>
    %848 = vector.broadcast %847 : vector<1x128xf32> to vector<16x128xf32>
    %849 = arith.mulf %846, %848 : vector<16x128xf32>
    %850 = arith.addf %845, %849 : vector<16x128xf32>
    %851 = vector.extract_strided_slice %835 {offsets = [3, 0], sizes = [1, 128], strides = [1, 1]} : vector<7x128xf32> to vector<1x128xf32>
    %852 = vector.broadcast %851 : vector<1x128xf32> to vector<16x128xf32>
    %853 = arith.mulf %796, %852 : vector<16x128xf32>
    %854 = arith.addf %850, %853 : vector<16x128xf32>
    %c127_i32_238 = arith.constant 127 : i32
    %855 = tpu.dynamic_rotate %796 by %c127_i32_238 dim 1 : vector<16x128xf32>, i32 -> vector<16x128xf32>
    %856 = vector.extract_strided_slice %835 {offsets = [4, 0], sizes = [1, 128], strides = [1, 1]} : vector<7x128xf32> to vector<1x128xf32>
    %857 = vector.broadcast %856 : vector<1x128xf32> to vector<16x128xf32>
    %858 = arith.mulf %855, %857 : vector<16x128xf32>
    %859 = arith.addf %854, %858 : vector<16x128xf32>
    %c126_i32_239 = arith.constant 126 : i32
    %860 = tpu.dynamic_rotate %796 by %c126_i32_239 dim 1 : vector<16x128xf32>, i32 -> vector<16x128xf32>
    %861 = vector.extract_strided_slice %835 {offsets = [5, 0], sizes = [1, 128], strides = [1, 1]} : vector<7x128xf32> to vector<1x128xf32>
    %862 = vector.broadcast %861 : vector<1x128xf32> to vector<16x128xf32>
    %863 = arith.mulf %860, %862 : vector<16x128xf32>
    %864 = arith.addf %859, %863 : vector<16x128xf32>
    %c125_i32_240 = arith.constant 125 : i32
    %865 = tpu.dynamic_rotate %796 by %c125_i32_240 dim 1 : vector<16x128xf32>, i32 -> vector<16x128xf32>
    %866 = vector.extract_strided_slice %835 {offsets = [6, 0], sizes = [1, 128], strides = [1, 1]} : vector<7x128xf32> to vector<1x128xf32>
    %867 = vector.broadcast %866 : vector<1x128xf32> to vector<16x128xf32>
    %868 = arith.mulf %865, %867 : vector<16x128xf32>
    %869 = arith.addf %864, %868 : vector<16x128xf32>
    %c2_241 = arith.constant 2 : index
    %c5_242 = arith.constant 5 : index
    %c0_243 = arith.constant 0 : index
    %c0_244 = arith.constant 0 : index
    %870 = vector.load %arg2[%c2_241, %c5_242, %c0_243, %c0_244] : memref<4x9x7x128xf32, #tpu.memory_space<vmem>>, vector<1x1x7x128xf32>
    %871 = vector.shape_cast %870 : vector<1x1x7x128xf32> to vector<7x128xf32>
    %c115_i32_245 = arith.constant 115 : i32
    %872 = tpu.dynamic_rotate %796 by %c115_i32_245 dim 1 : vector<16x128xf32>, i32 -> vector<16x128xf32>
    %873 = vector.extract_strided_slice %871 {offsets = [0, 0], sizes = [1, 128], strides = [1, 1]} : vector<7x128xf32> to vector<1x128xf32>
    %874 = vector.broadcast %873 : vector<1x128xf32> to vector<16x128xf32>
    %875 = arith.mulf %872, %874 : vector<16x128xf32>
    %876 = arith.addf %869, %875 : vector<16x128xf32>
    %c114_i32_246 = arith.constant 114 : i32
    %877 = tpu.dynamic_rotate %796 by %c114_i32_246 dim 1 : vector<16x128xf32>, i32 -> vector<16x128xf32>
    %878 = vector.extract_strided_slice %871 {offsets = [1, 0], sizes = [1, 128], strides = [1, 1]} : vector<7x128xf32> to vector<1x128xf32>
    %879 = vector.broadcast %878 : vector<1x128xf32> to vector<16x128xf32>
    %880 = arith.mulf %877, %879 : vector<16x128xf32>
    %881 = arith.addf %876, %880 : vector<16x128xf32>
    %c113_i32_247 = arith.constant 113 : i32
    %882 = tpu.dynamic_rotate %796 by %c113_i32_247 dim 1 : vector<16x128xf32>, i32 -> vector<16x128xf32>
    %883 = vector.extract_strided_slice %871 {offsets = [2, 0], sizes = [1, 128], strides = [1, 1]} : vector<7x128xf32> to vector<1x128xf32>
    %884 = vector.broadcast %883 : vector<1x128xf32> to vector<16x128xf32>
    %885 = arith.mulf %882, %884 : vector<16x128xf32>
    %886 = arith.addf %881, %885 : vector<16x128xf32>
    %c112_i32_248 = arith.constant 112 : i32
    %887 = tpu.dynamic_rotate %796 by %c112_i32_248 dim 1 : vector<16x128xf32>, i32 -> vector<16x128xf32>
    %888 = vector.extract_strided_slice %871 {offsets = [3, 0], sizes = [1, 128], strides = [1, 1]} : vector<7x128xf32> to vector<1x128xf32>
    %889 = vector.broadcast %888 : vector<1x128xf32> to vector<16x128xf32>
    %890 = arith.mulf %887, %889 : vector<16x128xf32>
    %891 = arith.addf %886, %890 : vector<16x128xf32>
    %c111_i32_249 = arith.constant 111 : i32
    %892 = tpu.dynamic_rotate %796 by %c111_i32_249 dim 1 : vector<16x128xf32>, i32 -> vector<16x128xf32>
    %893 = vector.extract_strided_slice %871 {offsets = [4, 0], sizes = [1, 128], strides = [1, 1]} : vector<7x128xf32> to vector<1x128xf32>
    %894 = vector.broadcast %893 : vector<1x128xf32> to vector<16x128xf32>
    %895 = arith.mulf %892, %894 : vector<16x128xf32>
    %896 = arith.addf %891, %895 : vector<16x128xf32>
    %c110_i32_250 = arith.constant 110 : i32
    %897 = tpu.dynamic_rotate %796 by %c110_i32_250 dim 1 : vector<16x128xf32>, i32 -> vector<16x128xf32>
    %898 = vector.extract_strided_slice %871 {offsets = [5, 0], sizes = [1, 128], strides = [1, 1]} : vector<7x128xf32> to vector<1x128xf32>
    %899 = vector.broadcast %898 : vector<1x128xf32> to vector<16x128xf32>
    %900 = arith.mulf %897, %899 : vector<16x128xf32>
    %901 = arith.addf %896, %900 : vector<16x128xf32>
    %c109_i32_251 = arith.constant 109 : i32
    %902 = tpu.dynamic_rotate %796 by %c109_i32_251 dim 1 : vector<16x128xf32>, i32 -> vector<16x128xf32>
    %903 = vector.extract_strided_slice %871 {offsets = [6, 0], sizes = [1, 128], strides = [1, 1]} : vector<7x128xf32> to vector<1x128xf32>
    %904 = vector.broadcast %903 : vector<1x128xf32> to vector<16x128xf32>
    %905 = arith.mulf %902, %904 : vector<16x128xf32>
    %906 = arith.addf %901, %905 : vector<16x128xf32>
    %c12 = arith.constant 12 : index
    %c0_252 = arith.constant 0 : index
    %907 = vector.load %arg4[%c12, %c0_252] : memref<32x128xf32, #tpu.memory_space<vmem>>, vector<16x128xf32>
    %c2_253 = arith.constant 2 : index
    %c6_254 = arith.constant 6 : index
    %c0_255 = arith.constant 0 : index
    %c0_256 = arith.constant 0 : index
    %908 = vector.load %arg2[%c2_253, %c6_254, %c0_255, %c0_256] : memref<4x9x7x128xf32, #tpu.memory_space<vmem>>, vector<1x1x7x128xf32>
    %909 = vector.shape_cast %908 : vector<1x1x7x128xf32> to vector<7x128xf32>
    %c19_i32_257 = arith.constant 19 : i32
    %910 = tpu.dynamic_rotate %907 by %c19_i32_257 dim 1 : vector<16x128xf32>, i32 -> vector<16x128xf32>
    %911 = vector.extract_strided_slice %909 {offsets = [0, 0], sizes = [1, 128], strides = [1, 1]} : vector<7x128xf32> to vector<1x128xf32>
    %912 = vector.broadcast %911 : vector<1x128xf32> to vector<16x128xf32>
    %913 = arith.mulf %910, %912 : vector<16x128xf32>
    %914 = arith.addf %906, %913 : vector<16x128xf32>
    %c18_i32_258 = arith.constant 18 : i32
    %915 = tpu.dynamic_rotate %907 by %c18_i32_258 dim 1 : vector<16x128xf32>, i32 -> vector<16x128xf32>
    %916 = vector.extract_strided_slice %909 {offsets = [1, 0], sizes = [1, 128], strides = [1, 1]} : vector<7x128xf32> to vector<1x128xf32>
    %917 = vector.broadcast %916 : vector<1x128xf32> to vector<16x128xf32>
    %918 = arith.mulf %915, %917 : vector<16x128xf32>
    %919 = arith.addf %914, %918 : vector<16x128xf32>
    %c17_i32_259 = arith.constant 17 : i32
    %920 = tpu.dynamic_rotate %907 by %c17_i32_259 dim 1 : vector<16x128xf32>, i32 -> vector<16x128xf32>
    %921 = vector.extract_strided_slice %909 {offsets = [2, 0], sizes = [1, 128], strides = [1, 1]} : vector<7x128xf32> to vector<1x128xf32>
    %922 = vector.broadcast %921 : vector<1x128xf32> to vector<16x128xf32>
    %923 = arith.mulf %920, %922 : vector<16x128xf32>
    %924 = arith.addf %919, %923 : vector<16x128xf32>
    %c16_i32_260 = arith.constant 16 : i32
    %925 = tpu.dynamic_rotate %907 by %c16_i32_260 dim 1 : vector<16x128xf32>, i32 -> vector<16x128xf32>
    %926 = vector.extract_strided_slice %909 {offsets = [3, 0], sizes = [1, 128], strides = [1, 1]} : vector<7x128xf32> to vector<1x128xf32>
    %927 = vector.broadcast %926 : vector<1x128xf32> to vector<16x128xf32>
    %928 = arith.mulf %925, %927 : vector<16x128xf32>
    %929 = arith.addf %924, %928 : vector<16x128xf32>
    %c15_i32_261 = arith.constant 15 : i32
    %930 = tpu.dynamic_rotate %907 by %c15_i32_261 dim 1 : vector<16x128xf32>, i32 -> vector<16x128xf32>
    %931 = vector.extract_strided_slice %909 {offsets = [4, 0], sizes = [1, 128], strides = [1, 1]} : vector<7x128xf32> to vector<1x128xf32>
    %932 = vector.broadcast %931 : vector<1x128xf32> to vector<16x128xf32>
    %933 = arith.mulf %930, %932 : vector<16x128xf32>
    %934 = arith.addf %929, %933 : vector<16x128xf32>
    %c14_i32_262 = arith.constant 14 : i32
    %935 = tpu.dynamic_rotate %907 by %c14_i32_262 dim 1 : vector<16x128xf32>, i32 -> vector<16x128xf32>
    %936 = vector.extract_strided_slice %909 {offsets = [5, 0], sizes = [1, 128], strides = [1, 1]} : vector<7x128xf32> to vector<1x128xf32>
    %937 = vector.broadcast %936 : vector<1x128xf32> to vector<16x128xf32>
    %938 = arith.mulf %935, %937 : vector<16x128xf32>
    %939 = arith.addf %934, %938 : vector<16x128xf32>
    %c13_i32_263 = arith.constant 13 : i32
    %940 = tpu.dynamic_rotate %907 by %c13_i32_263 dim 1 : vector<16x128xf32>, i32 -> vector<16x128xf32>
    %941 = vector.extract_strided_slice %909 {offsets = [6, 0], sizes = [1, 128], strides = [1, 1]} : vector<7x128xf32> to vector<1x128xf32>
    %942 = vector.broadcast %941 : vector<1x128xf32> to vector<16x128xf32>
    %943 = arith.mulf %940, %942 : vector<16x128xf32>
    %944 = arith.addf %939, %943 : vector<16x128xf32>
    %c2_264 = arith.constant 2 : index
    %c7_265 = arith.constant 7 : index
    %c0_266 = arith.constant 0 : index
    %c0_267 = arith.constant 0 : index
    %945 = vector.load %arg2[%c2_264, %c7_265, %c0_266, %c0_267] : memref<4x9x7x128xf32, #tpu.memory_space<vmem>>, vector<1x1x7x128xf32>
    %946 = vector.shape_cast %945 : vector<1x1x7x128xf32> to vector<7x128xf32>
    %c3_i32_268 = arith.constant 3 : i32
    %947 = tpu.dynamic_rotate %907 by %c3_i32_268 dim 1 : vector<16x128xf32>, i32 -> vector<16x128xf32>
    %948 = vector.extract_strided_slice %946 {offsets = [0, 0], sizes = [1, 128], strides = [1, 1]} : vector<7x128xf32> to vector<1x128xf32>
    %949 = vector.broadcast %948 : vector<1x128xf32> to vector<16x128xf32>
    %950 = arith.mulf %947, %949 : vector<16x128xf32>
    %951 = arith.addf %944, %950 : vector<16x128xf32>
    %c2_i32_269 = arith.constant 2 : i32
    %952 = tpu.dynamic_rotate %907 by %c2_i32_269 dim 1 : vector<16x128xf32>, i32 -> vector<16x128xf32>
    %953 = vector.extract_strided_slice %946 {offsets = [1, 0], sizes = [1, 128], strides = [1, 1]} : vector<7x128xf32> to vector<1x128xf32>
    %954 = vector.broadcast %953 : vector<1x128xf32> to vector<16x128xf32>
    %955 = arith.mulf %952, %954 : vector<16x128xf32>
    %956 = arith.addf %951, %955 : vector<16x128xf32>
    %c1_i32_270 = arith.constant 1 : i32
    %957 = tpu.dynamic_rotate %907 by %c1_i32_270 dim 1 : vector<16x128xf32>, i32 -> vector<16x128xf32>
    %958 = vector.extract_strided_slice %946 {offsets = [2, 0], sizes = [1, 128], strides = [1, 1]} : vector<7x128xf32> to vector<1x128xf32>
    %959 = vector.broadcast %958 : vector<1x128xf32> to vector<16x128xf32>
    %960 = arith.mulf %957, %959 : vector<16x128xf32>
    %961 = arith.addf %956, %960 : vector<16x128xf32>
    %962 = vector.extract_strided_slice %946 {offsets = [3, 0], sizes = [1, 128], strides = [1, 1]} : vector<7x128xf32> to vector<1x128xf32>
    %963 = vector.broadcast %962 : vector<1x128xf32> to vector<16x128xf32>
    %964 = arith.mulf %907, %963 : vector<16x128xf32>
    %965 = arith.addf %961, %964 : vector<16x128xf32>
    %c127_i32_271 = arith.constant 127 : i32
    %966 = tpu.dynamic_rotate %907 by %c127_i32_271 dim 1 : vector<16x128xf32>, i32 -> vector<16x128xf32>
    %967 = vector.extract_strided_slice %946 {offsets = [4, 0], sizes = [1, 128], strides = [1, 1]} : vector<7x128xf32> to vector<1x128xf32>
    %968 = vector.broadcast %967 : vector<1x128xf32> to vector<16x128xf32>
    %969 = arith.mulf %966, %968 : vector<16x128xf32>
    %970 = arith.addf %965, %969 : vector<16x128xf32>
    %c126_i32_272 = arith.constant 126 : i32
    %971 = tpu.dynamic_rotate %907 by %c126_i32_272 dim 1 : vector<16x128xf32>, i32 -> vector<16x128xf32>
    %972 = vector.extract_strided_slice %946 {offsets = [5, 0], sizes = [1, 128], strides = [1, 1]} : vector<7x128xf32> to vector<1x128xf32>
    %973 = vector.broadcast %972 : vector<1x128xf32> to vector<16x128xf32>
    %974 = arith.mulf %971, %973 : vector<16x128xf32>
    %975 = arith.addf %970, %974 : vector<16x128xf32>
    %c125_i32_273 = arith.constant 125 : i32
    %976 = tpu.dynamic_rotate %907 by %c125_i32_273 dim 1 : vector<16x128xf32>, i32 -> vector<16x128xf32>
    %977 = vector.extract_strided_slice %946 {offsets = [6, 0], sizes = [1, 128], strides = [1, 1]} : vector<7x128xf32> to vector<1x128xf32>
    %978 = vector.broadcast %977 : vector<1x128xf32> to vector<16x128xf32>
    %979 = arith.mulf %976, %978 : vector<16x128xf32>
    %980 = arith.addf %975, %979 : vector<16x128xf32>
    %c2_274 = arith.constant 2 : index
    %c8_275 = arith.constant 8 : index
    %c0_276 = arith.constant 0 : index
    %c0_277 = arith.constant 0 : index
    %981 = vector.load %arg2[%c2_274, %c8_275, %c0_276, %c0_277] : memref<4x9x7x128xf32, #tpu.memory_space<vmem>>, vector<1x1x7x128xf32>
    %982 = vector.shape_cast %981 : vector<1x1x7x128xf32> to vector<7x128xf32>
    %c115_i32_278 = arith.constant 115 : i32
    %983 = tpu.dynamic_rotate %907 by %c115_i32_278 dim 1 : vector<16x128xf32>, i32 -> vector<16x128xf32>
    %984 = vector.extract_strided_slice %982 {offsets = [0, 0], sizes = [1, 128], strides = [1, 1]} : vector<7x128xf32> to vector<1x128xf32>
    %985 = vector.broadcast %984 : vector<1x128xf32> to vector<16x128xf32>
    %986 = arith.mulf %983, %985 : vector<16x128xf32>
    %987 = arith.addf %980, %986 : vector<16x128xf32>
    %c114_i32_279 = arith.constant 114 : i32
    %988 = tpu.dynamic_rotate %907 by %c114_i32_279 dim 1 : vector<16x128xf32>, i32 -> vector<16x128xf32>
    %989 = vector.extract_strided_slice %982 {offsets = [1, 0], sizes = [1, 128], strides = [1, 1]} : vector<7x128xf32> to vector<1x128xf32>
    %990 = vector.broadcast %989 : vector<1x128xf32> to vector<16x128xf32>
    %991 = arith.mulf %988, %990 : vector<16x128xf32>
    %992 = arith.addf %987, %991 : vector<16x128xf32>
    %c113_i32_280 = arith.constant 113 : i32
    %993 = tpu.dynamic_rotate %907 by %c113_i32_280 dim 1 : vector<16x128xf32>, i32 -> vector<16x128xf32>
    %994 = vector.extract_strided_slice %982 {offsets = [2, 0], sizes = [1, 128], strides = [1, 1]} : vector<7x128xf32> to vector<1x128xf32>
    %995 = vector.broadcast %994 : vector<1x128xf32> to vector<16x128xf32>
    %996 = arith.mulf %993, %995 : vector<16x128xf32>
    %997 = arith.addf %992, %996 : vector<16x128xf32>
    %c112_i32_281 = arith.constant 112 : i32
    %998 = tpu.dynamic_rotate %907 by %c112_i32_281 dim 1 : vector<16x128xf32>, i32 -> vector<16x128xf32>
    %999 = vector.extract_strided_slice %982 {offsets = [3, 0], sizes = [1, 128], strides = [1, 1]} : vector<7x128xf32> to vector<1x128xf32>
    %1000 = vector.broadcast %999 : vector<1x128xf32> to vector<16x128xf32>
    %1001 = arith.mulf %998, %1000 : vector<16x128xf32>
    %1002 = arith.addf %997, %1001 : vector<16x128xf32>
    %c111_i32_282 = arith.constant 111 : i32
    %1003 = tpu.dynamic_rotate %907 by %c111_i32_282 dim 1 : vector<16x128xf32>, i32 -> vector<16x128xf32>
    %1004 = vector.extract_strided_slice %982 {offsets = [4, 0], sizes = [1, 128], strides = [1, 1]} : vector<7x128xf32> to vector<1x128xf32>
    %1005 = vector.broadcast %1004 : vector<1x128xf32> to vector<16x128xf32>
    %1006 = arith.mulf %1003, %1005 : vector<16x128xf32>
    %1007 = arith.addf %1002, %1006 : vector<16x128xf32>
    %c110_i32_283 = arith.constant 110 : i32
    %1008 = tpu.dynamic_rotate %907 by %c110_i32_283 dim 1 : vector<16x128xf32>, i32 -> vector<16x128xf32>
    %1009 = vector.extract_strided_slice %982 {offsets = [5, 0], sizes = [1, 128], strides = [1, 1]} : vector<7x128xf32> to vector<1x128xf32>
    %1010 = vector.broadcast %1009 : vector<1x128xf32> to vector<16x128xf32>
    %1011 = arith.mulf %1008, %1010 : vector<16x128xf32>
    %1012 = arith.addf %1007, %1011 : vector<16x128xf32>
    %c109_i32_284 = arith.constant 109 : i32
    %1013 = tpu.dynamic_rotate %907 by %c109_i32_284 dim 1 : vector<16x128xf32>, i32 -> vector<16x128xf32>
    %1014 = vector.extract_strided_slice %982 {offsets = [6, 0], sizes = [1, 128], strides = [1, 1]} : vector<7x128xf32> to vector<1x128xf32>
    %1015 = vector.broadcast %1014 : vector<1x128xf32> to vector<16x128xf32>
    %1016 = arith.mulf %1013, %1015 : vector<16x128xf32>
    %1017 = arith.addf %1012, %1016 : vector<16x128xf32>
    %1018 = vector.extract_strided_slice %1017 {offsets = [0, 32], sizes = [16, 64], strides = [1, 1]} : vector<16x128xf32> to vector<16x64xf32>
    %c0_285 = arith.constant 0 : index
    %c0_286 = arith.constant 0 : index
    %1019 = vector.load %arg5[%c0_285, %c0_286] : memref<16x64xf32, #tpu.memory_space<vmem>>, vector<16x64xf32>
    %1020 = arith.addf %1019, %1018 : vector<16x64xf32>
    %c0_287 = arith.constant 0 : index
    %c0_288 = arith.constant 0 : index
    %1021 = vector.load %arg5[%c0_287, %c0_288] : memref<16x64xf32, #tpu.memory_space<vmem>>, vector<16x64xf32>
    tpu.vector_store %arg5[%c0_287, %c0_288], %1020 {strides = array<i32>} : memref<16x64xf32, #tpu.memory_space<vmem>>, vector<16x64xf32>,
    %c8_289 = arith.constant 8 : index
    %c32_290 = arith.constant 32 : index
    %1022 = vector.load %arg4[%c8_289, %c32_290] : memref<32x128xf32, #tpu.memory_space<vmem>>, vector<16x64xf32>
    tpu.vector_store %arg4[%c8_289, %c32_290], %1018 {strides = array<i32>} : memref<32x128xf32, #tpu.memory_space<vmem>>, vector<16x64xf32>,
    %c0_291 = arith.constant 0 : index
    %c0_292 = arith.constant 0 : index
    %1023 = vector.load %arg4[%c0_291, %c0_292] : memref<32x128xf32, #tpu.memory_space<vmem>>, vector<16x128xf32>
    %c3_293 = arith.constant 3 : index
    %c0_294 = arith.constant 0 : index
    %c0_295 = arith.constant 0 : index
    %c0_296 = arith.constant 0 : index
    %1024 = vector.load %arg2[%c3_293, %c0_294, %c0_295, %c0_296] : memref<4x9x7x128xf32, #tpu.memory_space<vmem>>, vector<1x1x7x128xf32>
    %1025 = vector.shape_cast %1024 : vector<1x1x7x128xf32> to vector<7x128xf32>
    %c35_i32 = arith.constant 35 : i32
    %1026 = tpu.dynamic_rotate %1023 by %c35_i32 dim 1 : vector<16x128xf32>, i32 -> vector<16x128xf32>
    %1027 = vector.extract_strided_slice %1025 {offsets = [0, 0], sizes = [1, 128], strides = [1, 1]} : vector<7x128xf32> to vector<1x128xf32>
    %1028 = vector.broadcast %1027 : vector<1x128xf32> to vector<16x128xf32>
    %1029 = arith.mulf %1026, %1028 : vector<16x128xf32>
    %c34_i32 = arith.constant 34 : i32
    %1030 = tpu.dynamic_rotate %1023 by %c34_i32 dim 1 : vector<16x128xf32>, i32 -> vector<16x128xf32>
    %1031 = vector.extract_strided_slice %1025 {offsets = [1, 0], sizes = [1, 128], strides = [1, 1]} : vector<7x128xf32> to vector<1x128xf32>
    %1032 = vector.broadcast %1031 : vector<1x128xf32> to vector<16x128xf32>
    %1033 = arith.mulf %1030, %1032 : vector<16x128xf32>
    %1034 = arith.addf %1029, %1033 : vector<16x128xf32>
    %c33_i32 = arith.constant 33 : i32
    %1035 = tpu.dynamic_rotate %1023 by %c33_i32 dim 1 : vector<16x128xf32>, i32 -> vector<16x128xf32>
    %1036 = vector.extract_strided_slice %1025 {offsets = [2, 0], sizes = [1, 128], strides = [1, 1]} : vector<7x128xf32> to vector<1x128xf32>
    %1037 = vector.broadcast %1036 : vector<1x128xf32> to vector<16x128xf32>
    %1038 = arith.mulf %1035, %1037 : vector<16x128xf32>
    %1039 = arith.addf %1034, %1038 : vector<16x128xf32>
    %c32_i32 = arith.constant 32 : i32
    %1040 = tpu.dynamic_rotate %1023 by %c32_i32 dim 1 : vector<16x128xf32>, i32 -> vector<16x128xf32>
    %1041 = vector.extract_strided_slice %1025 {offsets = [3, 0], sizes = [1, 128], strides = [1, 1]} : vector<7x128xf32> to vector<1x128xf32>
    %1042 = vector.broadcast %1041 : vector<1x128xf32> to vector<16x128xf32>
    %1043 = arith.mulf %1040, %1042 : vector<16x128xf32>
    %1044 = arith.addf %1039, %1043 : vector<16x128xf32>
    %c31_i32 = arith.constant 31 : i32
    %1045 = tpu.dynamic_rotate %1023 by %c31_i32 dim 1 : vector<16x128xf32>, i32 -> vector<16x128xf32>
    %1046 = vector.extract_strided_slice %1025 {offsets = [4, 0], sizes = [1, 128], strides = [1, 1]} : vector<7x128xf32> to vector<1x128xf32>
    %1047 = vector.broadcast %1046 : vector<1x128xf32> to vector<16x128xf32>
    %1048 = arith.mulf %1045, %1047 : vector<16x128xf32>
    %1049 = arith.addf %1044, %1048 : vector<16x128xf32>
    %c30_i32 = arith.constant 30 : i32
    %1050 = tpu.dynamic_rotate %1023 by %c30_i32 dim 1 : vector<16x128xf32>, i32 -> vector<16x128xf32>
    %1051 = vector.extract_strided_slice %1025 {offsets = [5, 0], sizes = [1, 128], strides = [1, 1]} : vector<7x128xf32> to vector<1x128xf32>
    %1052 = vector.broadcast %1051 : vector<1x128xf32> to vector<16x128xf32>
    %1053 = arith.mulf %1050, %1052 : vector<16x128xf32>
    %1054 = arith.addf %1049, %1053 : vector<16x128xf32>
    %c29_i32 = arith.constant 29 : i32
    %1055 = tpu.dynamic_rotate %1023 by %c29_i32 dim 1 : vector<16x128xf32>, i32 -> vector<16x128xf32>
    %1056 = vector.extract_strided_slice %1025 {offsets = [6, 0], sizes = [1, 128], strides = [1, 1]} : vector<7x128xf32> to vector<1x128xf32>
    %1057 = vector.broadcast %1056 : vector<1x128xf32> to vector<16x128xf32>
    %1058 = arith.mulf %1055, %1057 : vector<16x128xf32>
    %1059 = arith.addf %1054, %1058 : vector<16x128xf32>
    %c3_297 = arith.constant 3 : index
    %c1_298 = arith.constant 1 : index
    %c0_299 = arith.constant 0 : index
    %c0_300 = arith.constant 0 : index
    %1060 = vector.load %arg2[%c3_297, %c1_298, %c0_299, %c0_300] : memref<4x9x7x128xf32, #tpu.memory_space<vmem>>, vector<1x1x7x128xf32>
    %1061 = vector.shape_cast %1060 : vector<1x1x7x128xf32> to vector<7x128xf32>
    %c3_i32_301 = arith.constant 3 : i32
    %1062 = tpu.dynamic_rotate %1023 by %c3_i32_301 dim 1 : vector<16x128xf32>, i32 -> vector<16x128xf32>
    %1063 = vector.extract_strided_slice %1061 {offsets = [0, 0], sizes = [1, 128], strides = [1, 1]} : vector<7x128xf32> to vector<1x128xf32>
    %1064 = vector.broadcast %1063 : vector<1x128xf32> to vector<16x128xf32>
    %1065 = arith.mulf %1062, %1064 : vector<16x128xf32>
    %1066 = arith.addf %1059, %1065 : vector<16x128xf32>
    %c2_i32_302 = arith.constant 2 : i32
    %1067 = tpu.dynamic_rotate %1023 by %c2_i32_302 dim 1 : vector<16x128xf32>, i32 -> vector<16x128xf32>
    %1068 = vector.extract_strided_slice %1061 {offsets = [1, 0], sizes = [1, 128], strides = [1, 1]} : vector<7x128xf32> to vector<1x128xf32>
    %1069 = vector.broadcast %1068 : vector<1x128xf32> to vector<16x128xf32>
    %1070 = arith.mulf %1067, %1069 : vector<16x128xf32>
    %1071 = arith.addf %1066, %1070 : vector<16x128xf32>
    %c1_i32_303 = arith.constant 1 : i32
    %1072 = tpu.dynamic_rotate %1023 by %c1_i32_303 dim 1 : vector<16x128xf32>, i32 -> vector<16x128xf32>
    %1073 = vector.extract_strided_slice %1061 {offsets = [2, 0], sizes = [1, 128], strides = [1, 1]} : vector<7x128xf32> to vector<1x128xf32>
    %1074 = vector.broadcast %1073 : vector<1x128xf32> to vector<16x128xf32>
    %1075 = arith.mulf %1072, %1074 : vector<16x128xf32>
    %1076 = arith.addf %1071, %1075 : vector<16x128xf32>
    %1077 = vector.extract_strided_slice %1061 {offsets = [3, 0], sizes = [1, 128], strides = [1, 1]} : vector<7x128xf32> to vector<1x128xf32>
    %1078 = vector.broadcast %1077 : vector<1x128xf32> to vector<16x128xf32>
    %1079 = arith.mulf %1023, %1078 : vector<16x128xf32>
    %1080 = arith.addf %1076, %1079 : vector<16x128xf32>
    %c127_i32_304 = arith.constant 127 : i32
    %1081 = tpu.dynamic_rotate %1023 by %c127_i32_304 dim 1 : vector<16x128xf32>, i32 -> vector<16x128xf32>
    %1082 = vector.extract_strided_slice %1061 {offsets = [4, 0], sizes = [1, 128], strides = [1, 1]} : vector<7x128xf32> to vector<1x128xf32>
    %1083 = vector.broadcast %1082 : vector<1x128xf32> to vector<16x128xf32>
    %1084 = arith.mulf %1081, %1083 : vector<16x128xf32>
    %1085 = arith.addf %1080, %1084 : vector<16x128xf32>
    %c126_i32_305 = arith.constant 126 : i32
    %1086 = tpu.dynamic_rotate %1023 by %c126_i32_305 dim 1 : vector<16x128xf32>, i32 -> vector<16x128xf32>
    %1087 = vector.extract_strided_slice %1061 {offsets = [5, 0], sizes = [1, 128], strides = [1, 1]} : vector<7x128xf32> to vector<1x128xf32>
    %1088 = vector.broadcast %1087 : vector<1x128xf32> to vector<16x128xf32>
    %1089 = arith.mulf %1086, %1088 : vector<16x128xf32>
    %1090 = arith.addf %1085, %1089 : vector<16x128xf32>
    %c125_i32_306 = arith.constant 125 : i32
    %1091 = tpu.dynamic_rotate %1023 by %c125_i32_306 dim 1 : vector<16x128xf32>, i32 -> vector<16x128xf32>
    %1092 = vector.extract_strided_slice %1061 {offsets = [6, 0], sizes = [1, 128], strides = [1, 1]} : vector<7x128xf32> to vector<1x128xf32>
    %1093 = vector.broadcast %1092 : vector<1x128xf32> to vector<16x128xf32>
    %1094 = arith.mulf %1091, %1093 : vector<16x128xf32>
    %1095 = arith.addf %1090, %1094 : vector<16x128xf32>
    %c3_307 = arith.constant 3 : index
    %c2_308 = arith.constant 2 : index
    %c0_309 = arith.constant 0 : index
    %c0_310 = arith.constant 0 : index
    %1096 = vector.load %arg2[%c3_307, %c2_308, %c0_309, %c0_310] : memref<4x9x7x128xf32, #tpu.memory_space<vmem>>, vector<1x1x7x128xf32>
    %1097 = vector.shape_cast %1096 : vector<1x1x7x128xf32> to vector<7x128xf32>
    %c99_i32 = arith.constant 99 : i32
    %1098 = tpu.dynamic_rotate %1023 by %c99_i32 dim 1 : vector<16x128xf32>, i32 -> vector<16x128xf32>
    %1099 = vector.extract_strided_slice %1097 {offsets = [0, 0], sizes = [1, 128], strides = [1, 1]} : vector<7x128xf32> to vector<1x128xf32>
    %1100 = vector.broadcast %1099 : vector<1x128xf32> to vector<16x128xf32>
    %1101 = arith.mulf %1098, %1100 : vector<16x128xf32>
    %1102 = arith.addf %1095, %1101 : vector<16x128xf32>
    %c98_i32 = arith.constant 98 : i32
    %1103 = tpu.dynamic_rotate %1023 by %c98_i32 dim 1 : vector<16x128xf32>, i32 -> vector<16x128xf32>
    %1104 = vector.extract_strided_slice %1097 {offsets = [1, 0], sizes = [1, 128], strides = [1, 1]} : vector<7x128xf32> to vector<1x128xf32>
    %1105 = vector.broadcast %1104 : vector<1x128xf32> to vector<16x128xf32>
    %1106 = arith.mulf %1103, %1105 : vector<16x128xf32>
    %1107 = arith.addf %1102, %1106 : vector<16x128xf32>
    %c97_i32 = arith.constant 97 : i32
    %1108 = tpu.dynamic_rotate %1023 by %c97_i32 dim 1 : vector<16x128xf32>, i32 -> vector<16x128xf32>
    %1109 = vector.extract_strided_slice %1097 {offsets = [2, 0], sizes = [1, 128], strides = [1, 1]} : vector<7x128xf32> to vector<1x128xf32>
    %1110 = vector.broadcast %1109 : vector<1x128xf32> to vector<16x128xf32>
    %1111 = arith.mulf %1108, %1110 : vector<16x128xf32>
    %1112 = arith.addf %1107, %1111 : vector<16x128xf32>
    %c96_i32 = arith.constant 96 : i32
    %1113 = tpu.dynamic_rotate %1023 by %c96_i32 dim 1 : vector<16x128xf32>, i32 -> vector<16x128xf32>
    %1114 = vector.extract_strided_slice %1097 {offsets = [3, 0], sizes = [1, 128], strides = [1, 1]} : vector<7x128xf32> to vector<1x128xf32>
    %1115 = vector.broadcast %1114 : vector<1x128xf32> to vector<16x128xf32>
    %1116 = arith.mulf %1113, %1115 : vector<16x128xf32>
    %1117 = arith.addf %1112, %1116 : vector<16x128xf32>
    %c95_i32 = arith.constant 95 : i32
    %1118 = tpu.dynamic_rotate %1023 by %c95_i32 dim 1 : vector<16x128xf32>, i32 -> vector<16x128xf32>
    %1119 = vector.extract_strided_slice %1097 {offsets = [4, 0], sizes = [1, 128], strides = [1, 1]} : vector<7x128xf32> to vector<1x128xf32>
    %1120 = vector.broadcast %1119 : vector<1x128xf32> to vector<16x128xf32>
    %1121 = arith.mulf %1118, %1120 : vector<16x128xf32>
    %1122 = arith.addf %1117, %1121 : vector<16x128xf32>
    %c94_i32 = arith.constant 94 : i32
    %1123 = tpu.dynamic_rotate %1023 by %c94_i32 dim 1 : vector<16x128xf32>, i32 -> vector<16x128xf32>
    %1124 = vector.extract_strided_slice %1097 {offsets = [5, 0], sizes = [1, 128], strides = [1, 1]} : vector<7x128xf32> to vector<1x128xf32>
    %1125 = vector.broadcast %1124 : vector<1x128xf32> to vector<16x128xf32>
    %1126 = arith.mulf %1123, %1125 : vector<16x128xf32>
    %1127 = arith.addf %1122, %1126 : vector<16x128xf32>
    %c93_i32 = arith.constant 93 : i32
    %1128 = tpu.dynamic_rotate %1023 by %c93_i32 dim 1 : vector<16x128xf32>, i32 -> vector<16x128xf32>
    %1129 = vector.extract_strided_slice %1097 {offsets = [6, 0], sizes = [1, 128], strides = [1, 1]} : vector<7x128xf32> to vector<1x128xf32>
    %1130 = vector.broadcast %1129 : vector<1x128xf32> to vector<16x128xf32>
    %1131 = arith.mulf %1128, %1130 : vector<16x128xf32>
    %1132 = arith.addf %1127, %1131 : vector<16x128xf32>
    %c8_311 = arith.constant 8 : index
    %c0_312 = arith.constant 0 : index
    %1133 = vector.load %arg4[%c8_311, %c0_312] : memref<32x128xf32, #tpu.memory_space<vmem>>, vector<16x128xf32>
    %c3_313 = arith.constant 3 : index
    %c3_314 = arith.constant 3 : index
    %c0_315 = arith.constant 0 : index
    %c0_316 = arith.constant 0 : index
    %1134 = vector.load %arg2[%c3_313, %c3_314, %c0_315, %c0_316] : memref<4x9x7x128xf32, #tpu.memory_space<vmem>>, vector<1x1x7x128xf32>
    %1135 = vector.shape_cast %1134 : vector<1x1x7x128xf32> to vector<7x128xf32>
    %c35_i32_317 = arith.constant 35 : i32
    %1136 = tpu.dynamic_rotate %1133 by %c35_i32_317 dim 1 : vector<16x128xf32>, i32 -> vector<16x128xf32>
    %1137 = vector.extract_strided_slice %1135 {offsets = [0, 0], sizes = [1, 128], strides = [1, 1]} : vector<7x128xf32> to vector<1x128xf32>
    %1138 = vector.broadcast %1137 : vector<1x128xf32> to vector<16x128xf32>
    %1139 = arith.mulf %1136, %1138 : vector<16x128xf32>
    %1140 = arith.addf %1132, %1139 : vector<16x128xf32>
    %c34_i32_318 = arith.constant 34 : i32
    %1141 = tpu.dynamic_rotate %1133 by %c34_i32_318 dim 1 : vector<16x128xf32>, i32 -> vector<16x128xf32>
    %1142 = vector.extract_strided_slice %1135 {offsets = [1, 0], sizes = [1, 128], strides = [1, 1]} : vector<7x128xf32> to vector<1x128xf32>
    %1143 = vector.broadcast %1142 : vector<1x128xf32> to vector<16x128xf32>
    %1144 = arith.mulf %1141, %1143 : vector<16x128xf32>
    %1145 = arith.addf %1140, %1144 : vector<16x128xf32>
    %c33_i32_319 = arith.constant 33 : i32
    %1146 = tpu.dynamic_rotate %1133 by %c33_i32_319 dim 1 : vector<16x128xf32>, i32 -> vector<16x128xf32>
    %1147 = vector.extract_strided_slice %1135 {offsets = [2, 0], sizes = [1, 128], strides = [1, 1]} : vector<7x128xf32> to vector<1x128xf32>
    %1148 = vector.broadcast %1147 : vector<1x128xf32> to vector<16x128xf32>
    %1149 = arith.mulf %1146, %1148 : vector<16x128xf32>
    %1150 = arith.addf %1145, %1149 : vector<16x128xf32>
    %c32_i32_320 = arith.constant 32 : i32
    %1151 = tpu.dynamic_rotate %1133 by %c32_i32_320 dim 1 : vector<16x128xf32>, i32 -> vector<16x128xf32>
    %1152 = vector.extract_strided_slice %1135 {offsets = [3, 0], sizes = [1, 128], strides = [1, 1]} : vector<7x128xf32> to vector<1x128xf32>
    %1153 = vector.broadcast %1152 : vector<1x128xf32> to vector<16x128xf32>
    %1154 = arith.mulf %1151, %1153 : vector<16x128xf32>
    %1155 = arith.addf %1150, %1154 : vector<16x128xf32>
    %c31_i32_321 = arith.constant 31 : i32
    %1156 = tpu.dynamic_rotate %1133 by %c31_i32_321 dim 1 : vector<16x128xf32>, i32 -> vector<16x128xf32>
    %1157 = vector.extract_strided_slice %1135 {offsets = [4, 0], sizes = [1, 128], strides = [1, 1]} : vector<7x128xf32> to vector<1x128xf32>
    %1158 = vector.broadcast %1157 : vector<1x128xf32> to vector<16x128xf32>
    %1159 = arith.mulf %1156, %1158 : vector<16x128xf32>
    %1160 = arith.addf %1155, %1159 : vector<16x128xf32>
    %c30_i32_322 = arith.constant 30 : i32
    %1161 = tpu.dynamic_rotate %1133 by %c30_i32_322 dim 1 : vector<16x128xf32>, i32 -> vector<16x128xf32>
    %1162 = vector.extract_strided_slice %1135 {offsets = [5, 0], sizes = [1, 128], strides = [1, 1]} : vector<7x128xf32> to vector<1x128xf32>
    %1163 = vector.broadcast %1162 : vector<1x128xf32> to vector<16x128xf32>
    %1164 = arith.mulf %1161, %1163 : vector<16x128xf32>
    %1165 = arith.addf %1160, %1164 : vector<16x128xf32>
    %c29_i32_323 = arith.constant 29 : i32
    %1166 = tpu.dynamic_rotate %1133 by %c29_i32_323 dim 1 : vector<16x128xf32>, i32 -> vector<16x128xf32>
    %1167 = vector.extract_strided_slice %1135 {offsets = [6, 0], sizes = [1, 128], strides = [1, 1]} : vector<7x128xf32> to vector<1x128xf32>
    %1168 = vector.broadcast %1167 : vector<1x128xf32> to vector<16x128xf32>
    %1169 = arith.mulf %1166, %1168 : vector<16x128xf32>
    %1170 = arith.addf %1165, %1169 : vector<16x128xf32>
    %c3_324 = arith.constant 3 : index
    %c4_325 = arith.constant 4 : index
    %c0_326 = arith.constant 0 : index
    %c0_327 = arith.constant 0 : index
    %1171 = vector.load %arg2[%c3_324, %c4_325, %c0_326, %c0_327] : memref<4x9x7x128xf32, #tpu.memory_space<vmem>>, vector<1x1x7x128xf32>
    %1172 = vector.shape_cast %1171 : vector<1x1x7x128xf32> to vector<7x128xf32>
    %c3_i32_328 = arith.constant 3 : i32
    %1173 = tpu.dynamic_rotate %1133 by %c3_i32_328 dim 1 : vector<16x128xf32>, i32 -> vector<16x128xf32>
    %1174 = vector.extract_strided_slice %1172 {offsets = [0, 0], sizes = [1, 128], strides = [1, 1]} : vector<7x128xf32> to vector<1x128xf32>
    %1175 = vector.broadcast %1174 : vector<1x128xf32> to vector<16x128xf32>
    %1176 = arith.mulf %1173, %1175 : vector<16x128xf32>
    %1177 = arith.addf %1170, %1176 : vector<16x128xf32>
    %c2_i32_329 = arith.constant 2 : i32
    %1178 = tpu.dynamic_rotate %1133 by %c2_i32_329 dim 1 : vector<16x128xf32>, i32 -> vector<16x128xf32>
    %1179 = vector.extract_strided_slice %1172 {offsets = [1, 0], sizes = [1, 128], strides = [1, 1]} : vector<7x128xf32> to vector<1x128xf32>
    %1180 = vector.broadcast %1179 : vector<1x128xf32> to vector<16x128xf32>
    %1181 = arith.mulf %1178, %1180 : vector<16x128xf32>
    %1182 = arith.addf %1177, %1181 : vector<16x128xf32>
    %c1_i32_330 = arith.constant 1 : i32
    %1183 = tpu.dynamic_rotate %1133 by %c1_i32_330 dim 1 : vector<16x128xf32>, i32 -> vector<16x128xf32>
    %1184 = vector.extract_strided_slice %1172 {offsets = [2, 0], sizes = [1, 128], strides = [1, 1]} : vector<7x128xf32> to vector<1x128xf32>
    %1185 = vector.broadcast %1184 : vector<1x128xf32> to vector<16x128xf32>
    %1186 = arith.mulf %1183, %1185 : vector<16x128xf32>
    %1187 = arith.addf %1182, %1186 : vector<16x128xf32>
    %1188 = vector.extract_strided_slice %1172 {offsets = [3, 0], sizes = [1, 128], strides = [1, 1]} : vector<7x128xf32> to vector<1x128xf32>
    %1189 = vector.broadcast %1188 : vector<1x128xf32> to vector<16x128xf32>
    %1190 = arith.mulf %1133, %1189 : vector<16x128xf32>
    %1191 = arith.addf %1187, %1190 : vector<16x128xf32>
    %c127_i32_331 = arith.constant 127 : i32
    %1192 = tpu.dynamic_rotate %1133 by %c127_i32_331 dim 1 : vector<16x128xf32>, i32 -> vector<16x128xf32>
    %1193 = vector.extract_strided_slice %1172 {offsets = [4, 0], sizes = [1, 128], strides = [1, 1]} : vector<7x128xf32> to vector<1x128xf32>
    %1194 = vector.broadcast %1193 : vector<1x128xf32> to vector<16x128xf32>
    %1195 = arith.mulf %1192, %1194 : vector<16x128xf32>
    %1196 = arith.addf %1191, %1195 : vector<16x128xf32>
    %c126_i32_332 = arith.constant 126 : i32
    %1197 = tpu.dynamic_rotate %1133 by %c126_i32_332 dim 1 : vector<16x128xf32>, i32 -> vector<16x128xf32>
    %1198 = vector.extract_strided_slice %1172 {offsets = [5, 0], sizes = [1, 128], strides = [1, 1]} : vector<7x128xf32> to vector<1x128xf32>
    %1199 = vector.broadcast %1198 : vector<1x128xf32> to vector<16x128xf32>
    %1200 = arith.mulf %1197, %1199 : vector<16x128xf32>
    %1201 = arith.addf %1196, %1200 : vector<16x128xf32>
    %c125_i32_333 = arith.constant 125 : i32
    %1202 = tpu.dynamic_rotate %1133 by %c125_i32_333 dim 1 : vector<16x128xf32>, i32 -> vector<16x128xf32>
    %1203 = vector.extract_strided_slice %1172 {offsets = [6, 0], sizes = [1, 128], strides = [1, 1]} : vector<7x128xf32> to vector<1x128xf32>
    %1204 = vector.broadcast %1203 : vector<1x128xf32> to vector<16x128xf32>
    %1205 = arith.mulf %1202, %1204 : vector<16x128xf32>
    %1206 = arith.addf %1201, %1205 : vector<16x128xf32>
    %c3_334 = arith.constant 3 : index
    %c5_335 = arith.constant 5 : index
    %c0_336 = arith.constant 0 : index
    %c0_337 = arith.constant 0 : index
    %1207 = vector.load %arg2[%c3_334, %c5_335, %c0_336, %c0_337] : memref<4x9x7x128xf32, #tpu.memory_space<vmem>>, vector<1x1x7x128xf32>
    %1208 = vector.shape_cast %1207 : vector<1x1x7x128xf32> to vector<7x128xf32>
    %c99_i32_338 = arith.constant 99 : i32
    %1209 = tpu.dynamic_rotate %1133 by %c99_i32_338 dim 1 : vector<16x128xf32>, i32 -> vector<16x128xf32>
    %1210 = vector.extract_strided_slice %1208 {offsets = [0, 0], sizes = [1, 128], strides = [1, 1]} : vector<7x128xf32> to vector<1x128xf32>
    %1211 = vector.broadcast %1210 : vector<1x128xf32> to vector<16x128xf32>
    %1212 = arith.mulf %1209, %1211 : vector<16x128xf32>
    %1213 = arith.addf %1206, %1212 : vector<16x128xf32>
    %c98_i32_339 = arith.constant 98 : i32
    %1214 = tpu.dynamic_rotate %1133 by %c98_i32_339 dim 1 : vector<16x128xf32>, i32 -> vector<16x128xf32>
    %1215 = vector.extract_strided_slice %1208 {offsets = [1, 0], sizes = [1, 128], strides = [1, 1]} : vector<7x128xf32> to vector<1x128xf32>
    %1216 = vector.broadcast %1215 : vector<1x128xf32> to vector<16x128xf32>
    %1217 = arith.mulf %1214, %1216 : vector<16x128xf32>
    %1218 = arith.addf %1213, %1217 : vector<16x128xf32>
    %c97_i32_340 = arith.constant 97 : i32
    %1219 = tpu.dynamic_rotate %1133 by %c97_i32_340 dim 1 : vector<16x128xf32>, i32 -> vector<16x128xf32>
    %1220 = vector.extract_strided_slice %1208 {offsets = [2, 0], sizes = [1, 128], strides = [1, 1]} : vector<7x128xf32> to vector<1x128xf32>
    %1221 = vector.broadcast %1220 : vector<1x128xf32> to vector<16x128xf32>
    %1222 = arith.mulf %1219, %1221 : vector<16x128xf32>
    %1223 = arith.addf %1218, %1222 : vector<16x128xf32>
    %c96_i32_341 = arith.constant 96 : i32
    %1224 = tpu.dynamic_rotate %1133 by %c96_i32_341 dim 1 : vector<16x128xf32>, i32 -> vector<16x128xf32>
    %1225 = vector.extract_strided_slice %1208 {offsets = [3, 0], sizes = [1, 128], strides = [1, 1]} : vector<7x128xf32> to vector<1x128xf32>
    %1226 = vector.broadcast %1225 : vector<1x128xf32> to vector<16x128xf32>
    %1227 = arith.mulf %1224, %1226 : vector<16x128xf32>
    %1228 = arith.addf %1223, %1227 : vector<16x128xf32>
    %c95_i32_342 = arith.constant 95 : i32
    %1229 = tpu.dynamic_rotate %1133 by %c95_i32_342 dim 1 : vector<16x128xf32>, i32 -> vector<16x128xf32>
    %1230 = vector.extract_strided_slice %1208 {offsets = [4, 0], sizes = [1, 128], strides = [1, 1]} : vector<7x128xf32> to vector<1x128xf32>
    %1231 = vector.broadcast %1230 : vector<1x128xf32> to vector<16x128xf32>
    %1232 = arith.mulf %1229, %1231 : vector<16x128xf32>
    %1233 = arith.addf %1228, %1232 : vector<16x128xf32>
    %c94_i32_343 = arith.constant 94 : i32
    %1234 = tpu.dynamic_rotate %1133 by %c94_i32_343 dim 1 : vector<16x128xf32>, i32 -> vector<16x128xf32>
    %1235 = vector.extract_strided_slice %1208 {offsets = [5, 0], sizes = [1, 128], strides = [1, 1]} : vector<7x128xf32> to vector<1x128xf32>
    %1236 = vector.broadcast %1235 : vector<1x128xf32> to vector<16x128xf32>
    %1237 = arith.mulf %1234, %1236 : vector<16x128xf32>
    %1238 = arith.addf %1233, %1237 : vector<16x128xf32>
    %c93_i32_344 = arith.constant 93 : i32
    %1239 = tpu.dynamic_rotate %1133 by %c93_i32_344 dim 1 : vector<16x128xf32>, i32 -> vector<16x128xf32>
    %1240 = vector.extract_strided_slice %1208 {offsets = [6, 0], sizes = [1, 128], strides = [1, 1]} : vector<7x128xf32> to vector<1x128xf32>
    %1241 = vector.broadcast %1240 : vector<1x128xf32> to vector<16x128xf32>
    %1242 = arith.mulf %1239, %1241 : vector<16x128xf32>
    %1243 = arith.addf %1238, %1242 : vector<16x128xf32>
    %c16 = arith.constant 16 : index
    %c0_345 = arith.constant 0 : index
    %1244 = vector.load %arg4[%c16, %c0_345] : memref<32x128xf32, #tpu.memory_space<vmem>>, vector<16x128xf32>
    %c3_346 = arith.constant 3 : index
    %c6_347 = arith.constant 6 : index
    %c0_348 = arith.constant 0 : index
    %c0_349 = arith.constant 0 : index
    %1245 = vector.load %arg2[%c3_346, %c6_347, %c0_348, %c0_349] : memref<4x9x7x128xf32, #tpu.memory_space<vmem>>, vector<1x1x7x128xf32>
    %1246 = vector.shape_cast %1245 : vector<1x1x7x128xf32> to vector<7x128xf32>
    %c35_i32_350 = arith.constant 35 : i32
    %1247 = tpu.dynamic_rotate %1244 by %c35_i32_350 dim 1 : vector<16x128xf32>, i32 -> vector<16x128xf32>
    %1248 = vector.extract_strided_slice %1246 {offsets = [0, 0], sizes = [1, 128], strides = [1, 1]} : vector<7x128xf32> to vector<1x128xf32>
    %1249 = vector.broadcast %1248 : vector<1x128xf32> to vector<16x128xf32>
    %1250 = arith.mulf %1247, %1249 : vector<16x128xf32>
    %1251 = arith.addf %1243, %1250 : vector<16x128xf32>
    %c34_i32_351 = arith.constant 34 : i32
    %1252 = tpu.dynamic_rotate %1244 by %c34_i32_351 dim 1 : vector<16x128xf32>, i32 -> vector<16x128xf32>
    %1253 = vector.extract_strided_slice %1246 {offsets = [1, 0], sizes = [1, 128], strides = [1, 1]} : vector<7x128xf32> to vector<1x128xf32>
    %1254 = vector.broadcast %1253 : vector<1x128xf32> to vector<16x128xf32>
    %1255 = arith.mulf %1252, %1254 : vector<16x128xf32>
    %1256 = arith.addf %1251, %1255 : vector<16x128xf32>
    %c33_i32_352 = arith.constant 33 : i32
    %1257 = tpu.dynamic_rotate %1244 by %c33_i32_352 dim 1 : vector<16x128xf32>, i32 -> vector<16x128xf32>
    %1258 = vector.extract_strided_slice %1246 {offsets = [2, 0], sizes = [1, 128], strides = [1, 1]} : vector<7x128xf32> to vector<1x128xf32>
    %1259 = vector.broadcast %1258 : vector<1x128xf32> to vector<16x128xf32>
    %1260 = arith.mulf %1257, %1259 : vector<16x128xf32>
    %1261 = arith.addf %1256, %1260 : vector<16x128xf32>
    %c32_i32_353 = arith.constant 32 : i32
    %1262 = tpu.dynamic_rotate %1244 by %c32_i32_353 dim 1 : vector<16x128xf32>, i32 -> vector<16x128xf32>
    %1263 = vector.extract_strided_slice %1246 {offsets = [3, 0], sizes = [1, 128], strides = [1, 1]} : vector<7x128xf32> to vector<1x128xf32>
    %1264 = vector.broadcast %1263 : vector<1x128xf32> to vector<16x128xf32>
    %1265 = arith.mulf %1262, %1264 : vector<16x128xf32>
    %1266 = arith.addf %1261, %1265 : vector<16x128xf32>
    %c31_i32_354 = arith.constant 31 : i32
    %1267 = tpu.dynamic_rotate %1244 by %c31_i32_354 dim 1 : vector<16x128xf32>, i32 -> vector<16x128xf32>
    %1268 = vector.extract_strided_slice %1246 {offsets = [4, 0], sizes = [1, 128], strides = [1, 1]} : vector<7x128xf32> to vector<1x128xf32>
    %1269 = vector.broadcast %1268 : vector<1x128xf32> to vector<16x128xf32>
    %1270 = arith.mulf %1267, %1269 : vector<16x128xf32>
    %1271 = arith.addf %1266, %1270 : vector<16x128xf32>
    %c30_i32_355 = arith.constant 30 : i32
    %1272 = tpu.dynamic_rotate %1244 by %c30_i32_355 dim 1 : vector<16x128xf32>, i32 -> vector<16x128xf32>
    %1273 = vector.extract_strided_slice %1246 {offsets = [5, 0], sizes = [1, 128], strides = [1, 1]} : vector<7x128xf32> to vector<1x128xf32>
    %1274 = vector.broadcast %1273 : vector<1x128xf32> to vector<16x128xf32>
    %1275 = arith.mulf %1272, %1274 : vector<16x128xf32>
    %1276 = arith.addf %1271, %1275 : vector<16x128xf32>
    %c29_i32_356 = arith.constant 29 : i32
    %1277 = tpu.dynamic_rotate %1244 by %c29_i32_356 dim 1 : vector<16x128xf32>, i32 -> vector<16x128xf32>
    %1278 = vector.extract_strided_slice %1246 {offsets = [6, 0], sizes = [1, 128], strides = [1, 1]} : vector<7x128xf32> to vector<1x128xf32>
    %1279 = vector.broadcast %1278 : vector<1x128xf32> to vector<16x128xf32>
    %1280 = arith.mulf %1277, %1279 : vector<16x128xf32>
    %1281 = arith.addf %1276, %1280 : vector<16x128xf32>
    %c3_357 = arith.constant 3 : index
    %c7_358 = arith.constant 7 : index
    %c0_359 = arith.constant 0 : index
    %c0_360 = arith.constant 0 : index
    %1282 = vector.load %arg2[%c3_357, %c7_358, %c0_359, %c0_360] : memref<4x9x7x128xf32, #tpu.memory_space<vmem>>, vector<1x1x7x128xf32>
    %1283 = vector.shape_cast %1282 : vector<1x1x7x128xf32> to vector<7x128xf32>
    %c3_i32_361 = arith.constant 3 : i32
    %1284 = tpu.dynamic_rotate %1244 by %c3_i32_361 dim 1 : vector<16x128xf32>, i32 -> vector<16x128xf32>
    %1285 = vector.extract_strided_slice %1283 {offsets = [0, 0], sizes = [1, 128], strides = [1, 1]} : vector<7x128xf32> to vector<1x128xf32>
    %1286 = vector.broadcast %1285 : vector<1x128xf32> to vector<16x128xf32>
    %1287 = arith.mulf %1284, %1286 : vector<16x128xf32>
    %1288 = arith.addf %1281, %1287 : vector<16x128xf32>
    %c2_i32_362 = arith.constant 2 : i32
    %1289 = tpu.dynamic_rotate %1244 by %c2_i32_362 dim 1 : vector<16x128xf32>, i32 -> vector<16x128xf32>
    %1290 = vector.extract_strided_slice %1283 {offsets = [1, 0], sizes = [1, 128], strides = [1, 1]} : vector<7x128xf32> to vector<1x128xf32>
    %1291 = vector.broadcast %1290 : vector<1x128xf32> to vector<16x128xf32>
    %1292 = arith.mulf %1289, %1291 : vector<16x128xf32>
    %1293 = arith.addf %1288, %1292 : vector<16x128xf32>
    %c1_i32_363 = arith.constant 1 : i32
    %1294 = tpu.dynamic_rotate %1244 by %c1_i32_363 dim 1 : vector<16x128xf32>, i32 -> vector<16x128xf32>
    %1295 = vector.extract_strided_slice %1283 {offsets = [2, 0], sizes = [1, 128], strides = [1, 1]} : vector<7x128xf32> to vector<1x128xf32>
    %1296 = vector.broadcast %1295 : vector<1x128xf32> to vector<16x128xf32>
    %1297 = arith.mulf %1294, %1296 : vector<16x128xf32>
    %1298 = arith.addf %1293, %1297 : vector<16x128xf32>
    %1299 = vector.extract_strided_slice %1283 {offsets = [3, 0], sizes = [1, 128], strides = [1, 1]} : vector<7x128xf32> to vector<1x128xf32>
    %1300 = vector.broadcast %1299 : vector<1x128xf32> to vector<16x128xf32>
    %1301 = arith.mulf %1244, %1300 : vector<16x128xf32>
    %1302 = arith.addf %1298, %1301 : vector<16x128xf32>
    %c127_i32_364 = arith.constant 127 : i32
    %1303 = tpu.dynamic_rotate %1244 by %c127_i32_364 dim 1 : vector<16x128xf32>, i32 -> vector<16x128xf32>
    %1304 = vector.extract_strided_slice %1283 {offsets = [4, 0], sizes = [1, 128], strides = [1, 1]} : vector<7x128xf32> to vector<1x128xf32>
    %1305 = vector.broadcast %1304 : vector<1x128xf32> to vector<16x128xf32>
    %1306 = arith.mulf %1303, %1305 : vector<16x128xf32>
    %1307 = arith.addf %1302, %1306 : vector<16x128xf32>
    %c126_i32_365 = arith.constant 126 : i32
    %1308 = tpu.dynamic_rotate %1244 by %c126_i32_365 dim 1 : vector<16x128xf32>, i32 -> vector<16x128xf32>
    %1309 = vector.extract_strided_slice %1283 {offsets = [5, 0], sizes = [1, 128], strides = [1, 1]} : vector<7x128xf32> to vector<1x128xf32>
    %1310 = vector.broadcast %1309 : vector<1x128xf32> to vector<16x128xf32>
    %1311 = arith.mulf %1308, %1310 : vector<16x128xf32>
    %1312 = arith.addf %1307, %1311 : vector<16x128xf32>
    %c125_i32_366 = arith.constant 125 : i32
    %1313 = tpu.dynamic_rotate %1244 by %c125_i32_366 dim 1 : vector<16x128xf32>, i32 -> vector<16x128xf32>
    %1314 = vector.extract_strided_slice %1283 {offsets = [6, 0], sizes = [1, 128], strides = [1, 1]} : vector<7x128xf32> to vector<1x128xf32>
    %1315 = vector.broadcast %1314 : vector<1x128xf32> to vector<16x128xf32>
    %1316 = arith.mulf %1313, %1315 : vector<16x128xf32>
    %1317 = arith.addf %1312, %1316 : vector<16x128xf32>
    %c3_367 = arith.constant 3 : index
    %c8_368 = arith.constant 8 : index
    %c0_369 = arith.constant 0 : index
    %c0_370 = arith.constant 0 : index
    %1318 = vector.load %arg2[%c3_367, %c8_368, %c0_369, %c0_370] : memref<4x9x7x128xf32, #tpu.memory_space<vmem>>, vector<1x1x7x128xf32>
    %1319 = vector.shape_cast %1318 : vector<1x1x7x128xf32> to vector<7x128xf32>
    %c99_i32_371 = arith.constant 99 : i32
    %1320 = tpu.dynamic_rotate %1244 by %c99_i32_371 dim 1 : vector<16x128xf32>, i32 -> vector<16x128xf32>
    %1321 = vector.extract_strided_slice %1319 {offsets = [0, 0], sizes = [1, 128], strides = [1, 1]} : vector<7x128xf32> to vector<1x128xf32>
    %1322 = vector.broadcast %1321 : vector<1x128xf32> to vector<16x128xf32>
    %1323 = arith.mulf %1320, %1322 : vector<16x128xf32>
    %1324 = arith.addf %1317, %1323 : vector<16x128xf32>
    %c98_i32_372 = arith.constant 98 : i32
    %1325 = tpu.dynamic_rotate %1244 by %c98_i32_372 dim 1 : vector<16x128xf32>, i32 -> vector<16x128xf32>
    %1326 = vector.extract_strided_slice %1319 {offsets = [1, 0], sizes = [1, 128], strides = [1, 1]} : vector<7x128xf32> to vector<1x128xf32>
    %1327 = vector.broadcast %1326 : vector<1x128xf32> to vector<16x128xf32>
    %1328 = arith.mulf %1325, %1327 : vector<16x128xf32>
    %1329 = arith.addf %1324, %1328 : vector<16x128xf32>
    %c97_i32_373 = arith.constant 97 : i32
    %1330 = tpu.dynamic_rotate %1244 by %c97_i32_373 dim 1 : vector<16x128xf32>, i32 -> vector<16x128xf32>
    %1331 = vector.extract_strided_slice %1319 {offsets = [2, 0], sizes = [1, 128], strides = [1, 1]} : vector<7x128xf32> to vector<1x128xf32>
    %1332 = vector.broadcast %1331 : vector<1x128xf32> to vector<16x128xf32>
    %1333 = arith.mulf %1330, %1332 : vector<16x128xf32>
    %1334 = arith.addf %1329, %1333 : vector<16x128xf32>
    %c96_i32_374 = arith.constant 96 : i32
    %1335 = tpu.dynamic_rotate %1244 by %c96_i32_374 dim 1 : vector<16x128xf32>, i32 -> vector<16x128xf32>
    %1336 = vector.extract_strided_slice %1319 {offsets = [3, 0], sizes = [1, 128], strides = [1, 1]} : vector<7x128xf32> to vector<1x128xf32>
    %1337 = vector.broadcast %1336 : vector<1x128xf32> to vector<16x128xf32>
    %1338 = arith.mulf %1335, %1337 : vector<16x128xf32>
    %1339 = arith.addf %1334, %1338 : vector<16x128xf32>
    %c95_i32_375 = arith.constant 95 : i32
    %1340 = tpu.dynamic_rotate %1244 by %c95_i32_375 dim 1 : vector<16x128xf32>, i32 -> vector<16x128xf32>
    %1341 = vector.extract_strided_slice %1319 {offsets = [4, 0], sizes = [1, 128], strides = [1, 1]} : vector<7x128xf32> to vector<1x128xf32>
    %1342 = vector.broadcast %1341 : vector<1x128xf32> to vector<16x128xf32>
    %1343 = arith.mulf %1340, %1342 : vector<16x128xf32>
    %1344 = arith.addf %1339, %1343 : vector<16x128xf32>
    %c94_i32_376 = arith.constant 94 : i32
    %1345 = tpu.dynamic_rotate %1244 by %c94_i32_376 dim 1 : vector<16x128xf32>, i32 -> vector<16x128xf32>
    %1346 = vector.extract_strided_slice %1319 {offsets = [5, 0], sizes = [1, 128], strides = [1, 1]} : vector<7x128xf32> to vector<1x128xf32>
    %1347 = vector.broadcast %1346 : vector<1x128xf32> to vector<16x128xf32>
    %1348 = arith.mulf %1345, %1347 : vector<16x128xf32>
    %1349 = arith.addf %1344, %1348 : vector<16x128xf32>
    %c93_i32_377 = arith.constant 93 : i32
    %1350 = tpu.dynamic_rotate %1244 by %c93_i32_377 dim 1 : vector<16x128xf32>, i32 -> vector<16x128xf32>
    %1351 = vector.extract_strided_slice %1319 {offsets = [6, 0], sizes = [1, 128], strides = [1, 1]} : vector<7x128xf32> to vector<1x128xf32>
    %1352 = vector.broadcast %1351 : vector<1x128xf32> to vector<16x128xf32>
    %1353 = arith.mulf %1350, %1352 : vector<16x128xf32>
    %1354 = arith.addf %1349, %1353 : vector<16x128xf32>
    %1355 = vector.extract_strided_slice %1354 {offsets = [0, 32], sizes = [16, 64], strides = [1, 1]} : vector<16x128xf32> to vector<16x64xf32>
    %c0_378 = arith.constant 0 : index
    %c0_379 = arith.constant 0 : index
    %1356 = vector.load %arg5[%c0_378, %c0_379] : memref<16x64xf32, #tpu.memory_space<vmem>>, vector<16x64xf32>
    %1357 = arith.addf %1356, %1355 : vector<16x64xf32>
    %c0_380 = arith.constant 0 : index
    %c0_381 = arith.constant 0 : index
    %1358 = vector.load %arg5[%c0_380, %c0_381] : memref<16x64xf32, #tpu.memory_space<vmem>>, vector<16x64xf32>
    tpu.vector_store %arg5[%c0_380, %c0_381], %1357 {strides = array<i32>} : memref<16x64xf32, #tpu.memory_space<vmem>>, vector<16x64xf32>,
    %c0_382 = arith.constant 0 : index
    %c0_383 = arith.constant 0 : index
    %1359 = vector.load %arg5[%c0_382, %c0_383] : memref<16x64xf32, #tpu.memory_space<vmem>>, vector<16x64xf32>
    %c0_384 = arith.constant 0 : index
    %c0_385 = arith.constant 0 : index
    %c0_386 = arith.constant 0 : index
    %1360 = vector.load %arg3[%c0_384, %c0_385, %c0_386] : memref<1x16x64xf32, #tpu.memory_space<vmem>>, vector<1x16x64xf32>
    %1361 = vector.shape_cast %1360 : vector<1x16x64xf32> to vector<16x64xf32>
    %1362 = vector.shape_cast %1359 : vector<16x64xf32> to vector<1x16x64xf32>
    tpu.vector_store %arg3[%c0_384, %c0_385, %c0_386], %1362 {strides = array<i32>} : memref<1x16x64xf32, #tpu.memory_space<vmem>>, vector<1x16x64xf32>,
    return
  }
  func.func @transform_0(%arg0: i32) -> (i32, i32, i32) {
    %c0_i32 = arith.constant 0 : i32
    %c0_i32_0 = arith.constant 0 : i32
    %c0_i32_1 = arith.constant 0 : i32
    return %arg0, %c0_i32, %c0_i32_0 : i32, i32, i32
  }
  func.func @transform_1(%arg0: i32) -> (i32, i32, i32, i32) {
    %c0_i32 = arith.constant 0 : i32
    %c0_i32_0 = arith.constant 0 : i32
    %c0_i32_1 = arith.constant 0 : i32
    %c0_i32_2 = arith.constant 0 : i32
    %c0_i32_3 = arith.constant 0 : i32
    return %c0_i32, %c0_i32_0, %c0_i32_1, %c0_i32_2 : i32, i32, i32, i32
  }
  func.func @transform_2(%arg0: i32) -> (i32, i32, i32) {
    %c0_i32 = arith.constant 0 : i32
    %c0_i32_0 = arith.constant 0 : i32
    %c0_i32_1 = arith.constant 0 : i32
    return %arg0, %c0_i32, %c0_i32_0 : i32, i32, i32
  }
}

</mosaic_0001>

<llo_original>
// kernel: tpu_custom_call.1
$region0: #{tpu_custom_call.1}
  #allocation0 [shape = 'u32[]', space=smem, size = 0x4, offset = 0x4, fixed_abs, tag = 'smem constant byte address 0x4 - core index']
  #allocation1 [shape = 'u32[144,128]{1,0:T(1,128)}', space=vmem, size = 0x12000, scoped, tag = 'internal scratch']
  #allocation2 [shape = 'f32[32,128]{1,0:T(8,128)}', space=vmem, size = 0x4000, scoped, tag = 'scratch operand']
  #allocation3 [shape = 'f32[16,64]{1,0:T(8,128)}', space=vmem, size = 0x2000, scoped, tag = 'scratch operand']
  %s0 = inlined_call_operand.vmem [shape: f32[2,16,64], index: 0, kind: input, shape index: {}]
  %s1 = inlined_call_operand.vmem [shape: f32[4,9,7,128], index: 1, kind: input, shape index: {}]
  %s2 = inlined_call_operand.hbm [shape: f32[2,16,64], index: 2, kind: output, shape index: {}]
  %s3 = sld [smem:[#allocation0]]
  $region41: #{tpu_custom_call.1} parent=0
    _
  %s5 = ssub.s32 1, %s3
  %s6 = scalar_select 0, %s5, %s3
  $region1: #{tpu_custom_call.1} parent=0
    #allocation4 [shape = 'u8[16384]{0}', space=vmem, size = 0x4000, scoped, tag = 'output window, operand 0']
    #allocation5 [shape = 's32[2]{0}', space=sflag, size = 0x8, scoped, tag = 'scoped memory for tpu_custom_call.1']
    %7 = vsyncpa [#allocation5], 0
    %s8 = scalar_lea.sflag [#allocation5], 1
    %9 = vsyncpa %s8, 0
    loop: start=0, step=1, limit=4
    $region2: #{tpu_custom_call.1} parent=1 // loop_pre_header
      _
    $region3: #{tpu_custom_call.1} parent=1 // loop_header
      %s11 = sphi 0, %s15
      %p12 = scmp.ge.s32.totalorder %s11, 4
      %s21 = sphi 0, %s23
      %s24 = sphi 0, %s21
      %s25 = sphi 0, %s24
      %s41 = sphi 0, %s25
      %s45 = sphi 0, %s45
      %s47 = sphi 0, %s45
      %s48 = sphi 0, %s47
      %s62 = sphi 0, %s48
      %s68 = sphi 0, %s70
      %s71 = sphi 0, %s68
      %s72 = sphi 0, %s71
      %s88 = sphi 0, %s72
    $region4: #{tpu_custom_call.1} parent=1 // loop_header_branch
      %14 = sbr.rel (%p12) target = $region8
    $region5: #{tpu_custom_call.1} parent=1 // loop_body
      %s16 = ssub.s32 %s11, 1
      %s17 = ssub.s32 %s11, 2
      %s18 = sadd.s32 %s11, 1
      %s19 = ssub.s32 %s11, %s18
      %p20 = scmp.eq.s32.totalorder %s19, 0
      %s22 = sadd.s32 %s21, 1
      %s23 = scalar_select %p20, %s21, %s22
      %p26 = pneg %p20
      %p27 = scmp.eq.s32.totalorder %s11, 1
      %p28 = por %p26, %p27
      %p29 = scmp.ne.s32.totalorder %s21, %s24
      %p30 = scmp.eq.s32.totalorder %s11, 0
      %p31 = por %p29, %p30
      %p32 = scmp.ne.s32.totalorder %s21, %s24
      %p33 = scmp.eq.s32.totalorder %s16, 1
      %p34 = por %p32, %p33
      %p35 = scmp.ne.s32.totalorder %s24, %s25
      %p36 = scmp.eq.s32.totalorder %s16, 0
      %p37 = por %p35, %p36
      %p38 = scmp.ne.s32.totalorder %s24, %s25
      %p39 = scmp.eq.s32.totalorder %s17, 1
      %p40 = por %p38, %p39
      %p42 = scmp.ne.s32.totalorder %s25, %s41
      %p43 = scmp.eq.s32.totalorder %s17, 0
      %p44 = por %p42, %p43
      %s46 = sadd.s32 %s45, 1
      %p49 = scmp.eq.s32.totalorder %s11, 1
      %p50 = scmp.ne.s32.totalorder %s45, %s47
      %p51 = scmp.eq.s32.totalorder %s11, 0
      %p52 = por %p50, %p51
      %p53 = scmp.ne.s32.totalorder %s45, %s47
      %p54 = scmp.eq.s32.totalorder %s16, 1
      %p55 = por %p53, %p54
      %p56 = scmp.ne.s32.totalorder %s47, %s48
      %p57 = scmp.eq.s32.totalorder %s16, 0
      %p58 = por %p56, %p57
      %p59 = scmp.ne.s32.totalorder %s47, %s48
      %p60 = scmp.eq.s32.totalorder %s17, 1
      %p61 = por %p59, %p60
      %p63 = scmp.ne.s32.totalorder %s48, %s62
      %p64 = scmp.eq.s32.totalorder %s17, 0
      %p65 = por %p63, %p64
      %s66 = ssub.s32 %s11, %s18
      %p67 = scmp.eq.s32.totalorder %s66, 0
      %s69 = sadd.s32 %s68, 1
      %s70 = scalar_select %p67, %s68, %s69
      %p73 = pneg %p67
      %p74 = scmp.eq.s32.totalorder %s11, 1
      %p75 = por %p73, %p74
      %p76 = scmp.ne.s32.totalorder %s68, %s71
      %p77 = scmp.eq.s32.totalorder %s11, 0
      %p78 = por %p76, %p77
      %p79 = scmp.ne.s32.totalorder %s68, %s71
      %p80 = scmp.eq.s32.totalorder %s16, 1
      %p81 = por %p79, %p80
      %p82 = scmp.ne.s32.totalorder %s71, %s72
      %p83 = scmp.eq.s32.totalorder %s16, 0
      %p84 = por %p82, %p83
      %p85 = scmp.ne.s32.totalorder %s71, %s72
      %p86 = scmp.eq.s32.totalorder %s17, 1
      %p87 = por %p85, %p86
      %p89 = scmp.ne.s32.totalorder %s72, %s88
      %p90 = scmp.eq.s32.totalorder %s17, 0
      %p91 = por %p89, %p90
      %p92 = scmp.le.s32.totalorder 1, %s11
      %p93 = scmp.lt.s32.totalorder %s11, 3
      %p94 = pnand %p92, %p93
      %p95 = pneg %p94
      // Predicated region
      $region9: #{tpu_custom_call.1} parent=5 // pred_check
        _
      $region10: #{tpu_custom_call.1} parent=5 // pred_check_branch
        %97 = sbr.rel (%p94) target = $region12
      $region11: #{tpu_custom_call.1} parent=5 // pred_region
        %s98 = ssub.s32 %s11, 1
        // Predicated region
        $region13: #{tpu_custom_call.1} parent=11 // pred_check
          %p99 = pneg %p58
        $region14: #{tpu_custom_call.1} parent=11 // pred_check_branch
          %101 = sbr.rel (%p99) target = $region16
        $region15: #{tpu_custom_call.1} parent=11 // pred_region
          _
        $region16: #{tpu_custom_call.1} parent=11 // pred_fallthru
          _
      $region12: #{tpu_custom_call.1} parent=5 // pred_fallthru
        _
      %p102 = scmp.lt.s32.totalorder %s11, 2
      // Predicated region
      $region17: #{tpu_custom_call.1} parent=5 // pred_check
        %p103 = pneg %p102
      $region18: #{tpu_custom_call.1} parent=5 // pred_check_branch
        %105 = sbr.rel (%p103) target = $region20
      $region19: #{tpu_custom_call.1} parent=5 // pred_region
        // Predicated region
        $region21: #{tpu_custom_call.1} parent=19 // pred_check
          %p106 = pneg %p31
        $region22: #{tpu_custom_call.1} parent=19 // pred_check_branch
          %108 = sbr.rel (%p106) target = $region24
        $region23: #{tpu_custom_call.1} parent=19 // pred_region
          %p109 = scmp.lt.s32.totalorder %s11, 1
          %s110 = scalar_select %p109, %s11, 1
          %s111 = smul.addr %s110, 2
          %s112 = smul.addr %s111, 8
          %s113 = scalar_lea.vmem %s0, %s112
        $region24: #{tpu_custom_call.1} parent=19 // pred_fallthru
          _
      $region20: #{tpu_custom_call.1} parent=5 // pred_fallthru
        _
      %p114 = scmp.le.s32.totalorder 1, %s11
      %p115 = scmp.lt.s32.totalorder %s11, 3
      %p116 = pnand %p114, %p115
      %p117 = pneg %p116
      // Predicated region
      $region25: #{tpu_custom_call.1} parent=5 // pred_check
        _
      $region26: #{tpu_custom_call.1} parent=5 // pred_check_branch
        %119 = sbr.rel (%p116) target = $region28
      $region27: #{tpu_custom_call.1} parent=5 // pred_region
        %s120 = ssub.s32 %s11, 1
        %p121 = scmp.lt.s32.totalorder %s16, 1
        %s122 = scalar_select %p121, %s16, 1
        %s123 = smul.addr %s122, 2
        %s124 = smul.addr %s123, 8
        %s125 = scalar_lea.vmem %s0, %s124
        %p126 = pneg %p37
        %p127 = pneg %p34
        %p128 = pneg %p58
        %p129 = pneg %p55
        %p130 = pneg %p84
        %p131 = pneg %p81
        %s132 = sand.u32 %s71, 1
        %s133 = scalar_lea.sflag [#allocation5], %s132
        %s134 = sand.u32 %s71, 1
        %s135 = smul.addr %s134, 16
        %s136 = scalar_lea.vmem [#allocation4], %s135
        %p137 = scmp.lt.s32.totalorder %s16, 1
        %s138 = scalar_select %p137, %s16, 1
        %s139 = smul.addr %s138, 2
        %s140 = smul.addr %s139, 8
        %s141 = scalar_lea.vmem %s0, %s140
        %142 = vst [vmem:[#allocation2] sm:$0xff] 0.0
        %143 = vst [vmem:[#allocation2 + $0x18] sm:$0xff] 0.0
        %vm144 = vcmask 261120
        %145 = vst.msk [vmem:[#allocation2 + $0x8] sm:$0xff] %vm144, 0.0
        %146 = vst.msk [vmem:[#allocation2 + $0x10] sm:$0xff] %vm144, 0.0
        %vm147 = vcmask 1048320
        %148 = vst.msk [vmem:[#allocation2 + $0x8] sm:$0xff] %vm147, 0.0
        %149 = vst.msk [vmem:[#allocation2 + $0x10] sm:$0xff] %vm147, 0.0
        %v150 = vld [vmem:[%s141] sm:$0xff]
        %v151 = vld [vmem:[%s141 + $0x8] sm:$0xff]
        %vm152 = vcmask 523264
        %153 = vst.msk [vmem:[#allocation3] sm:$0xff] %vm152, %v150
        %154 = vst.msk [vmem:[#allocation3 + $0x8] sm:$0xff] %vm152, %v151
        %157 = vrot.lane.b32.xlu0 %v150, 32
        %v158 = vpop.permute.xlu0 %157
        %159 = vrot.lane.b32.xlu0 %v151, 32
        %v160 = vpop.permute.xlu0 %159
        %vm163 = vcmask 785664
        %164 = vst.msk [vmem:[#allocation2 + $0x8] sm:$0xff] %vm163, %v158
        %165 = vst.msk [vmem:[#allocation2 + $0x10] sm:$0xff] %vm163, %v160
        %v166 = vld [vmem:[#allocation2 + $0x7] sm:$0xff]
        %v167 = vld [vmem:[#allocation2 + $0xf] sm:$0xff]
        %v168 = vld [vmem:[%s1] sm:$0x7f]
        %169 = vrot.lane.b32.xlu0 %v166, 7
        %v170 = vpop.permute.xlu0 %169
        %171 = vrot.lane.b32.xlu0 %v167, 7
        %v172 = vpop.permute.xlu0 %171
        %v173 = vlaneseq
        %v174 = vshrl.u32 %v173, 7
        %v175 = vsub.s32 0, %v174
        %v176 = vrot.slane %v168, %v175
        %v177 = vmul.f32 %v170, %v176
        %v178 = vmul.f32 %v172, %v176
        %179 = vrot.lane.b32.xlu0 %v166, 6
        %v180 = vpop.permute.xlu0 %179
        %181 = vrot.lane.b32.xlu0 %v167, 6
        %v182 = vpop.permute.xlu0 %181
        %v183 = vlaneseq
        %v184 = vshrl.u32 %v183, 7
        %v185 = vsub.s32 1, %v184
        %v186 = vrot.slane %v168, %v185
        %v187 = vmul.f32 %v180, %v186
        %v188 = vmul.f32 %v182, %v186
        %v189 = vadd.f32 %v177, %v187
        %v190 = vadd.f32 %v178, %v188
        %191 = vrot.lane.b32.xlu0 %v166, 5
        %v192 = vpop.permute.xlu0 %191
        %193 = vrot.lane.b32.xlu0 %v167, 5
        %v194 = vpop.permute.xlu0 %193
        %v195 = vlaneseq
        %v196 = vshrl.u32 %v195, 7
        %v197 = vsub.s32 2, %v196
        %v198 = vrot.slane %v168, %v197
        %v199 = vmul.f32 %v192, %v198
        %v200 = vmul.f32 %v194, %v198
        %v201 = vadd.f32 %v189, %v199
        %v202 = vadd.f32 %v190, %v200
        %203 = vrot.lane.b32.xlu0 %v166, 4
        %v204 = vpop.permute.xlu0 %203
        %205 = vrot.lane.b32.xlu0 %v167, 4
        %v206 = vpop.permute.xlu0 %205
        %v207 = vlaneseq
        %v208 = vshrl.u32 %v207, 7
        %v209 = vsub.s32 3, %v208
        %v210 = vrot.slane %v168, %v209
        %v211 = vmul.f32 %v204, %v210
        %v212 = vmul.f32 %v206, %v210
        %v213 = vadd.f32 %v201, %v211
        %v214 = vadd.f32 %v202, %v212
        %215 = vrot.lane.b32.xlu0 %v166, 3
        %v216 = vpop.permute.xlu0 %215
        %217 = vrot.lane.b32.xlu0 %v167, 3
        %v218 = vpop.permute.xlu0 %217
        %v219 = vlaneseq
        %v220 = vshrl.u32 %v219, 7
        %v221 = vsub.s32 4, %v220
        %v222 = vrot.slane %v168, %v221
        %v223 = vmul.f32 %v216, %v222
        %v224 = vmul.f32 %v218, %v222
        %v225 = vadd.f32 %v213, %v223
        %v226 = vadd.f32 %v214, %v224
        %227 = vrot.lane.b32.xlu0 %v166, 2
        %v228 = vpop.permute.xlu0 %227
        %229 = vrot.lane.b32.xlu0 %v167, 2
        %v230 = vpop.permute.xlu0 %229
        %v231 = vlaneseq
        %v232 = vshrl.u32 %v231, 7
        %v233 = vsub.s32 5, %v232
        %v234 = vrot.slane %v168, %v233
        %v235 = vmul.f32 %v228, %v234
        %v236 = vmul.f32 %v230, %v234
        %v237 = vadd.f32 %v225, %v235
        %v238 = vadd.f32 %v226, %v236
        %239 = vrot.lane.b32.xlu0 %v166, 1
        %v240 = vpop.permute.xlu0 %239
        %241 = vrot.lane.b32.xlu0 %v167, 1
        %v242 = vpop.permute.xlu0 %241
        %v243 = vlaneseq
        %v244 = vshrl.u32 %v243, 7
        %v245 = vsub.s32 6, %v244
        %v246 = vrot.slane %v168, %v245
        %v247 = vmul.f32 %v240, %v246
        %v248 = vmul.f32 %v242, %v246
        %v249 = vadd.f32 %v237, %v247
        %v250 = vadd.f32 %v238, %v248
        %s251 = scalar_lea.vmem %s1, 8
        %v252 = vld [vmem:[%s251] sm:$0x7f]
        %v253 = vlaneseq
        %v254 = vshrl.u32 %v253, 7
        %v255 = vsub.s32 0, %v254
        %v256 = vrot.slane %v252, %v255
        %v257 = vmul.f32 %v216, %v256
        %v258 = vmul.f32 %v218, %v256
        %v259 = vadd.f32 %v249, %v257
        %v260 = vadd.f32 %v250, %v258
        %v261 = vlaneseq
        %v262 = vshrl.u32 %v261, 7
        %v263 = vsub.s32 1, %v262
        %v264 = vrot.slane %v252, %v263
        %v265 = vmul.f32 %v228, %v264
        %v266 = vmul.f32 %v230, %v264
        %v267 = vadd.f32 %v259, %v265
        %v268 = vadd.f32 %v260, %v266
        %v269 = vlaneseq
        %v270 = vshrl.u32 %v269, 7
        %v271 = vsub.s32 2, %v270
        %v272 = vrot.slane %v252, %v271
        %v273 = vmul.f32 %v240, %v272
        %v274 = vmul.f32 %v242, %v272
        %v275 = vadd.f32 %v267, %v273
        %v276 = vadd.f32 %v268, %v274
        %v277 = vlaneseq
        %v278 = vshrl.u32 %v277, 7
        %v279 = vsub.s32 3, %v278
        %v280 = vrot.slane %v252, %v279
        %v281 = vmul.f32 %v166, %v280
        %v282 = vmul.f32 %v167, %v280
        %v283 = vadd.f32 %v275, %v281
        %v284 = vadd.f32 %v276, %v282
        %285 = vrot.lane.b32.xlu0 %v166, 127
        %v286 = vpop.permute.xlu0 %285
        %287 = vrot.lane.b32.xlu0 %v167, 127
        %v288 = vpop.permute.xlu0 %287
        %v289 = vlaneseq
        %v290 = vshrl.u32 %v289, 7
        %v291 = vsub.s32 4, %v290
        %v292 = vrot.slane %v252, %v291
        %v293 = vmul.f32 %v286, %v292
        %v294 = vmul.f32 %v288, %v292
        %v295 = vadd.f32 %v283, %v293
        %v296 = vadd.f32 %v284, %v294
        %297 = vrot.lane.b32.xlu0 %v166, 126
        %v298 = vpop.permute.xlu0 %297
        %299 = vrot.lane.b32.xlu0 %v167, 126
        %v300 = vpop.permute.xlu0 %299
        %v301 = vlaneseq
        %v302 = vshrl.u32 %v301, 7
        %v303 = vsub.s32 5, %v302
        %v304 = vrot.slane %v252, %v303
        %v305 = vmul.f32 %v298, %v304
        %v306 = vmul.f32 %v300, %v304
        %v307 = vadd.f32 %v295, %v305
        %v308 = vadd.f32 %v296, %v306
        %309 = vrot.lane.b32.xlu0 %v166, 125
        %v310 = vpop.permute.xlu0 %309
        %311 = vrot.lane.b32.xlu0 %v167, 125
        %v312 = vpop.permute.xlu0 %311
        %v313 = vlaneseq
        %v314 = vshrl.u32 %v313, 7
        %v315 = vsub.s32 6, %v314
        %v316 = vrot.slane %v252, %v315
        %v317 = vmul.f32 %v310, %v316
        %v318 = vmul.f32 %v312, %v316
        %v319 = vadd.f32 %v307, %v317
        %v320 = vadd.f32 %v308, %v318
        %s321 = scalar_lea.vmem %s1, 16
        %v322 = vld [vmem:[%s321] sm:$0x7f]
        %v323 = vlaneseq
        %v324 = vshrl.u32 %v323, 7
        %v325 = vsub.s32 0, %v324
        %v326 = vrot.slane %v322, %v325
        %v327 = vmul.f32 %v286, %v326
        %v328 = vmul.f32 %v288, %v326
        %v329 = vadd.f32 %v319, %v327
        %v330 = vadd.f32 %v320, %v328
        %v331 = vlaneseq
        %v332 = vshrl.u32 %v331, 7
        %v333 = vsub.s32 1, %v332
        %v334 = vrot.slane %v322, %v333
        %v335 = vmul.f32 %v298, %v334
        %v336 = vmul.f32 %v300, %v334
        %v337 = vadd.f32 %v329, %v335
        %v338 = vadd.f32 %v330, %v336
        %v339 = vlaneseq
        %v340 = vshrl.u32 %v339, 7
        %v341 = vsub.s32 2, %v340
        %v342 = vrot.slane %v322, %v341
        %v343 = vmul.f32 %v310, %v342
        %v344 = vmul.f32 %v312, %v342
        %v345 = vadd.f32 %v337, %v343
        %v346 = vadd.f32 %v338, %v344
        %347 = vrot.lane.b32.xlu0 %v166, 124
        %v348 = vpop.permute.xlu0 %347
        %349 = vrot.lane.b32.xlu0 %v167, 124
        %v350 = vpop.permute.xlu0 %349
        %v351 = vlaneseq
        %v352 = vshrl.u32 %v351, 7
        %v353 = vsub.s32 3, %v352
        %v354 = vrot.slane %v322, %v353
        %v355 = vmul.f32 %v348, %v354
        %v356 = vmul.f32 %v350, %v354
        %v357 = vadd.f32 %v345, %v355
        %v358 = vadd.f32 %v346, %v356
        %359 = vrot.lane.b32.xlu0 %v166, 123
        %v360 = vpop.permute.xlu0 %359
        %361 = vrot.lane.b32.xlu0 %v167, 123
        %v362 = vpop.permute.xlu0 %361
        %v363 = vlaneseq
        %v364 = vshrl.u32 %v363, 7
        %v365 = vsub.s32 4, %v364
        %v366 = vrot.slane %v322, %v365
        %v367 = vmul.f32 %v360, %v366
        %v368 = vmul.f32 %v362, %v366
        %v369 = vadd.f32 %v357, %v367
        %v370 = vadd.f32 %v358, %v368
        %371 = vrot.lane.b32.xlu0 %v166, 122
        %v372 = vpop.permute.xlu0 %371
        %373 = vrot.lane.b32.xlu0 %v167, 122
        %v374 = vpop.permute.xlu0 %373
        %v375 = vlaneseq
        %v376 = vshrl.u32 %v375, 7
        %v377 = vsub.s32 5, %v376
        %v378 = vrot.slane %v322, %v377
        %v379 = vmul.f32 %v372, %v378
        %v380 = vmul.f32 %v374, %v378
        %v381 = vadd.f32 %v369, %v379
        %v382 = vadd.f32 %v370, %v380
        %383 = vrot.lane.b32.xlu0 %v166, 121
        %v384 = vpop.permute.xlu0 %383
        %385 = vrot.lane.b32.xlu0 %v167, 121
        %v386 = vpop.permute.xlu0 %385
        %v387 = vlaneseq
        %v388 = vshrl.u32 %v387, 7
        %v389 = vsub.s32 6, %v388
        %v390 = vrot.slane %v322, %v389
        %v391 = vmul.f32 %v384, %v390
        %v392 = vmul.f32 %v386, %v390
        %v393 = vadd.f32 %v381, %v391
        %v394 = vadd.f32 %v382, %v392
        %v395 = vld [vmem:[#allocation2 + $0x8] sm:$0xff]
        %v396 = vld [vmem:[#allocation2 + $0x10] sm:$0xff]
        %s397 = scalar_lea.vmem %s1, 24
        %v398 = vld [vmem:[%s397] sm:$0x7f]
        %399 = vrot.lane.b32.xlu0 %v395, 7
        %v400 = vpop.permute.xlu0 %399
        %401 = vrot.lane.b32.xlu0 %v396, 7
        %v402 = vpop.permute.xlu0 %401
        %v403 = vlaneseq
        %v404 = vshrl.u32 %v403, 7
        %v405 = vsub.s32 0, %v404
        %v406 = vrot.slane %v398, %v405
        %v407 = vmul.f32 %v400, %v406
        %v408 = vmul.f32 %v402, %v406
        %v409 = vadd.f32 %v393, %v407
        %v410 = vadd.f32 %v394, %v408
        %411 = vrot.lane.b32.xlu0 %v395, 6
        %v412 = vpop.permute.xlu0 %411
        %413 = vrot.lane.b32.xlu0 %v396, 6
        %v414 = vpop.permute.xlu0 %413
        %v415 = vlaneseq
        %v416 = vshrl.u32 %v415, 7
        %v417 = vsub.s32 1, %v416
        %v418 = vrot.slane %v398, %v417
        %v419 = vmul.f32 %v412, %v418
        %v420 = vmul.f32 %v414, %v418
        %v421 = vadd.f32 %v409, %v419
        %v422 = vadd.f32 %v410, %v420
        %423 = vrot.lane.b32.xlu0 %v395, 5
        %v424 = vpop.permute.xlu0 %423
        %425 = vrot.lane.b32.xlu0 %v396, 5
        %v426 = vpop.permute.xlu0 %425
        %v427 = vlaneseq
        %v428 = vshrl.u32 %v427, 7
        %v429 = vsub.s32 2, %v428
        %v430 = vrot.slane %v398, %v429
        %v431 = vmul.f32 %v424, %v430
        %v432 = vmul.f32 %v426, %v430
        %v433 = vadd.f32 %v421, %v431
        %v434 = vadd.f32 %v422, %v432
        %435 = vrot.lane.b32.xlu0 %v395, 4
        %v436 = vpop.permute.xlu0 %435
        %437 = vrot.lane.b32.xlu0 %v396, 4
        %v438 = vpop.permute.xlu0 %437
        %v439 = vlaneseq
        %v440 = vshrl.u32 %v439, 7
        %v441 = vsub.s32 3, %v440
        %v442 = vrot.slane %v398, %v441
        %v443 = vmul.f32 %v436, %v442
        %v444 = vmul.f32 %v438, %v442
        %v445 = vadd.f32 %v433, %v443
        %v446 = vadd.f32 %v434, %v444
        %447 = vrot.lane.b32.xlu0 %v395, 3
        %v448 = vpop.permute.xlu0 %447
        %449 = vrot.lane.b32.xlu0 %v396, 3
        %v450 = vpop.permute.xlu0 %449
        %v451 = vlaneseq
        %v452 = vshrl.u32 %v451, 7
        %v453 = vsub.s32 4, %v452
        %v454 = vrot.slane %v398, %v453
        %v455 = vmul.f32 %v448, %v454
        %v456 = vmul.f32 %v450, %v454
        %v457 = vadd.f32 %v445, %v455
        %v458 = vadd.f32 %v446, %v456
        %459 = vrot.lane.b32.xlu0 %v395, 2
        %v460 = vpop.permute.xlu0 %459
        %461 = vrot.lane.b32.xlu0 %v396, 2
        %v462 = vpop.permute.xlu0 %461
        %v463 = vlaneseq
        %v464 = vshrl.u32 %v463, 7
        %v465 = vsub.s32 5, %v464
        %v466 = vrot.slane %v398, %v465
        %v467 = vmul.f32 %v460, %v466
        %v468 = vmul.f32 %v462, %v466
        %v469 = vadd.f32 %v457, %v467
        %v470 = vadd.f32 %v458, %v468
        %471 = vrot.lane.b32.xlu0 %v395, 1
        %v472 = vpop.permute.xlu0 %471
        %473 = vrot.lane.b32.xlu0 %v396, 1
        %v474 = vpop.permute.xlu0 %473
        %v475 = vlaneseq
        %v476 = vshrl.u32 %v475, 7
        %v477 = vsub.s32 6, %v476
        %v478 = vrot.slane %v398, %v477
        %v479 = vmul.f32 %v472, %v478
        %v480 = vmul.f32 %v474, %v478
        %v481 = vadd.f32 %v469, %v479
        %v482 = vadd.f32 %v470, %v480
        %s483 = scalar_lea.vmem %s1, 32
        %v484 = vld [vmem:[%s483] sm:$0x7f]
        %v485 = vlaneseq
        %v486 = vshrl.u32 %v485, 7
        %v487 = vsub.s32 0, %v486
        %v488 = vrot.slane %v484, %v487
        %v489 = vmul.f32 %v448, %v488
        %v490 = vmul.f32 %v450, %v488
        %v491 = vadd.f32 %v481, %v489
        %v492 = vadd.f32 %v482, %v490
        %v493 = vlaneseq
        %v494 = vshrl.u32 %v493, 7
        %v495 = vsub.s32 1, %v494
        %v496 = vrot.slane %v484, %v495
        %v497 = vmul.f32 %v460, %v496
        %v498 = vmul.f32 %v462, %v496
        %v499 = vadd.f32 %v491, %v497
        %v500 = vadd.f32 %v492, %v498
        %v501 = vlaneseq
        %v502 = vshrl.u32 %v501, 7
        %v503 = vsub.s32 2, %v502
        %v504 = vrot.slane %v484, %v503
        %v505 = vmul.f32 %v472, %v504
        %v506 = vmul.f32 %v474, %v504
        %v507 = vadd.f32 %v499, %v505
        %v508 = vadd.f32 %v500, %v506
        %v509 = vlaneseq
        %v510 = vshrl.u32 %v509, 7
        %v511 = vsub.s32 3, %v510
        %v512 = vrot.slane %v484, %v511
        %v513 = vmul.f32 %v395, %v512
        %v514 = vmul.f32 %v396, %v512
        %v515 = vadd.f32 %v507, %v513
        %v516 = vadd.f32 %v508, %v514
        %517 = vrot.lane.b32.xlu0 %v395, 127
        %v518 = vpop.permute.xlu0 %517
        %519 = vrot.lane.b32.xlu0 %v396, 127
        %v520 = vpop.permute.xlu0 %519
        %v521 = vlaneseq
        %v522 = vshrl.u32 %v521, 7
        %v523 = vsub.s32 4, %v522
        %v524 = vrot.slane %v484, %v523
        %v525 = vmul.f32 %v518, %v524
        %v526 = vmul.f32 %v520, %v524
        %v527 = vadd.f32 %v515, %v525
        %v528 = vadd.f32 %v516, %v526
        %529 = vrot.lane.b32.xlu0 %v395, 126
        %v530 = vpop.permute.xlu0 %529
        %531 = vrot.lane.b32.xlu0 %v396, 126
        %v532 = vpop.permute.xlu0 %531
        %v533 = vlaneseq
        %v534 = vshrl.u32 %v533, 7
        %v535 = vsub.s32 5, %v534
        %v536 = vrot.slane %v484, %v535
        %v537 = vmul.f32 %v530, %v536
        %v538 = vmul.f32 %v532, %v536
        %v539 = vadd.f32 %v527, %v537
        %v540 = vadd.f32 %v528, %v538
        %541 = vrot.lane.b32.xlu0 %v395, 125
        %v542 = vpop.permute.xlu0 %541
        %543 = vrot.lane.b32.xlu0 %v396, 125
        %v544 = vpop.permute.xlu0 %543
        %v545 = vlaneseq
        %v546 = vshrl.u32 %v545, 7
        %v547 = vsub.s32 6, %v546
        %v548 = vrot.slane %v484, %v547
        %v549 = vmul.f32 %v542, %v548
        %v550 = vmul.f32 %v544, %v548
        %v551 = vadd.f32 %v539, %v549
        %v552 = vadd.f32 %v540, %v550
        %s553 = scalar_lea.vmem %s1, 40
        %v554 = vld [vmem:[%s553] sm:$0x7f]
        %v555 = vlaneseq
        %v556 = vshrl.u32 %v555, 7
        %v557 = vsub.s32 0, %v556
        %v558 = vrot.slane %v554, %v557
        %v559 = vmul.f32 %v518, %v558
        %v560 = vmul.f32 %v520, %v558
        %v561 = vadd.f32 %v551, %v559
        %v562 = vadd.f32 %v552, %v560
        %v563 = vlaneseq
        %v564 = vshrl.u32 %v563, 7
        %v565 = vsub.s32 1, %v564
        %v566 = vrot.slane %v554, %v565
        %v567 = vmul.f32 %v530, %v566
        %v568 = vmul.f32 %v532, %v566
        %v569 = vadd.f32 %v561, %v567
        %v570 = vadd.f32 %v562, %v568
        %v571 = vlaneseq
        %v572 = vshrl.u32 %v571, 7
        %v573 = vsub.s32 2, %v572
        %v574 = vrot.slane %v554, %v573
        %v575 = vmul.f32 %v542, %v574
        %v576 = vmul.f32 %v544, %v574
        %v577 = vadd.f32 %v569, %v575
        %v578 = vadd.f32 %v570, %v576
        %579 = vrot.lane.b32.xlu0 %v395, 124
        %v580 = vpop.permute.xlu0 %579
        %581 = vrot.lane.b32.xlu0 %v396, 124
        %v582 = vpop.permute.xlu0 %581
        %v583 = vlaneseq
        %v584 = vshrl.u32 %v583, 7
        %v585 = vsub.s32 3, %v584
        %v586 = vrot.slane %v554, %v585
        %v587 = vmul.f32 %v580, %v586
        %v588 = vmul.f32 %v582, %v586
        %v589 = vadd.f32 %v577, %v587
        %v590 = vadd.f32 %v578, %v588
        %591 = vrot.lane.b32.xlu0 %v395, 123
        %v592 = vpop.permute.xlu0 %591
        %593 = vrot.lane.b32.xlu0 %v396, 123
        %v594 = vpop.permute.xlu0 %593
        %v595 = vlaneseq
        %v596 = vshrl.u32 %v595, 7
        %v597 = vsub.s32 4, %v596
        %v598 = vrot.slane %v554, %v597
        %v599 = vmul.f32 %v592, %v598
        %v600 = vmul.f32 %v594, %v598
        %v601 = vadd.f32 %v589, %v599
        %v602 = vadd.f32 %v590, %v600
        %603 = vrot.lane.b32.xlu0 %v395, 122
        %v604 = vpop.permute.xlu0 %603
        %605 = vrot.lane.b32.xlu0 %v396, 122
        %v606 = vpop.permute.xlu0 %605
        %v607 = vlaneseq
        %v608 = vshrl.u32 %v607, 7
        %v609 = vsub.s32 5, %v608
        %v610 = vrot.slane %v554, %v609
        %v611 = vmul.f32 %v604, %v610
        %v612 = vmul.f32 %v606, %v610
        %v613 = vadd.f32 %v601, %v611
        %v614 = vadd.f32 %v602, %v612
        %615 = vrot.lane.b32.xlu0 %v395, 121
        %v616 = vpop.permute.xlu0 %615
        %617 = vrot.lane.b32.xlu0 %v396, 121
        %v618 = vpop.permute.xlu0 %617
        %v619 = vlaneseq
        %v620 = vshrl.u32 %v619, 7
        %v621 = vsub.s32 6, %v620
        %v622 = vrot.slane %v554, %v621
        %v623 = vmul.f32 %v616, %v622
        %v624 = vmul.f32 %v618, %v622
        %v625 = vadd.f32 %v613, %v623
        %v626 = vadd.f32 %v614, %v624
        %v627 = vld [vmem:[#allocation2 + $0x9] sm:$0xff]
        %v628 = vld [vmem:[#allocation2 + $0x11] sm:$0xff]
        %s629 = scalar_lea.vmem %s1, 48
        %v630 = vld [vmem:[%s629] sm:$0x7f]
        %631 = vrot.lane.b32.xlu0 %v627, 7
        %v632 = vpop.permute.xlu0 %631
        %633 = vrot.lane.b32.xlu0 %v628, 7
        %v634 = vpop.permute.xlu0 %633
        %v635 = vlaneseq
        %v636 = vshrl.u32 %v635, 7
        %v637 = vsub.s32 0, %v636
        %v638 = vrot.slane %v630, %v637
        %v639 = vmul.f32 %v632, %v638
        %v640 = vmul.f32 %v634, %v638
        %v641 = vadd.f32 %v625, %v639
        %v642 = vadd.f32 %v626, %v640
        %643 = vrot.lane.b32.xlu0 %v627, 6
        %v644 = vpop.permute.xlu0 %643
        %645 = vrot.lane.b32.xlu0 %v628, 6
        %v646 = vpop.permute.xlu0 %645
        %v647 = vlaneseq
        %v648 = vshrl.u32 %v647, 7
        %v649 = vsub.s32 1, %v648
        %v650 = vrot.slane %v630, %v649
        %v651 = vmul.f32 %v644, %v650
        %v652 = vmul.f32 %v646, %v650
        %v653 = vadd.f32 %v641, %v651
        %v654 = vadd.f32 %v642, %v652
        %655 = vrot.lane.b32.xlu0 %v627, 5
        %v656 = vpop.permute.xlu0 %655
        %657 = vrot.lane.b32.xlu0 %v628, 5
        %v658 = vpop.permute.xlu0 %657
        %v659 = vlaneseq
        %v660 = vshrl.u32 %v659, 7
        %v661 = vsub.s32 2, %v660
        %v662 = vrot.slane %v630, %v661
        %v663 = vmul.f32 %v656, %v662
        %v664 = vmul.f32 %v658, %v662
        %v665 = vadd.f32 %v653, %v663
        %v666 = vadd.f32 %v654, %v664
        %667 = vrot.lane.b32.xlu0 %v627, 4
        %v668 = vpop.permute.xlu0 %667
        %669 = vrot.lane.b32.xlu0 %v628, 4
        %v670 = vpop.permute.xlu0 %669
        %v671 = vlaneseq
        %v672 = vshrl.u32 %v671, 7
        %v673 = vsub.s32 3, %v672
        %v674 = vrot.slane %v630, %v673
        %v675 = vmul.f32 %v668, %v674
        %v676 = vmul.f32 %v670, %v674
        %v677 = vadd.f32 %v665, %v675
        %v678 = vadd.f32 %v666, %v676
        %679 = vrot.lane.b32.xlu0 %v627, 3
        %v680 = vpop.permute.xlu0 %679
        %681 = vrot.lane.b32.xlu0 %v628, 3
        %v682 = vpop.permute.xlu0 %681
        %v683 = vlaneseq
        %v684 = vshrl.u32 %v683, 7
        %v685 = vsub.s32 4, %v684
        %v686 = vrot.slane %v630, %v685
        %v687 = vmul.f32 %v680, %v686
        %v688 = vmul.f32 %v682, %v686
        %v689 = vadd.f32 %v677, %v687
        %v690 = vadd.f32 %v678, %v688
        %691 = vrot.lane.b32.xlu0 %v627, 2
        %v692 = vpop.permute.xlu0 %691
        %693 = vrot.lane.b32.xlu0 %v628, 2
        %v694 = vpop.permute.xlu0 %693
        %v695 = vlaneseq
        %v696 = vshrl.u32 %v695, 7
        %v697 = vsub.s32 5, %v696
        %v698 = vrot.slane %v630, %v697
        %v699 = vmul.f32 %v692, %v698
        %v700 = vmul.f32 %v694, %v698
        %v701 = vadd.f32 %v689, %v699
        %v702 = vadd.f32 %v690, %v700
        %703 = vrot.lane.b32.xlu0 %v627, 1
        %v704 = vpop.permute.xlu0 %703
        %705 = vrot.lane.b32.xlu0 %v628, 1
        %v706 = vpop.permute.xlu0 %705
        %v707 = vlaneseq
        %v708 = vshrl.u32 %v707, 7
        %v709 = vsub.s32 6, %v708
        %v710 = vrot.slane %v630, %v709
        %v711 = vmul.f32 %v704, %v710
        %v712 = vmul.f32 %v706, %v710
        %v713 = vadd.f32 %v701, %v711
        %v714 = vadd.f32 %v702, %v712
        %s715 = scalar_lea.vmem %s1, 56
        %v716 = vld [vmem:[%s715] sm:$0x7f]
        %v717 = vlaneseq
        %v718 = vshrl.u32 %v717, 7
        %v719 = vsub.s32 0, %v718
        %v720 = vrot.slane %v716, %v719
        %v721 = vmul.f32 %v680, %v720
        %v722 = vmul.f32 %v682, %v720
        %v723 = vadd.f32 %v713, %v721
        %v724 = vadd.f32 %v714, %v722
        %v725 = vlaneseq
        %v726 = vshrl.u32 %v725, 7
        %v727 = vsub.s32 1, %v726
        %v728 = vrot.slane %v716, %v727
        %v729 = vmul.f32 %v692, %v728
        %v730 = vmul.f32 %v694, %v728
        %v731 = vadd.f32 %v723, %v729
        %v732 = vadd.f32 %v724, %v730
        %v733 = vlaneseq
        %v734 = vshrl.u32 %v733, 7
        %v735 = vsub.s32 2, %v734
        %v736 = vrot.slane %v716, %v735
        %v737 = vmul.f32 %v704, %v736
        %v738 = vmul.f32 %v706, %v736
        %v739 = vadd.f32 %v731, %v737
        %v740 = vadd.f32 %v732, %v738
        %v741 = vlaneseq
        %v742 = vshrl.u32 %v741, 7
        %v743 = vsub.s32 3, %v742
        %v744 = vrot.slane %v716, %v743
        %v745 = vmul.f32 %v627, %v744
        %v746 = vmul.f32 %v628, %v744
        %v747 = vadd.f32 %v739, %v745
        %v748 = vadd.f32 %v740, %v746
        %749 = vrot.lane.b32.xlu0 %v627, 127
        %v750 = vpop.permute.xlu0 %749
        %751 = vrot.lane.b32.xlu0 %v628, 127
        %v752 = vpop.permute.xlu0 %751
        %v753 = vlaneseq
        %v754 = vshrl.u32 %v753, 7
        %v755 = vsub.s32 4, %v754
        %v756 = vrot.slane %v716, %v755
        %v757 = vmul.f32 %v750, %v756
        %v758 = vmul.f32 %v752, %v756
        %v759 = vadd.f32 %v747, %v757
        %v760 = vadd.f32 %v748, %v758
        %761 = vrot.lane.b32.xlu0 %v627, 126
        %v762 = vpop.permute.xlu0 %761
        %763 = vrot.lane.b32.xlu0 %v628, 126
        %v764 = vpop.permute.xlu0 %763
        %v765 = vlaneseq
        %v766 = vshrl.u32 %v765, 7
        %v767 = vsub.s32 5, %v766
        %v768 = vrot.slane %v716, %v767
        %v769 = vmul.f32 %v762, %v768
        %v770 = vmul.f32 %v764, %v768
        %v771 = vadd.f32 %v759, %v769
        %v772 = vadd.f32 %v760, %v770
        %773 = vrot.lane.b32.xlu0 %v627, 125
        %v774 = vpop.permute.xlu0 %773
        %775 = vrot.lane.b32.xlu0 %v628, 125
        %v776 = vpop.permute.xlu0 %775
        %v777 = vlaneseq
        %v778 = vshrl.u32 %v777, 7
        %v779 = vsub.s32 6, %v778
        %v780 = vrot.slane %v716, %v779
        %v781 = vmul.f32 %v774, %v780
        %v782 = vmul.f32 %v776, %v780
        %v783 = vadd.f32 %v771, %v781
        %v784 = vadd.f32 %v772, %v782
        %s785 = scalar_lea.vmem %s1, 64
        %v786 = vld [vmem:[%s785] sm:$0x7f]
        %v787 = vlaneseq
        %v788 = vshrl.u32 %v787, 7
        %v789 = vsub.s32 0, %v788
        %v790 = vrot.slane %v786, %v789
        %v791 = vmul.f32 %v750, %v790
        %v792 = vmul.f32 %v752, %v790
        %v793 = vadd.f32 %v783, %v791
        %v794 = vadd.f32 %v784, %v792
        %v795 = vlaneseq
        %v796 = vshrl.u32 %v795, 7
        %v797 = vsub.s32 1, %v796
        %v798 = vrot.slane %v786, %v797
        %v799 = vmul.f32 %v762, %v798
        %v800 = vmul.f32 %v764, %v798
        %v801 = vadd.f32 %v793, %v799
        %v802 = vadd.f32 %v794, %v800
        %v803 = vlaneseq
        %v804 = vshrl.u32 %v803, 7
        %v805 = vsub.s32 2, %v804
        %v806 = vrot.slane %v786, %v805
        %v807 = vmul.f32 %v774, %v806
        %v808 = vmul.f32 %v776, %v806
        %v809 = vadd.f32 %v801, %v807
        %v810 = vadd.f32 %v802, %v808
        %811 = vrot.lane.b32.xlu0 %v627, 124
        %v812 = vpop.permute.xlu0 %811
        %813 = vrot.lane.b32.xlu0 %v628, 124
        %v814 = vpop.permute.xlu0 %813
        %v815 = vlaneseq
        %v816 = vshrl.u32 %v815, 7
        %v817 = vsub.s32 3, %v816
        %v818 = vrot.slane %v786, %v817
        %v819 = vmul.f32 %v812, %v818
        %v820 = vmul.f32 %v814, %v818
        %v821 = vadd.f32 %v809, %v819
        %v822 = vadd.f32 %v810, %v820
        %823 = vrot.lane.b32.xlu0 %v627, 123
        %v824 = vpop.permute.xlu0 %823
        %825 = vrot.lane.b32.xlu0 %v628, 123
        %v826 = vpop.permute.xlu0 %825
        %v827 = vlaneseq
        %v828 = vshrl.u32 %v827, 7
        %v829 = vsub.s32 4, %v828
        %v830 = vrot.slane %v786, %v829
        %v831 = vmul.f32 %v824, %v830
        %v832 = vmul.f32 %v826, %v830
        %v833 = vadd.f32 %v821, %v831
        %v834 = vadd.f32 %v822, %v832
        %835 = vrot.lane.b32.xlu0 %v627, 122
        %v836 = vpop.permute.xlu0 %835
        %837 = vrot.lane.b32.xlu0 %v628, 122
        %v838 = vpop.permute.xlu0 %837
        %v839 = vlaneseq
        %v840 = vshrl.u32 %v839, 7
        %v841 = vsub.s32 5, %v840
        %v842 = vrot.slane %v786, %v841
        %v843 = vmul.f32 %v836, %v842
        %v844 = vmul.f32 %v838, %v842
        %v845 = vadd.f32 %v833, %v843
        %v846 = vadd.f32 %v834, %v844
        %847 = vrot.lane.b32.xlu0 %v627, 121
        %v848 = vpop.permute.xlu0 %847
        %849 = vrot.lane.b32.xlu0 %v628, 121
        %v850 = vpop.permute.xlu0 %849
        %v851 = vlaneseq
        %v852 = vshrl.u32 %v851, 7
        %v853 = vsub.s32 6, %v852
        %v854 = vrot.slane %v786, %v853
        %v855 = vmul.f32 %v848, %v854
        %v856 = vmul.f32 %v850, %v854
        %v857 = vadd.f32 %v845, %v855
        %v858 = vadd.f32 %v846, %v856
        %v859 = vld [vmem:[#allocation3] sm:$0xff]
        %v860 = vld [vmem:[#allocation3 + $0x8] sm:$0xff]
        %863 = vrot.lane.b32.xlu0 %v857, 96
        %v864 = vpop.permute.xlu0 %863
        %865 = vrot.lane.b32.xlu0 %v858, 96
        %v866 = vpop.permute.xlu0 %865
        %v869 = vadd.f32 %v859, %v864
        %v870 = vadd.f32 %v860, %v866
        %871 = vst.msk [vmem:[#allocation3] sm:$0xff] %vm152, %v869
        %872 = vst.msk [vmem:[#allocation3 + $0x8] sm:$0xff] %vm152, %v870
        %873 = vst.msk [vmem:[#allocation2 + $0x8] sm:$0xff] %vm163, %v857
        %874 = vst.msk [vmem:[#allocation2 + $0x10] sm:$0xff] %vm163, %v858
        %v875 = vld [vmem:[#allocation2 + $0x6] sm:$0xff]
        %v876 = vld [vmem:[#allocation2 + $0xe] sm:$0xff]
        %s877 = scalar_lea.vmem %s1, 72
        %v878 = vld [vmem:[%s877] sm:$0x7f]
        %879 = vrot.lane.b32.xlu0 %v875, 11
        %v880 = vpop.permute.xlu0 %879
        %881 = vrot.lane.b32.xlu0 %v876, 11
        %v882 = vpop.permute.xlu0 %881
        %v883 = vlaneseq
        %v884 = vshrl.u32 %v883, 7
        %v885 = vsub.s32 0, %v884
        %v886 = vrot.slane %v878, %v885
        %v887 = vmul.f32 %v880, %v886
        %v888 = vmul.f32 %v882, %v886
        %889 = vrot.lane.b32.xlu0 %v875, 10
        %v890 = vpop.permute.xlu0 %889
        %891 = vrot.lane.b32.xlu0 %v876, 10
        %v892 = vpop.permute.xlu0 %891
        %v893 = vlaneseq
        %v894 = vshrl.u32 %v893, 7
        %v895 = vsub.s32 1, %v894
        %v896 = vrot.slane %v878, %v895
        %v897 = vmul.f32 %v890, %v896
        %v898 = vmul.f32 %v892, %v896
        %v899 = vadd.f32 %v887, %v897
        %v900 = vadd.f32 %v888, %v898
        %901 = vrot.lane.b32.xlu0 %v875, 9
        %v902 = vpop.permute.xlu0 %901
        %903 = vrot.lane.b32.xlu0 %v876, 9
        %v904 = vpop.permute.xlu0 %903
        %v905 = vlaneseq
        %v906 = vshrl.u32 %v905, 7
        %v907 = vsub.s32 2, %v906
        %v908 = vrot.slane %v878, %v907
        %v909 = vmul.f32 %v902, %v908
        %v910 = vmul.f32 %v904, %v908
        %v911 = vadd.f32 %v899, %v909
        %v912 = vadd.f32 %v900, %v910
        %913 = vrot.lane.b32.xlu0 %v875, 8
        %v914 = vpop.permute.xlu0 %913
        %915 = vrot.lane.b32.xlu0 %v876, 8
        %v916 = vpop.permute.xlu0 %915
        %v917 = vlaneseq
        %v918 = vshrl.u32 %v917, 7
        %v919 = vsub.s32 3, %v918
        %v920 = vrot.slane %v878, %v919
        %v921 = vmul.f32 %v914, %v920
        %v922 = vmul.f32 %v916, %v920
        %v923 = vadd.f32 %v911, %v921
        %v924 = vadd.f32 %v912, %v922
        %925 = vrot.lane.b32.xlu0 %v875, 7
        %v926 = vpop.permute.xlu0 %925
        %927 = vrot.lane.b32.xlu0 %v876, 7
        %v928 = vpop.permute.xlu0 %927
        %v929 = vlaneseq
        %v930 = vshrl.u32 %v929, 7
        %v931 = vsub.s32 4, %v930
        %v932 = vrot.slane %v878, %v931
        %v933 = vmul.f32 %v926, %v932
        %v934 = vmul.f32 %v928, %v932
        %v935 = vadd.f32 %v923, %v933
        %v936 = vadd.f32 %v924, %v934
        %937 = vrot.lane.b32.xlu0 %v875, 6
        %v938 = vpop.permute.xlu0 %937
        %939 = vrot.lane.b32.xlu0 %v876, 6
        %v940 = vpop.permute.xlu0 %939
        %v941 = vlaneseq
        %v942 = vshrl.u32 %v941, 7
        %v943 = vsub.s32 5, %v942
        %v944 = vrot.slane %v878, %v943
        %v945 = vmul.f32 %v938, %v944
        %v946 = vmul.f32 %v940, %v944
        %v947 = vadd.f32 %v935, %v945
        %v948 = vadd.f32 %v936, %v946
        %949 = vrot.lane.b32.xlu0 %v875, 5
        %v950 = vpop.permute.xlu0 %949
        %951 = vrot.lane.b32.xlu0 %v876, 5
        %v952 = vpop.permute.xlu0 %951
        %v953 = vlaneseq
        %v954 = vshrl.u32 %v953, 7
        %v955 = vsub.s32 6, %v954
        %v956 = vrot.slane %v878, %v955
        %v957 = vmul.f32 %v950, %v956
        %v958 = vmul.f32 %v952, %v956
        %v959 = vadd.f32 %v947, %v957
        %v960 = vadd.f32 %v948, %v958
        %s961 = scalar_lea.vmem %s1, 80
        %v962 = vld [vmem:[%s961] sm:$0x7f]
        %963 = vrot.lane.b32.xlu0 %v875, 3
        %v964 = vpop.permute.xlu0 %963
        %965 = vrot.lane.b32.xlu0 %v876, 3
        %v966 = vpop.permute.xlu0 %965
        %v967 = vlaneseq
        %v968 = vshrl.u32 %v967, 7
        %v969 = vsub.s32 0, %v968
        %v970 = vrot.slane %v962, %v969
        %v971 = vmul.f32 %v964, %v970
        %v972 = vmul.f32 %v966, %v970
        %v973 = vadd.f32 %v959, %v971
        %v974 = vadd.f32 %v960, %v972
        %975 = vrot.lane.b32.xlu0 %v875, 2
        %v976 = vpop.permute.xlu0 %975
        %977 = vrot.lane.b32.xlu0 %v876, 2
        %v978 = vpop.permute.xlu0 %977
        %v979 = vlaneseq
        %v980 = vshrl.u32 %v979, 7
        %v981 = vsub.s32 1, %v980
        %v982 = vrot.slane %v962, %v981
        %v983 = vmul.f32 %v976, %v982
        %v984 = vmul.f32 %v978, %v982
        %v985 = vadd.f32 %v973, %v983
        %v986 = vadd.f32 %v974, %v984
        %987 = vrot.lane.b32.xlu0 %v875, 1
        %v988 = vpop.permute.xlu0 %987
        %989 = vrot.lane.b32.xlu0 %v876, 1
        %v990 = vpop.permute.xlu0 %989
        %v991 = vlaneseq
        %v992 = vshrl.u32 %v991, 7
        %v993 = vsub.s32 2, %v992
        %v994 = vrot.slane %v962, %v993
        %v995 = vmul.f32 %v988, %v994
        %v996 = vmul.f32 %v990, %v994
        %v997 = vadd.f32 %v985, %v995
        %v998 = vadd.f32 %v986, %v996
        %v999 = vlaneseq
        %v1000 = vshrl.u32 %v999, 7
        %v1001 = vsub.s32 3, %v1000
        %v1002 = vrot.slane %v962, %v1001
        %v1003 = vmul.f32 %v875, %v1002
        %v1004 = vmul.f32 %v876, %v1002
        %v1005 = vadd.f32 %v997, %v1003
        %v1006 = vadd.f32 %v998, %v1004
        %1007 = vrot.lane.b32.xlu0 %v875, 127
        %v1008 = vpop.permute.xlu0 %1007
        %1009 = vrot.lane.b32.xlu0 %v876, 127
        %v1010 = vpop.permute.xlu0 %1009
        %v1011 = vlaneseq
        %v1012 = vshrl.u32 %v1011, 7
        %v1013 = vsub.s32 4, %v1012
        %v1014 = vrot.slane %v962, %v1013
        %v1015 = vmul.f32 %v1008, %v1014
        %v1016 = vmul.f32 %v1010, %v1014
        %v1017 = vadd.f32 %v1005, %v1015
        %v1018 = vadd.f32 %v1006, %v1016
        %1019 = vrot.lane.b32.xlu0 %v875, 126
        %v1020 = vpop.permute.xlu0 %1019
        %1021 = vrot.lane.b32.xlu0 %v876, 126
        %v1022 = vpop.permute.xlu0 %1021
        %v1023 = vlaneseq
        %v1024 = vshrl.u32 %v1023, 7
        %v1025 = vsub.s32 5, %v1024
        %v1026 = vrot.slane %v962, %v1025
        %v1027 = vmul.f32 %v1020, %v1026
        %v1028 = vmul.f32 %v1022, %v1026
        %v1029 = vadd.f32 %v1017, %v1027
        %v1030 = vadd.f32 %v1018, %v1028
        %1031 = vrot.lane.b32.xlu0 %v875, 125
        %v1032 = vpop.permute.xlu0 %1031
        %1033 = vrot.lane.b32.xlu0 %v876, 125
        %v1034 = vpop.permute.xlu0 %1033
        %v1035 = vlaneseq
        %v1036 = vshrl.u32 %v1035, 7
        %v1037 = vsub.s32 6, %v1036
        %v1038 = vrot.slane %v962, %v1037
        %v1039 = vmul.f32 %v1032, %v1038
        %v1040 = vmul.f32 %v1034, %v1038
        %v1041 = vadd.f32 %v1029, %v1039
        %v1042 = vadd.f32 %v1030, %v1040
        %s1043 = scalar_lea.vmem %s1, 88
        %v1044 = vld [vmem:[%s1043] sm:$0x7f]
        %1045 = vrot.lane.b32.xlu0 %v875, 123
        %v1046 = vpop.permute.xlu0 %1045
        %1047 = vrot.lane.b32.xlu0 %v876, 123
        %v1048 = vpop.permute.xlu0 %1047
        %v1049 = vlaneseq
        %v1050 = vshrl.u32 %v1049, 7
        %v1051 = vsub.s32 0, %v1050
        %v1052 = vrot.slane %v1044, %v1051
        %v1053 = vmul.f32 %v1046, %v1052
        %v1054 = vmul.f32 %v1048, %v1052
        %v1055 = vadd.f32 %v1041, %v1053
        %v1056 = vadd.f32 %v1042, %v1054
        %1057 = vrot.lane.b32.xlu0 %v875, 122
        %v1058 = vpop.permute.xlu0 %1057
        %1059 = vrot.lane.b32.xlu0 %v876, 122
        %v1060 = vpop.permute.xlu0 %1059
        %v1061 = vlaneseq
        %v1062 = vshrl.u32 %v1061, 7
        %v1063 = vsub.s32 1, %v1062
        %v1064 = vrot.slane %v1044, %v1063
        %v1065 = vmul.f32 %v1058, %v1064
        %v1066 = vmul.f32 %v1060, %v1064
        %v1067 = vadd.f32 %v1055, %v1065
        %v1068 = vadd.f32 %v1056, %v1066
        %1069 = vrot.lane.b32.xlu0 %v875, 121
        %v1070 = vpop.permute.xlu0 %1069
        %1071 = vrot.lane.b32.xlu0 %v876, 121
        %v1072 = vpop.permute.xlu0 %1071
        %v1073 = vlaneseq
        %v1074 = vshrl.u32 %v1073, 7
        %v1075 = vsub.s32 2, %v1074
        %v1076 = vrot.slane %v1044, %v1075
        %v1077 = vmul.f32 %v1070, %v1076
        %v1078 = vmul.f32 %v1072, %v1076
        %v1079 = vadd.f32 %v1067, %v1077
        %v1080 = vadd.f32 %v1068, %v1078
        %1081 = vrot.lane.b32.xlu0 %v875, 120
        %v1082 = vpop.permute.xlu0 %1081
        %1083 = vrot.lane.b32.xlu0 %v876, 120
        %v1084 = vpop.permute.xlu0 %1083
        %v1085 = vlaneseq
        %v1086 = vshrl.u32 %v1085, 7
        %v1087 = vsub.s32 3, %v1086
        %v1088 = vrot.slane %v1044, %v1087
        %v1089 = vmul.f32 %v1082, %v1088
        %v1090 = vmul.f32 %v1084, %v1088
        %v1091 = vadd.f32 %v1079, %v1089
        %v1092 = vadd.f32 %v1080, %v1090
        %1093 = vrot.lane.b32.xlu0 %v875, 119
        %v1094 = vpop.permute.xlu0 %1093
        %1095 = vrot.lane.b32.xlu0 %v876, 119
        %v1096 = vpop.permute.xlu0 %1095
        %v1097 = vlaneseq
        %v1098 = vshrl.u32 %v1097, 7
        %v1099 = vsub.s32 4, %v1098
        %v1100 = vrot.slane %v1044, %v1099
        %v1101 = vmul.f32 %v1094, %v1100
        %v1102 = vmul.f32 %v1096, %v1100
        %v1103 = vadd.f32 %v1091, %v1101
        %v1104 = vadd.f32 %v1092, %v1102
        %1105 = vrot.lane.b32.xlu0 %v875, 118
        %v1106 = vpop.permute.xlu0 %1105
        %1107 = vrot.lane.b32.xlu0 %v876, 118
        %v1108 = vpop.permute.xlu0 %1107
        %v1109 = vlaneseq
        %v1110 = vshrl.u32 %v1109, 7
        %v1111 = vsub.s32 5, %v1110
        %v1112 = vrot.slane %v1044, %v1111
        %v1113 = vmul.f32 %v1106, %v1112
        %v1114 = vmul.f32 %v1108, %v1112
        %v1115 = vadd.f32 %v1103, %v1113
        %v1116 = vadd.f32 %v1104, %v1114
        %1117 = vrot.lane.b32.xlu0 %v875, 117
        %v1118 = vpop.permute.xlu0 %1117
        %1119 = vrot.lane.b32.xlu0 %v876, 117
        %v1120 = vpop.permute.xlu0 %1119
        %v1121 = vlaneseq
        %v1122 = vshrl.u32 %v1121, 7
        %v1123 = vsub.s32 6, %v1122
        %v1124 = vrot.slane %v1044, %v1123
        %v1125 = vmul.f32 %v1118, %v1124
        %v1126 = vmul.f32 %v1120, %v1124
        %v1127 = vadd.f32 %v1115, %v1125
        %v1128 = vadd.f32 %v1116, %v1126
        %v1129 = vld [vmem:[#allocation2 + $0x8] sm:$0xff]
        %v1130 = vld [vmem:[#allocation2 + $0x10] sm:$0xff]
        %s1131 = scalar_lea.vmem %s1, 96
        %v1132 = vld [vmem:[%s1131] sm:$0x7f]
        %1133 = vrot.lane.b32.xlu0 %v1129, 11
        %v1134 = vpop.permute.xlu0 %1133
        %1135 = vrot.lane.b32.xlu0 %v1130, 11
        %v1136 = vpop.permute.xlu0 %1135
        %v1137 = vlaneseq
        %v1138 = vshrl.u32 %v1137, 7
        %v1139 = vsub.s32 0, %v1138
        %v1140 = vrot.slane %v1132, %v1139
        %v1141 = vmul.f32 %v1134, %v1140
        %v1142 = vmul.f32 %v1136, %v1140
        %v1143 = vadd.f32 %v1127, %v1141
        %v1144 = vadd.f32 %v1128, %v1142
        %1145 = vrot.lane.b32.xlu0 %v1129, 10
        %v1146 = vpop.permute.xlu0 %1145
        %1147 = vrot.lane.b32.xlu0 %v1130, 10
        %v1148 = vpop.permute.xlu0 %1147
        %v1149 = vlaneseq
        %v1150 = vshrl.u32 %v1149, 7
        %v1151 = vsub.s32 1, %v1150
        %v1152 = vrot.slane %v1132, %v1151
        %v1153 = vmul.f32 %v1146, %v1152
        %v1154 = vmul.f32 %v1148, %v1152
        %v1155 = vadd.f32 %v1143, %v1153
        %v1156 = vadd.f32 %v1144, %v1154
        %1157 = vrot.lane.b32.xlu0 %v1129, 9
        %v1158 = vpop.permute.xlu0 %1157
        %1159 = vrot.lane.b32.xlu0 %v1130, 9
        %v1160 = vpop.permute.xlu0 %1159
        %v1161 = vlaneseq
        %v1162 = vshrl.u32 %v1161, 7
        %v1163 = vsub.s32 2, %v1162
        %v1164 = vrot.slane %v1132, %v1163
        %v1165 = vmul.f32 %v1158, %v1164
        %v1166 = vmul.f32 %v1160, %v1164
        %v1167 = vadd.f32 %v1155, %v1165
        %v1168 = vadd.f32 %v1156, %v1166
        %1169 = vrot.lane.b32.xlu0 %v1129, 8
        %v1170 = vpop.permute.xlu0 %1169
        %1171 = vrot.lane.b32.xlu0 %v1130, 8
        %v1172 = vpop.permute.xlu0 %1171
        %v1173 = vlaneseq
        %v1174 = vshrl.u32 %v1173, 7
        %v1175 = vsub.s32 3, %v1174
        %v1176 = vrot.slane %v1132, %v1175
        %v1177 = vmul.f32 %v1170, %v1176
        %v1178 = vmul.f32 %v1172, %v1176
        %v1179 = vadd.f32 %v1167, %v1177
        %v1180 = vadd.f32 %v1168, %v1178
        %1181 = vrot.lane.b32.xlu0 %v1129, 7
        %v1182 = vpop.permute.xlu0 %1181
        %1183 = vrot.lane.b32.xlu0 %v1130, 7
        %v1184 = vpop.permute.xlu0 %1183
        %v1185 = vlaneseq
        %v1186 = vshrl.u32 %v1185, 7
        %v1187 = vsub.s32 4, %v1186
        %v1188 = vrot.slane %v1132, %v1187
        %v1189 = vmul.f32 %v1182, %v1188
        %v1190 = vmul.f32 %v1184, %v1188
        %v1191 = vadd.f32 %v1179, %v1189
        %v1192 = vadd.f32 %v1180, %v1190
        %1193 = vrot.lane.b32.xlu0 %v1129, 6
        %v1194 = vpop.permute.xlu0 %1193
        %1195 = vrot.lane.b32.xlu0 %v1130, 6
        %v1196 = vpop.permute.xlu0 %1195
        %v1197 = vlaneseq
        %v1198 = vshrl.u32 %v1197, 7
        %v1199 = vsub.s32 5, %v1198
        %v1200 = vrot.slane %v1132, %v1199
        %v1201 = vmul.f32 %v1194, %v1200
        %v1202 = vmul.f32 %v1196, %v1200
        %v1203 = vadd.f32 %v1191, %v1201
        %v1204 = vadd.f32 %v1192, %v1202
        %1205 = vrot.lane.b32.xlu0 %v1129, 5
        %v1206 = vpop.permute.xlu0 %1205
        %1207 = vrot.lane.b32.xlu0 %v1130, 5
        %v1208 = vpop.permute.xlu0 %1207
        %v1209 = vlaneseq
        %v1210 = vshrl.u32 %v1209, 7
        %v1211 = vsub.s32 6, %v1210
        %v1212 = vrot.slane %v1132, %v1211
        %v1213 = vmul.f32 %v1206, %v1212
        %v1214 = vmul.f32 %v1208, %v1212
        %v1215 = vadd.f32 %v1203, %v1213
        %v1216 = vadd.f32 %v1204, %v1214
        %s1217 = scalar_lea.vmem %s1, 104
        %v1218 = vld [vmem:[%s1217] sm:$0x7f]
        %1219 = vrot.lane.b32.xlu0 %v1129, 3
        %v1220 = vpop.permute.xlu0 %1219
        %1221 = vrot.lane.b32.xlu0 %v1130, 3
        %v1222 = vpop.permute.xlu0 %1221
        %v1223 = vlaneseq
        %v1224 = vshrl.u32 %v1223, 7
        %v1225 = vsub.s32 0, %v1224
        %v1226 = vrot.slane %v1218, %v1225
        %v1227 = vmul.f32 %v1220, %v1226
        %v1228 = vmul.f32 %v1222, %v1226
        %v1229 = vadd.f32 %v1215, %v1227
        %v1230 = vadd.f32 %v1216, %v1228
        %1231 = vrot.lane.b32.xlu0 %v1129, 2
        %v1232 = vpop.permute.xlu0 %1231
        %1233 = vrot.lane.b32.xlu0 %v1130, 2
        %v1234 = vpop.permute.xlu0 %1233
        %v1235 = vlaneseq
        %v1236 = vshrl.u32 %v1235, 7
        %v1237 = vsub.s32 1, %v1236
        %v1238 = vrot.slane %v1218, %v1237
        %v1239 = vmul.f32 %v1232, %v1238
        %v1240 = vmul.f32 %v1234, %v1238
        %v1241 = vadd.f32 %v1229, %v1239
        %v1242 = vadd.f32 %v1230, %v1240
        %1243 = vrot.lane.b32.xlu0 %v1129, 1
        %v1244 = vpop.permute.xlu0 %1243
        %1245 = vrot.lane.b32.xlu0 %v1130, 1
        %v1246 = vpop.permute.xlu0 %1245
        %v1247 = vlaneseq
        %v1248 = vshrl.u32 %v1247, 7
        %v1249 = vsub.s32 2, %v1248
        %v1250 = vrot.slane %v1218, %v1249
        %v1251 = vmul.f32 %v1244, %v1250
        %v1252 = vmul.f32 %v1246, %v1250
        %v1253 = vadd.f32 %v1241, %v1251
        %v1254 = vadd.f32 %v1242, %v1252
        %v1255 = vlaneseq
        %v1256 = vshrl.u32 %v1255, 7
        %v1257 = vsub.s32 3, %v1256
        %v1258 = vrot.slane %v1218, %v1257
        %v1259 = vmul.f32 %v1129, %v1258
        %v1260 = vmul.f32 %v1130, %v1258
        %v1261 = vadd.f32 %v1253, %v1259
        %v1262 = vadd.f32 %v1254, %v1260
        %1263 = vrot.lane.b32.xlu0 %v1129, 127
        %v1264 = vpop.permute.xlu0 %1263
        %1265 = vrot.lane.b32.xlu0 %v1130, 127
        %v1266 = vpop.permute.xlu0 %1265
        %v1267 = vlaneseq
        %v1268 = vshrl.u32 %v1267, 7
        %v1269 = vsub.s32 4, %v1268
        %v1270 = vrot.slane %v1218, %v1269
        %v1271 = vmul.f32 %v1264, %v1270
        %v1272 = vmul.f32 %v1266, %v1270
        %v1273 = vadd.f32 %v1261, %v1271
        %v1274 = vadd.f32 %v1262, %v1272
        %1275 = vrot.lane.b32.xlu0 %v1129, 126
        %v1276 = vpop.permute.xlu0 %1275
        %1277 = vrot.lane.b32.xlu0 %v1130, 126
        %v1278 = vpop.permute.xlu0 %1277
        %v1279 = vlaneseq
        %v1280 = vshrl.u32 %v1279, 7
        %v1281 = vsub.s32 5, %v1280
        %v1282 = vrot.slane %v1218, %v1281
        %v1283 = vmul.f32 %v1276, %v1282
        %v1284 = vmul.f32 %v1278, %v1282
        %v1285 = vadd.f32 %v1273, %v1283
        %v1286 = vadd.f32 %v1274, %v1284
        %1287 = vrot.lane.b32.xlu0 %v1129, 125
        %v1288 = vpop.permute.xlu0 %1287
        %1289 = vrot.lane.b32.xlu0 %v1130, 125
        %v1290 = vpop.permute.xlu0 %1289
        %v1291 = vlaneseq
        %v1292 = vshrl.u32 %v1291, 7
        %v1293 = vsub.s32 6, %v1292
        %v1294 = vrot.slane %v1218, %v1293
        %v1295 = vmul.f32 %v1288, %v1294
        %v1296 = vmul.f32 %v1290, %v1294
        %v1297 = vadd.f32 %v1285, %v1295
        %v1298 = vadd.f32 %v1286, %v1296
        %s1299 = scalar_lea.vmem %s1, 112
        %v1300 = vld [vmem:[%s1299] sm:$0x7f]
        %1301 = vrot.lane.b32.xlu0 %v1129, 123
        %v1302 = vpop.permute.xlu0 %1301
        %1303 = vrot.lane.b32.xlu0 %v1130, 123
        %v1304 = vpop.permute.xlu0 %1303
        %v1305 = vlaneseq
        %v1306 = vshrl.u32 %v1305, 7
        %v1307 = vsub.s32 0, %v1306
        %v1308 = vrot.slane %v1300, %v1307
        %v1309 = vmul.f32 %v1302, %v1308
        %v1310 = vmul.f32 %v1304, %v1308
        %v1311 = vadd.f32 %v1297, %v1309
        %v1312 = vadd.f32 %v1298, %v1310
        %1313 = vrot.lane.b32.xlu0 %v1129, 122
        %v1314 = vpop.permute.xlu0 %1313
        %1315 = vrot.lane.b32.xlu0 %v1130, 122
        %v1316 = vpop.permute.xlu0 %1315
        %v1317 = vlaneseq
        %v1318 = vshrl.u32 %v1317, 7
        %v1319 = vsub.s32 1, %v1318
        %v1320 = vrot.slane %v1300, %v1319
        %v1321 = vmul.f32 %v1314, %v1320
        %v1322 = vmul.f32 %v1316, %v1320
        %v1323 = vadd.f32 %v1311, %v1321
        %v1324 = vadd.f32 %v1312, %v1322
        %1325 = vrot.lane.b32.xlu0 %v1129, 121
        %v1326 = vpop.permute.xlu0 %1325
        %1327 = vrot.lane.b32.xlu0 %v1130, 121
        %v1328 = vpop.permute.xlu0 %1327
        %v1329 = vlaneseq
        %v1330 = vshrl.u32 %v1329, 7
        %v1331 = vsub.s32 2, %v1330
        %v1332 = vrot.slane %v1300, %v1331
        %v1333 = vmul.f32 %v1326, %v1332
        %v1334 = vmul.f32 %v1328, %v1332
        %v1335 = vadd.f32 %v1323, %v1333
        %v1336 = vadd.f32 %v1324, %v1334
        %1337 = vrot.lane.b32.xlu0 %v1129, 120
        %v1338 = vpop.permute.xlu0 %1337
        %1339 = vrot.lane.b32.xlu0 %v1130, 120
        %v1340 = vpop.permute.xlu0 %1339
        %v1341 = vlaneseq
        %v1342 = vshrl.u32 %v1341, 7
        %v1343 = vsub.s32 3, %v1342
        %v1344 = vrot.slane %v1300, %v1343
        %v1345 = vmul.f32 %v1338, %v1344
        %v1346 = vmul.f32 %v1340, %v1344
        %v1347 = vadd.f32 %v1335, %v1345
        %v1348 = vadd.f32 %v1336, %v1346
        %1349 = vrot.lane.b32.xlu0 %v1129, 119
        %v1350 = vpop.permute.xlu0 %1349
        %1351 = vrot.lane.b32.xlu0 %v1130, 119
        %v1352 = vpop.permute.xlu0 %1351
        %v1353 = vlaneseq
        %v1354 = vshrl.u32 %v1353, 7
        %v1355 = vsub.s32 4, %v1354
        %v1356 = vrot.slane %v1300, %v1355
        %v1357 = vmul.f32 %v1350, %v1356
        %v1358 = vmul.f32 %v1352, %v1356
        %v1359 = vadd.f32 %v1347, %v1357
        %v1360 = vadd.f32 %v1348, %v1358
        %1361 = vrot.lane.b32.xlu0 %v1129, 118
        %v1362 = vpop.permute.xlu0 %1361
        %1363 = vrot.lane.b32.xlu0 %v1130, 118
        %v1364 = vpop.permute.xlu0 %1363
        %v1365 = vlaneseq
        %v1366 = vshrl.u32 %v1365, 7
        %v1367 = vsub.s32 5, %v1366
        %v1368 = vrot.slane %v1300, %v1367
        %v1369 = vmul.f32 %v1362, %v1368
        %v1370 = vmul.f32 %v1364, %v1368
        %v1371 = vadd.f32 %v1359, %v1369
        %v1372 = vadd.f32 %v1360, %v1370
        %1373 = vrot.lane.b32.xlu0 %v1129, 117
        %v1374 = vpop.permute.xlu0 %1373
        %1375 = vrot.lane.b32.xlu0 %v1130, 117
        %v1376 = vpop.permute.xlu0 %1375
        %v1377 = vlaneseq
        %v1378 = vshrl.u32 %v1377, 7
        %v1379 = vsub.s32 6, %v1378
        %v1380 = vrot.slane %v1300, %v1379
        %v1381 = vmul.f32 %v1374, %v1380
        %v1382 = vmul.f32 %v1376, %v1380
        %v1383 = vadd.f32 %v1371, %v1381
        %v1384 = vadd.f32 %v1372, %v1382
        %v1385 = vld [vmem:[#allocation2 + $0xa] sm:$0xff]
        %v1386 = vld [vmem:[#allocation2 + $0x12] sm:$0xff]
        %s1387 = scalar_lea.vmem %s1, 120
        %v1388 = vld [vmem:[%s1387] sm:$0x7f]
        %1389 = vrot.lane.b32.xlu0 %v1385, 11
        %v1390 = vpop.permute.xlu0 %1389
        %1391 = vrot.lane.b32.xlu0 %v1386, 11
        %v1392 = vpop.permute.xlu0 %1391
        %v1393 = vlaneseq
        %v1394 = vshrl.u32 %v1393, 7
        %v1395 = vsub.s32 0, %v1394
        %v1396 = vrot.slane %v1388, %v1395
        %v1397 = vmul.f32 %v1390, %v1396
        %v1398 = vmul.f32 %v1392, %v1396
        %v1399 = vadd.f32 %v1383, %v1397
        %v1400 = vadd.f32 %v1384, %v1398
        %1401 = vrot.lane.b32.xlu0 %v1385, 10
        %v1402 = vpop.permute.xlu0 %1401
        %1403 = vrot.lane.b32.xlu0 %v1386, 10
        %v1404 = vpop.permute.xlu0 %1403
        %v1405 = vlaneseq
        %v1406 = vshrl.u32 %v1405, 7
        %v1407 = vsub.s32 1, %v1406
        %v1408 = vrot.slane %v1388, %v1407
        %v1409 = vmul.f32 %v1402, %v1408
        %v1410 = vmul.f32 %v1404, %v1408
        %v1411 = vadd.f32 %v1399, %v1409
        %v1412 = vadd.f32 %v1400, %v1410
        %1413 = vrot.lane.b32.xlu0 %v1385, 9
        %v1414 = vpop.permute.xlu0 %1413
        %1415 = vrot.lane.b32.xlu0 %v1386, 9
        %v1416 = vpop.permute.xlu0 %1415
        %v1417 = vlaneseq
        %v1418 = vshrl.u32 %v1417, 7
        %v1419 = vsub.s32 2, %v1418
        %v1420 = vrot.slane %v1388, %v1419
        %v1421 = vmul.f32 %v1414, %v1420
        %v1422 = vmul.f32 %v1416, %v1420
        %v1423 = vadd.f32 %v1411, %v1421
        %v1424 = vadd.f32 %v1412, %v1422
        %1425 = vrot.lane.b32.xlu0 %v1385, 8
        %v1426 = vpop.permute.xlu0 %1425
        %1427 = vrot.lane.b32.xlu0 %v1386, 8
        %v1428 = vpop.permute.xlu0 %1427
        %v1429 = vlaneseq
        %v1430 = vshrl.u32 %v1429, 7
        %v1431 = vsub.s32 3, %v1430
        %v1432 = vrot.slane %v1388, %v1431
        %v1433 = vmul.f32 %v1426, %v1432
        %v1434 = vmul.f32 %v1428, %v1432
        %v1435 = vadd.f32 %v1423, %v1433
        %v1436 = vadd.f32 %v1424, %v1434
        %1437 = vrot.lane.b32.xlu0 %v1385, 7
        %v1438 = vpop.permute.xlu0 %1437
        %1439 = vrot.lane.b32.xlu0 %v1386, 7
        %v1440 = vpop.permute.xlu0 %1439
        %v1441 = vlaneseq
        %v1442 = vshrl.u32 %v1441, 7
        %v1443 = vsub.s32 4, %v1442
        %v1444 = vrot.slane %v1388, %v1443
        %v1445 = vmul.f32 %v1438, %v1444
        %v1446 = vmul.f32 %v1440, %v1444
        %v1447 = vadd.f32 %v1435, %v1445
        %v1448 = vadd.f32 %v1436, %v1446
        %1449 = vrot.lane.b32.xlu0 %v1385, 6
        %v1450 = vpop.permute.xlu0 %1449
        %1451 = vrot.lane.b32.xlu0 %v1386, 6
        %v1452 = vpop.permute.xlu0 %1451
        %v1453 = vlaneseq
        %v1454 = vshrl.u32 %v1453, 7
        %v1455 = vsub.s32 5, %v1454
        %v1456 = vrot.slane %v1388, %v1455
        %v1457 = vmul.f32 %v1450, %v1456
        %v1458 = vmul.f32 %v1452, %v1456
        %v1459 = vadd.f32 %v1447, %v1457
        %v1460 = vadd.f32 %v1448, %v1458
        %1461 = vrot.lane.b32.xlu0 %v1385, 5
        %v1462 = vpop.permute.xlu0 %1461
        %1463 = vrot.lane.b32.xlu0 %v1386, 5
        %v1464 = vpop.permute.xlu0 %1463
        %v1465 = vlaneseq
        %v1466 = vshrl.u32 %v1465, 7
        %v1467 = vsub.s32 6, %v1466
        %v1468 = vrot.slane %v1388, %v1467
        %v1469 = vmul.f32 %v1462, %v1468
        %v1470 = vmul.f32 %v1464, %v1468
        %v1471 = vadd.f32 %v1459, %v1469
        %v1472 = vadd.f32 %v1460, %v1470
        %s1473 = scalar_lea.vmem %s1, 128
        %v1474 = vld [vmem:[%s1473] sm:$0x7f]
        %1475 = vrot.lane.b32.xlu0 %v1385, 3
        %v1476 = vpop.permute.xlu0 %1475
        %1477 = vrot.lane.b32.xlu0 %v1386, 3
        %v1478 = vpop.permute.xlu0 %1477
        %v1479 = vlaneseq
        %v1480 = vshrl.u32 %v1479, 7
        %v1481 = vsub.s32 0, %v1480
        %v1482 = vrot.slane %v1474, %v1481
        %v1483 = vmul.f32 %v1476, %v1482
        %v1484 = vmul.f32 %v1478, %v1482
        %v1485 = vadd.f32 %v1471, %v1483
        %v1486 = vadd.f32 %v1472, %v1484
        %1487 = vrot.lane.b32.xlu0 %v1385, 2
        %v1488 = vpop.permute.xlu0 %1487
        %1489 = vrot.lane.b32.xlu0 %v1386, 2
        %v1490 = vpop.permute.xlu0 %1489
        %v1491 = vlaneseq
        %v1492 = vshrl.u32 %v1491, 7
        %v1493 = vsub.s32 1, %v1492
        %v1494 = vrot.slane %v1474, %v1493
        %v1495 = vmul.f32 %v1488, %v1494
        %v1496 = vmul.f32 %v1490, %v1494
        %v1497 = vadd.f32 %v1485, %v1495
        %v1498 = vadd.f32 %v1486, %v1496
        %1499 = vrot.lane.b32.xlu0 %v1385, 1
        %v1500 = vpop.permute.xlu0 %1499
        %1501 = vrot.lane.b32.xlu0 %v1386, 1
        %v1502 = vpop.permute.xlu0 %1501
        %v1503 = vlaneseq
        %v1504 = vshrl.u32 %v1503, 7
        %v1505 = vsub.s32 2, %v1504
        %v1506 = vrot.slane %v1474, %v1505
        %v1507 = vmul.f32 %v1500, %v1506
        %v1508 = vmul.f32 %v1502, %v1506
        %v1509 = vadd.f32 %v1497, %v1507
        %v1510 = vadd.f32 %v1498, %v1508
        %v1511 = vlaneseq
        %v1512 = vshrl.u32 %v1511, 7
        %v1513 = vsub.s32 3, %v1512
        %v1514 = vrot.slane %v1474, %v1513
        %v1515 = vmul.f32 %v1385, %v1514
        %v1516 = vmul.f32 %v1386, %v1514
        %v1517 = vadd.f32 %v1509, %v1515
        %v1518 = vadd.f32 %v1510, %v1516
        %1519 = vrot.lane.b32.xlu0 %v1385, 127
        %v1520 = vpop.permute.xlu0 %1519
        %1521 = vrot.lane.b32.xlu0 %v1386, 127
        %v1522 = vpop.permute.xlu0 %1521
        %v1523 = vlaneseq
        %v1524 = vshrl.u32 %v1523, 7
        %v1525 = vsub.s32 4, %v1524
        %v1526 = vrot.slane %v1474, %v1525
        %v1527 = vmul.f32 %v1520, %v1526
        %v1528 = vmul.f32 %v1522, %v1526
        %v1529 = vadd.f32 %v1517, %v1527
        %v1530 = vadd.f32 %v1518, %v1528
        %1531 = vrot.lane.b32.xlu0 %v1385, 126
        %v1532 = vpop.permute.xlu0 %1531
        %1533 = vrot.lane.b32.xlu0 %v1386, 126
        %v1534 = vpop.permute.xlu0 %1533
        %v1535 = vlaneseq
        %v1536 = vshrl.u32 %v1535, 7
        %v1537 = vsub.s32 5, %v1536
        %v1538 = vrot.slane %v1474, %v1537
        %v1539 = vmul.f32 %v1532, %v1538
        %v1540 = vmul.f32 %v1534, %v1538
        %v1541 = vadd.f32 %v1529, %v1539
        %v1542 = vadd.f32 %v1530, %v1540
        %1543 = vrot.lane.b32.xlu0 %v1385, 125
        %v1544 = vpop.permute.xlu0 %1543
        %1545 = vrot.lane.b32.xlu0 %v1386, 125
        %v1546 = vpop.permute.xlu0 %1545
        %v1547 = vlaneseq
        %v1548 = vshrl.u32 %v1547, 7
        %v1549 = vsub.s32 6, %v1548
        %v1550 = vrot.slane %v1474, %v1549
        %v1551 = vmul.f32 %v1544, %v1550
        %v1552 = vmul.f32 %v1546, %v1550
        %v1553 = vadd.f32 %v1541, %v1551
        %v1554 = vadd.f32 %v1542, %v1552
        %s1555 = scalar_lea.vmem %s1, 136
        %v1556 = vld [vmem:[%s1555] sm:$0x7f]
        %1557 = vrot.lane.b32.xlu0 %v1385, 123
        %v1558 = vpop.permute.xlu0 %1557
        %1559 = vrot.lane.b32.xlu0 %v1386, 123
        %v1560 = vpop.permute.xlu0 %1559
        %v1561 = vlaneseq
        %v1562 = vshrl.u32 %v1561, 7
        %v1563 = vsub.s32 0, %v1562
        %v1564 = vrot.slane %v1556, %v1563
        %v1565 = vmul.f32 %v1558, %v1564
        %v1566 = vmul.f32 %v1560, %v1564
        %v1567 = vadd.f32 %v1553, %v1565
        %v1568 = vadd.f32 %v1554, %v1566
        %1569 = vrot.lane.b32.xlu0 %v1385, 122
        %v1570 = vpop.permute.xlu0 %1569
        %1571 = vrot.lane.b32.xlu0 %v1386, 122
        %v1572 = vpop.permute.xlu0 %1571
        %v1573 = vlaneseq
        %v1574 = vshrl.u32 %v1573, 7
        %v1575 = vsub.s32 1, %v1574
        %v1576 = vrot.slane %v1556, %v1575
        %v1577 = vmul.f32 %v1570, %v1576
        %v1578 = vmul.f32 %v1572, %v1576
        %v1579 = vadd.f32 %v1567, %v1577
        %v1580 = vadd.f32 %v1568, %v1578
        %1581 = vrot.lane.b32.xlu0 %v1385, 121
        %v1582 = vpop.permute.xlu0 %1581
        %1583 = vrot.lane.b32.xlu0 %v1386, 121
        %v1584 = vpop.permute.xlu0 %1583
        %v1585 = vlaneseq
        %v1586 = vshrl.u32 %v1585, 7
        %v1587 = vsub.s32 2, %v1586
        %v1588 = vrot.slane %v1556, %v1587
        %v1589 = vmul.f32 %v1582, %v1588
        %v1590 = vmul.f32 %v1584, %v1588
        %v1591 = vadd.f32 %v1579, %v1589
        %v1592 = vadd.f32 %v1580, %v1590
        %1593 = vrot.lane.b32.xlu0 %v1385, 120
        %v1594 = vpop.permute.xlu0 %1593
        %1595 = vrot.lane.b32.xlu0 %v1386, 120
        %v1596 = vpop.permute.xlu0 %1595
        %v1597 = vlaneseq
        %v1598 = vshrl.u32 %v1597, 7
        %v1599 = vsub.s32 3, %v1598
        %v1600 = vrot.slane %v1556, %v1599
        %v1601 = vmul.f32 %v1594, %v1600
        %v1602 = vmul.f32 %v1596, %v1600
        %v1603 = vadd.f32 %v1591, %v1601
        %v1604 = vadd.f32 %v1592, %v1602
        %1605 = vrot.lane.b32.xlu0 %v1385, 119
        %v1606 = vpop.permute.xlu0 %1605
        %1607 = vrot.lane.b32.xlu0 %v1386, 119
        %v1608 = vpop.permute.xlu0 %1607
        %v1609 = vlaneseq
        %v1610 = vshrl.u32 %v1609, 7
        %v1611 = vsub.s32 4, %v1610
        %v1612 = vrot.slane %v1556, %v1611
        %v1613 = vmul.f32 %v1606, %v1612
        %v1614 = vmul.f32 %v1608, %v1612
        %v1615 = vadd.f32 %v1603, %v1613
        %v1616 = vadd.f32 %v1604, %v1614
        %1617 = vrot.lane.b32.xlu0 %v1385, 118
        %v1618 = vpop.permute.xlu0 %1617
        %1619 = vrot.lane.b32.xlu0 %v1386, 118
        %v1620 = vpop.permute.xlu0 %1619
        %v1621 = vlaneseq
        %v1622 = vshrl.u32 %v1621, 7
        %v1623 = vsub.s32 5, %v1622
        %v1624 = vrot.slane %v1556, %v1623
        %v1625 = vmul.f32 %v1618, %v1624
        %v1626 = vmul.f32 %v1620, %v1624
        %v1627 = vadd.f32 %v1615, %v1625
        %v1628 = vadd.f32 %v1616, %v1626
        %1629 = vrot.lane.b32.xlu0 %v1385, 117
        %v1630 = vpop.permute.xlu0 %1629
        %1631 = vrot.lane.b32.xlu0 %v1386, 117
        %v1632 = vpop.permute.xlu0 %1631
        %v1633 = vlaneseq
        %v1634 = vshrl.u32 %v1633, 7
        %v1635 = vsub.s32 6, %v1634
        %v1636 = vrot.slane %v1556, %v1635
        %v1637 = vmul.f32 %v1630, %v1636
        %v1638 = vmul.f32 %v1632, %v1636
        %v1639 = vadd.f32 %v1627, %v1637
        %v1640 = vadd.f32 %v1628, %v1638
        %v1641 = vld [vmem:[#allocation3] sm:$0xff]
        %v1642 = vld [vmem:[#allocation3 + $0x8] sm:$0xff]
        %1645 = vrot.lane.b32.xlu0 %v1639, 96
        %v1646 = vpop.permute.xlu0 %1645
        %1647 = vrot.lane.b32.xlu0 %v1640, 96
        %v1648 = vpop.permute.xlu0 %1647
        %v1651 = vadd.f32 %v1641, %v1646
        %v1652 = vadd.f32 %v1642, %v1648
        %1653 = vst.msk [vmem:[#allocation3] sm:$0xff] %vm152, %v1651
        %1654 = vst.msk [vmem:[#allocation3 + $0x8] sm:$0xff] %vm152, %v1652
        %1655 = vst.msk [vmem:[#allocation2 + $0x8] sm:$0xff] %vm163, %v1639
        %1656 = vst.msk [vmem:[#allocation2 + $0x10] sm:$0xff] %vm163, %v1640
        %v1657 = vld [vmem:[#allocation2 + $0x4] sm:$0xff]
        %v1658 = vld [vmem:[#allocation2 + $0xc] sm:$0xff]
        %s1659 = scalar_lea.vmem %s1, 144
        %v1660 = vld [vmem:[%s1659] sm:$0x7f]
        %1661 = vrot.lane.b32.xlu0 %v1657, 19
        %v1662 = vpop.permute.xlu0 %1661
        %1663 = vrot.lane.b32.xlu0 %v1658, 19
        %v1664 = vpop.permute.xlu0 %1663
        %v1665 = vlaneseq
        %v1666 = vshrl.u32 %v1665, 7
        %v1667 = vsub.s32 0, %v1666
        %v1668 = vrot.slane %v1660, %v1667
        %v1669 = vmul.f32 %v1662, %v1668
        %v1670 = vmul.f32 %v1664, %v1668
        %1671 = vrot.lane.b32.xlu0 %v1657, 18
        %v1672 = vpop.permute.xlu0 %1671
        %1673 = vrot.lane.b32.xlu0 %v1658, 18
        %v1674 = vpop.permute.xlu0 %1673
        %v1675 = vlaneseq
        %v1676 = vshrl.u32 %v1675, 7
        %v1677 = vsub.s32 1, %v1676
        %v1678 = vrot.slane %v1660, %v1677
        %v1679 = vmul.f32 %v1672, %v1678
        %v1680 = vmul.f32 %v1674, %v1678
        %v1681 = vadd.f32 %v1669, %v1679
        %v1682 = vadd.f32 %v1670, %v1680
        %1683 = vrot.lane.b32.xlu0 %v1657, 17
        %v1684 = vpop.permute.xlu0 %1683
        %1685 = vrot.lane.b32.xlu0 %v1658, 17
        %v1686 = vpop.permute.xlu0 %1685
        %v1687 = vlaneseq
        %v1688 = vshrl.u32 %v1687, 7
        %v1689 = vsub.s32 2, %v1688
        %v1690 = vrot.slane %v1660, %v1689
        %v1691 = vmul.f32 %v1684, %v1690
        %v1692 = vmul.f32 %v1686, %v1690
        %v1693 = vadd.f32 %v1681, %v1691
        %v1694 = vadd.f32 %v1682, %v1692
        %1695 = vrot.lane.b32.xlu0 %v1657, 16
        %v1696 = vpop.permute.xlu0 %1695
        %1697 = vrot.lane.b32.xlu0 %v1658, 16
        %v1698 = vpop.permute.xlu0 %1697
        %v1699 = vlaneseq
        %v1700 = vshrl.u32 %v1699, 7
        %v1701 = vsub.s32 3, %v1700
        %v1702 = vrot.slane %v1660, %v1701
        %v1703 = vmul.f32 %v1696, %v1702
        %v1704 = vmul.f32 %v1698, %v1702
        %v1705 = vadd.f32 %v1693, %v1703
        %v1706 = vadd.f32 %v1694, %v1704
        %1707 = vrot.lane.b32.xlu0 %v1657, 15
        %v1708 = vpop.permute.xlu0 %1707
        %1709 = vrot.lane.b32.xlu0 %v1658, 15
        %v1710 = vpop.permute.xlu0 %1709
        %v1711 = vlaneseq
        %v1712 = vshrl.u32 %v1711, 7
        %v1713 = vsub.s32 4, %v1712
        %v1714 = vrot.slane %v1660, %v1713
        %v1715 = vmul.f32 %v1708, %v1714
        %v1716 = vmul.f32 %v1710, %v1714
        %v1717 = vadd.f32 %v1705, %v1715
        %v1718 = vadd.f32 %v1706, %v1716
        %1719 = vrot.lane.b32.xlu0 %v1657, 14
        %v1720 = vpop.permute.xlu0 %1719
        %1721 = vrot.lane.b32.xlu0 %v1658, 14
        %v1722 = vpop.permute.xlu0 %1721
        %v1723 = vlaneseq
        %v1724 = vshrl.u32 %v1723, 7
        %v1725 = vsub.s32 5, %v1724
        %v1726 = vrot.slane %v1660, %v1725
        %v1727 = vmul.f32 %v1720, %v1726
        %v1728 = vmul.f32 %v1722, %v1726
        %v1729 = vadd.f32 %v1717, %v1727
        %v1730 = vadd.f32 %v1718, %v1728
        %1731 = vrot.lane.b32.xlu0 %v1657, 13
        %v1732 = vpop.permute.xlu0 %1731
        %1733 = vrot.lane.b32.xlu0 %v1658, 13
        %v1734 = vpop.permute.xlu0 %1733
        %v1735 = vlaneseq
        %v1736 = vshrl.u32 %v1735, 7
        %v1737 = vsub.s32 6, %v1736
        %v1738 = vrot.slane %v1660, %v1737
        %v1739 = vmul.f32 %v1732, %v1738
        %v1740 = vmul.f32 %v1734, %v1738
        %v1741 = vadd.f32 %v1729, %v1739
        %v1742 = vadd.f32 %v1730, %v1740
        %s1743 = scalar_lea.vmem %s1, 152
        %v1744 = vld [vmem:[%s1743] sm:$0x7f]
        %1745 = vrot.lane.b32.xlu0 %v1657, 3
        %v1746 = vpop.permute.xlu0 %1745
        %1747 = vrot.lane.b32.xlu0 %v1658, 3
        %v1748 = vpop.permute.xlu0 %1747
        %v1749 = vlaneseq
        %v1750 = vshrl.u32 %v1749, 7
        %v1751 = vsub.s32 0, %v1750
        %v1752 = vrot.slane %v1744, %v1751
        %v1753 = vmul.f32 %v1746, %v1752
        %v1754 = vmul.f32 %v1748, %v1752
        %v1755 = vadd.f32 %v1741, %v1753
        %v1756 = vadd.f32 %v1742, %v1754
        %1757 = vrot.lane.b32.xlu0 %v1657, 2
        %v1758 = vpop.permute.xlu0 %1757
        %1759 = vrot.lane.b32.xlu0 %v1658, 2
        %v1760 = vpop.permute.xlu0 %1759
        %v1761 = vlaneseq
        %v1762 = vshrl.u32 %v1761, 7
        %v1763 = vsub.s32 1, %v1762
        %v1764 = vrot.slane %v1744, %v1763
        %v1765 = vmul.f32 %v1758, %v1764
        %v1766 = vmul.f32 %v1760, %v1764
        %v1767 = vadd.f32 %v1755, %v1765
        %v1768 = vadd.f32 %v1756, %v1766
        %1769 = vrot.lane.b32.xlu0 %v1657, 1
        %v1770 = vpop.permute.xlu0 %1769
        %1771 = vrot.lane.b32.xlu0 %v1658, 1
        %v1772 = vpop.permute.xlu0 %1771
        %v1773 = vlaneseq
        %v1774 = vshrl.u32 %v1773, 7
        %v1775 = vsub.s32 2, %v1774
        %v1776 = vrot.slane %v1744, %v1775
        %v1777 = vmul.f32 %v1770, %v1776
        %v1778 = vmul.f32 %v1772, %v1776
        %v1779 = vadd.f32 %v1767, %v1777
        %v1780 = vadd.f32 %v1768, %v1778
        %v1781 = vlaneseq
        %v1782 = vshrl.u32 %v1781, 7
        %v1783 = vsub.s32 3, %v1782
        %v1784 = vrot.slane %v1744, %v1783
        %v1785 = vmul.f32 %v1657, %v1784
        %v1786 = vmul.f32 %v1658, %v1784
        %v1787 = vadd.f32 %v1779, %v1785
        %v1788 = vadd.f32 %v1780, %v1786
        %1789 = vrot.lane.b32.xlu0 %v1657, 127
        %v1790 = vpop.permute.xlu0 %1789
        %1791 = vrot.lane.b32.xlu0 %v1658, 127
        %v1792 = vpop.permute.xlu0 %1791
        %v1793 = vlaneseq
        %v1794 = vshrl.u32 %v1793, 7
        %v1795 = vsub.s32 4, %v1794
        %v1796 = vrot.slane %v1744, %v1795
        %v1797 = vmul.f32 %v1790, %v1796
        %v1798 = vmul.f32 %v1792, %v1796
        %v1799 = vadd.f32 %v1787, %v1797
        %v1800 = vadd.f32 %v1788, %v1798
        %1801 = vrot.lane.b32.xlu0 %v1657, 126
        %v1802 = vpop.permute.xlu0 %1801
        %1803 = vrot.lane.b32.xlu0 %v1658, 126
        %v1804 = vpop.permute.xlu0 %1803
        %v1805 = vlaneseq
        %v1806 = vshrl.u32 %v1805, 7
        %v1807 = vsub.s32 5, %v1806
        %v1808 = vrot.slane %v1744, %v1807
        %v1809 = vmul.f32 %v1802, %v1808
        %v1810 = vmul.f32 %v1804, %v1808
        %v1811 = vadd.f32 %v1799, %v1809
        %v1812 = vadd.f32 %v1800, %v1810
        %1813 = vrot.lane.b32.xlu0 %v1657, 125
        %v1814 = vpop.permute.xlu0 %1813
        %1815 = vrot.lane.b32.xlu0 %v1658, 125
        %v1816 = vpop.permute.xlu0 %1815
        %v1817 = vlaneseq
        %v1818 = vshrl.u32 %v1817, 7
        %v1819 = vsub.s32 6, %v1818
        %v1820 = vrot.slane %v1744, %v1819
        %v1821 = vmul.f32 %v1814, %v1820
        %v1822 = vmul.f32 %v1816, %v1820
        %v1823 = vadd.f32 %v1811, %v1821
        %v1824 = vadd.f32 %v1812, %v1822
        %s1825 = scalar_lea.vmem %s1, 160
        %v1826 = vld [vmem:[%s1825] sm:$0x7f]
        %1827 = vrot.lane.b32.xlu0 %v1657, 115
        %v1828 = vpop.permute.xlu0 %1827
        %1829 = vrot.lane.b32.xlu0 %v1658, 115
        %v1830 = vpop.permute.xlu0 %1829
        %v1831 = vlaneseq
        %v1832 = vshrl.u32 %v1831, 7
        %v1833 = vsub.s32 0, %v1832
        %v1834 = vrot.slane %v1826, %v1833
        %v1835 = vmul.f32 %v1828, %v1834
        %v1836 = vmul.f32 %v1830, %v1834
        %v1837 = vadd.f32 %v1823, %v1835
        %v1838 = vadd.f32 %v1824, %v1836
        %1839 = vrot.lane.b32.xlu0 %v1657, 114
        %v1840 = vpop.permute.xlu0 %1839
        %1841 = vrot.lane.b32.xlu0 %v1658, 114
        %v1842 = vpop.permute.xlu0 %1841
        %v1843 = vlaneseq
        %v1844 = vshrl.u32 %v1843, 7
        %v1845 = vsub.s32 1, %v1844
        %v1846 = vrot.slane %v1826, %v1845
        %v1847 = vmul.f32 %v1840, %v1846
        %v1848 = vmul.f32 %v1842, %v1846
        %v1849 = vadd.f32 %v1837, %v1847
        %v1850 = vadd.f32 %v1838, %v1848
        %1851 = vrot.lane.b32.xlu0 %v1657, 113
        %v1852 = vpop.permute.xlu0 %1851
        %1853 = vrot.lane.b32.xlu0 %v1658, 113
        %v1854 = vpop.permute.xlu0 %1853
        %v1855 = vlaneseq
        %v1856 = vshrl.u32 %v1855, 7
        %v1857 = vsub.s32 2, %v1856
        %v1858 = vrot.slane %v1826, %v1857
        %v1859 = vmul.f32 %v1852, %v1858
        %v1860 = vmul.f32 %v1854, %v1858
        %v1861 = vadd.f32 %v1849, %v1859
        %v1862 = vadd.f32 %v1850, %v1860
        %1863 = vrot.lane.b32.xlu0 %v1657, 112
        %v1864 = vpop.permute.xlu0 %1863
        %1865 = vrot.lane.b32.xlu0 %v1658, 112
        %v1866 = vpop.permute.xlu0 %1865
        %v1867 = vlaneseq
        %v1868 = vshrl.u32 %v1867, 7
        %v1869 = vsub.s32 3, %v1868
        %v1870 = vrot.slane %v1826, %v1869
        %v1871 = vmul.f32 %v1864, %v1870
        %v1872 = vmul.f32 %v1866, %v1870
        %v1873 = vadd.f32 %v1861, %v1871
        %v1874 = vadd.f32 %v1862, %v1872
        %1875 = vrot.lane.b32.xlu0 %v1657, 111
        %v1876 = vpop.permute.xlu0 %1875
        %1877 = vrot.lane.b32.xlu0 %v1658, 111
        %v1878 = vpop.permute.xlu0 %1877
        %v1879 = vlaneseq
        %v1880 = vshrl.u32 %v1879, 7
        %v1881 = vsub.s32 4, %v1880
        %v1882 = vrot.slane %v1826, %v1881
        %v1883 = vmul.f32 %v1876, %v1882
        %v1884 = vmul.f32 %v1878, %v1882
        %v1885 = vadd.f32 %v1873, %v1883
        %v1886 = vadd.f32 %v1874, %v1884
        %1887 = vrot.lane.b32.xlu0 %v1657, 110
        %v1888 = vpop.permute.xlu0 %1887
        %1889 = vrot.lane.b32.xlu0 %v1658, 110
        %v1890 = vpop.permute.xlu0 %1889
        %v1891 = vlaneseq
        %v1892 = vshrl.u32 %v1891, 7
        %v1893 = vsub.s32 5, %v1892
        %v1894 = vrot.slane %v1826, %v1893
        %v1895 = vmul.f32 %v1888, %v1894
        %v1896 = vmul.f32 %v1890, %v1894
        %v1897 = vadd.f32 %v1885, %v1895
        %v1898 = vadd.f32 %v1886, %v1896
        %1899 = vrot.lane.b32.xlu0 %v1657, 109
        %v1900 = vpop.permute.xlu0 %1899
        %1901 = vrot.lane.b32.xlu0 %v1658, 109
        %v1902 = vpop.permute.xlu0 %1901
        %v1903 = vlaneseq
        %v1904 = vshrl.u32 %v1903, 7
        %v1905 = vsub.s32 6, %v1904
        %v1906 = vrot.slane %v1826, %v1905
        %v1907 = vmul.f32 %v1900, %v1906
        %v1908 = vmul.f32 %v1902, %v1906
        %v1909 = vadd.f32 %v1897, %v1907
        %v1910 = vadd.f32 %v1898, %v1908
        %v1911 = vld [vmem:[#allocation2 + $0x8] sm:$0xff]
        %v1912 = vld [vmem:[#allocation2 + $0x10] sm:$0xff]
        %s1913 = scalar_lea.vmem %s1, 168
        %v1914 = vld [vmem:[%s1913] sm:$0x7f]
        %1915 = vrot.lane.b32.xlu0 %v1911, 19
        %v1916 = vpop.permute.xlu0 %1915
        %1917 = vrot.lane.b32.xlu0 %v1912, 19
        %v1918 = vpop.permute.xlu0 %1917
        %v1919 = vlaneseq
        %v1920 = vshrl.u32 %v1919, 7
        %v1921 = vsub.s32 0, %v1920
        %v1922 = vrot.slane %v1914, %v1921
        %v1923 = vmul.f32 %v1916, %v1922
        %v1924 = vmul.f32 %v1918, %v1922
        %v1925 = vadd.f32 %v1909, %v1923
        %v1926 = vadd.f32 %v1910, %v1924
        %1927 = vrot.lane.b32.xlu0 %v1911, 18
        %v1928 = vpop.permute.xlu0 %1927
        %1929 = vrot.lane.b32.xlu0 %v1912, 18
        %v1930 = vpop.permute.xlu0 %1929
        %v1931 = vlaneseq
        %v1932 = vshrl.u32 %v1931, 7
        %v1933 = vsub.s32 1, %v1932
        %v1934 = vrot.slane %v1914, %v1933
        %v1935 = vmul.f32 %v1928, %v1934
        %v1936 = vmul.f32 %v1930, %v1934
        %v1937 = vadd.f32 %v1925, %v1935
        %v1938 = vadd.f32 %v1926, %v1936
        %1939 = vrot.lane.b32.xlu0 %v1911, 17
        %v1940 = vpop.permute.xlu0 %1939
        %1941 = vrot.lane.b32.xlu0 %v1912, 17
        %v1942 = vpop.permute.xlu0 %1941
        %v1943 = vlaneseq
        %v1944 = vshrl.u32 %v1943, 7
        %v1945 = vsub.s32 2, %v1944
        %v1946 = vrot.slane %v1914, %v1945
        %v1947 = vmul.f32 %v1940, %v1946
        %v1948 = vmul.f32 %v1942, %v1946
        %v1949 = vadd.f32 %v1937, %v1947
        %v1950 = vadd.f32 %v1938, %v1948
        %1951 = vrot.lane.b32.xlu0 %v1911, 16
        %v1952 = vpop.permute.xlu0 %1951
        %1953 = vrot.lane.b32.xlu0 %v1912, 16
        %v1954 = vpop.permute.xlu0 %1953
        %v1955 = vlaneseq
        %v1956 = vshrl.u32 %v1955, 7
        %v1957 = vsub.s32 3, %v1956
        %v1958 = vrot.slane %v1914, %v1957
        %v1959 = vmul.f32 %v1952, %v1958
        %v1960 = vmul.f32 %v1954, %v1958
        %v1961 = vadd.f32 %v1949, %v1959
        %v1962 = vadd.f32 %v1950, %v1960
        %1963 = vrot.lane.b32.xlu0 %v1911, 15
        %v1964 = vpop.permute.xlu0 %1963
        %1965 = vrot.lane.b32.xlu0 %v1912, 15
        %v1966 = vpop.permute.xlu0 %1965
        %v1967 = vlaneseq
        %v1968 = vshrl.u32 %v1967, 7
        %v1969 = vsub.s32 4, %v1968
        %v1970 = vrot.slane %v1914, %v1969
        %v1971 = vmul.f32 %v1964, %v1970
        %v1972 = vmul.f32 %v1966, %v1970
        %v1973 = vadd.f32 %v1961, %v1971
        %v1974 = vadd.f32 %v1962, %v1972
        %1975 = vrot.lane.b32.xlu0 %v1911, 14
        %v1976 = vpop.permute.xlu0 %1975
        %1977 = vrot.lane.b32.xlu0 %v1912, 14
        %v1978 = vpop.permute.xlu0 %1977
        %v1979 = vlaneseq
        %v1980 = vshrl.u32 %v1979, 7
        %v1981 = vsub.s32 5, %v1980
        %v1982 = vrot.slane %v1914, %v1981
        %v1983 = vmul.f32 %v1976, %v1982
        %v1984 = vmul.f32 %v1978, %v1982
        %v1985 = vadd.f32 %v1973, %v1983
        %v1986 = vadd.f32 %v1974, %v1984
        %1987 = vrot.lane.b32.xlu0 %v1911, 13
        %v1988 = vpop.permute.xlu0 %1987
        %1989 = vrot.lane.b32.xlu0 %v1912, 13
        %v1990 = vpop.permute.xlu0 %1989
        %v1991 = vlaneseq
        %v1992 = vshrl.u32 %v1991, 7
        %v1993 = vsub.s32 6, %v1992
        %v1994 = vrot.slane %v1914, %v1993
        %v1995 = vmul.f32 %v1988, %v1994
        %v1996 = vmul.f32 %v1990, %v1994
        %v1997 = vadd.f32 %v1985, %v1995
        %v1998 = vadd.f32 %v1986, %v1996
        %s1999 = scalar_lea.vmem %s1, 176
        %v2000 = vld [vmem:[%s1999] sm:$0x7f]
        %2001 = vrot.lane.b32.xlu0 %v1911, 3
        %v2002 = vpop.permute.xlu0 %2001
        %2003 = vrot.lane.b32.xlu0 %v1912, 3
        %v2004 = vpop.permute.xlu0 %2003
        %v2005 = vlaneseq
        %v2006 = vshrl.u32 %v2005, 7
        %v2007 = vsub.s32 0, %v2006
        %v2008 = vrot.slane %v2000, %v2007
        %v2009 = vmul.f32 %v2002, %v2008
        %v2010 = vmul.f32 %v2004, %v2008
        %v2011 = vadd.f32 %v1997, %v2009
        %v2012 = vadd.f32 %v1998, %v2010
        %2013 = vrot.lane.b32.xlu0 %v1911, 2
        %v2014 = vpop.permute.xlu0 %2013
        %2015 = vrot.lane.b32.xlu0 %v1912, 2
        %v2016 = vpop.permute.xlu0 %2015
        %v2017 = vlaneseq
        %v2018 = vshrl.u32 %v2017, 7
        %v2019 = vsub.s32 1, %v2018
        %v2020 = vrot.slane %v2000, %v2019
        %v2021 = vmul.f32 %v2014, %v2020
        %v2022 = vmul.f32 %v2016, %v2020
        %v2023 = vadd.f32 %v2011, %v2021
        %v2024 = vadd.f32 %v2012, %v2022
        %2025 = vrot.lane.b32.xlu0 %v1911, 1
        %v2026 = vpop.permute.xlu0 %2025
        %2027 = vrot.lane.b32.xlu0 %v1912, 1
        %v2028 = vpop.permute.xlu0 %2027
        %v2029 = vlaneseq
        %v2030 = vshrl.u32 %v2029, 7
        %v2031 = vsub.s32 2, %v2030
        %v2032 = vrot.slane %v2000, %v2031
        %v2033 = vmul.f32 %v2026, %v2032
        %v2034 = vmul.f32 %v2028, %v2032
        %v2035 = vadd.f32 %v2023, %v2033
        %v2036 = vadd.f32 %v2024, %v2034
        %v2037 = vlaneseq
        %v2038 = vshrl.u32 %v2037, 7
        %v2039 = vsub.s32 3, %v2038
        %v2040 = vrot.slane %v2000, %v2039
        %v2041 = vmul.f32 %v1911, %v2040
        %v2042 = vmul.f32 %v1912, %v2040
        %v2043 = vadd.f32 %v2035, %v2041
        %v2044 = vadd.f32 %v2036, %v2042
        %2045 = vrot.lane.b32.xlu0 %v1911, 127
        %v2046 = vpop.permute.xlu0 %2045
        %2047 = vrot.lane.b32.xlu0 %v1912, 127
        %v2048 = vpop.permute.xlu0 %2047
        %v2049 = vlaneseq
        %v2050 = vshrl.u32 %v2049, 7
        %v2051 = vsub.s32 4, %v2050
        %v2052 = vrot.slane %v2000, %v2051
        %v2053 = vmul.f32 %v2046, %v2052
        %v2054 = vmul.f32 %v2048, %v2052
        %v2055 = vadd.f32 %v2043, %v2053
        %v2056 = vadd.f32 %v2044, %v2054
        %2057 = vrot.lane.b32.xlu0 %v1911, 126
        %v2058 = vpop.permute.xlu0 %2057
        %2059 = vrot.lane.b32.xlu0 %v1912, 126
        %v2060 = vpop.permute.xlu0 %2059
        %v2061 = vlaneseq
        %v2062 = vshrl.u32 %v2061, 7
        %v2063 = vsub.s32 5, %v2062
        %v2064 = vrot.slane %v2000, %v2063
        %v2065 = vmul.f32 %v2058, %v2064
        %v2066 = vmul.f32 %v2060, %v2064
        %v2067 = vadd.f32 %v2055, %v2065
        %v2068 = vadd.f32 %v2056, %v2066
        %2069 = vrot.lane.b32.xlu0 %v1911, 125
        %v2070 = vpop.permute.xlu0 %2069
        %2071 = vrot.lane.b32.xlu0 %v1912, 125
        %v2072 = vpop.permute.xlu0 %2071
        %v2073 = vlaneseq
        %v2074 = vshrl.u32 %v2073, 7
        %v2075 = vsub.s32 6, %v2074
        %v2076 = vrot.slane %v2000, %v2075
        %v2077 = vmul.f32 %v2070, %v2076
        %v2078 = vmul.f32 %v2072, %v2076
        %v2079 = vadd.f32 %v2067, %v2077
        %v2080 = vadd.f32 %v2068, %v2078
        %s2081 = scalar_lea.vmem %s1, 184
        %v2082 = vld [vmem:[%s2081] sm:$0x7f]
        %2083 = vrot.lane.b32.xlu0 %v1911, 115
        %v2084 = vpop.permute.xlu0 %2083
        %2085 = vrot.lane.b32.xlu0 %v1912, 115
        %v2086 = vpop.permute.xlu0 %2085
        %v2087 = vlaneseq
        %v2088 = vshrl.u32 %v2087, 7
        %v2089 = vsub.s32 0, %v2088
        %v2090 = vrot.slane %v2082, %v2089
        %v2091 = vmul.f32 %v2084, %v2090
        %v2092 = vmul.f32 %v2086, %v2090
        %v2093 = vadd.f32 %v2079, %v2091
        %v2094 = vadd.f32 %v2080, %v2092
        %2095 = vrot.lane.b32.xlu0 %v1911, 114
        %v2096 = vpop.permute.xlu0 %2095
        %2097 = vrot.lane.b32.xlu0 %v1912, 114
        %v2098 = vpop.permute.xlu0 %2097
        %v2099 = vlaneseq
        %v2100 = vshrl.u32 %v2099, 7
        %v2101 = vsub.s32 1, %v2100
        %v2102 = vrot.slane %v2082, %v2101
        %v2103 = vmul.f32 %v2096, %v2102
        %v2104 = vmul.f32 %v2098, %v2102
        %v2105 = vadd.f32 %v2093, %v2103
        %v2106 = vadd.f32 %v2094, %v2104
        %2107 = vrot.lane.b32.xlu0 %v1911, 113
        %v2108 = vpop.permute.xlu0 %2107
        %2109 = vrot.lane.b32.xlu0 %v1912, 113
        %v2110 = vpop.permute.xlu0 %2109
        %v2111 = vlaneseq
        %v2112 = vshrl.u32 %v2111, 7
        %v2113 = vsub.s32 2, %v2112
        %v2114 = vrot.slane %v2082, %v2113
        %v2115 = vmul.f32 %v2108, %v2114
        %v2116 = vmul.f32 %v2110, %v2114
        %v2117 = vadd.f32 %v2105, %v2115
        %v2118 = vadd.f32 %v2106, %v2116
        %2119 = vrot.lane.b32.xlu0 %v1911, 112
        %v2120 = vpop.permute.xlu0 %2119
        %2121 = vrot.lane.b32.xlu0 %v1912, 112
        %v2122 = vpop.permute.xlu0 %2121
        %v2123 = vlaneseq
        %v2124 = vshrl.u32 %v2123, 7
        %v2125 = vsub.s32 3, %v2124
        %v2126 = vrot.slane %v2082, %v2125
        %v2127 = vmul.f32 %v2120, %v2126
        %v2128 = vmul.f32 %v2122, %v2126
        %v2129 = vadd.f32 %v2117, %v2127
        %v2130 = vadd.f32 %v2118, %v2128
        %2131 = vrot.lane.b32.xlu0 %v1911, 111
        %v2132 = vpop.permute.xlu0 %2131
        %2133 = vrot.lane.b32.xlu0 %v1912, 111
        %v2134 = vpop.permute.xlu0 %2133
        %v2135 = vlaneseq
        %v2136 = vshrl.u32 %v2135, 7
        %v2137 = vsub.s32 4, %v2136
        %v2138 = vrot.slane %v2082, %v2137
        %v2139 = vmul.f32 %v2132, %v2138
        %v2140 = vmul.f32 %v2134, %v2138
        %v2141 = vadd.f32 %v2129, %v2139
        %v2142 = vadd.f32 %v2130, %v2140
        %2143 = vrot.lane.b32.xlu0 %v1911, 110
        %v2144 = vpop.permute.xlu0 %2143
        %2145 = vrot.lane.b32.xlu0 %v1912, 110
        %v2146 = vpop.permute.xlu0 %2145
        %v2147 = vlaneseq
        %v2148 = vshrl.u32 %v2147, 7
        %v2149 = vsub.s32 5, %v2148
        %v2150 = vrot.slane %v2082, %v2149
        %v2151 = vmul.f32 %v2144, %v2150
        %v2152 = vmul.f32 %v2146, %v2150
        %v2153 = vadd.f32 %v2141, %v2151
        %v2154 = vadd.f32 %v2142, %v2152
        %2155 = vrot.lane.b32.xlu0 %v1911, 109
        %v2156 = vpop.permute.xlu0 %2155
        %2157 = vrot.lane.b32.xlu0 %v1912, 109
        %v2158 = vpop.permute.xlu0 %2157
        %v2159 = vlaneseq
        %v2160 = vshrl.u32 %v2159, 7
        %v2161 = vsub.s32 6, %v2160
        %v2162 = vrot.slane %v2082, %v2161
        %v2163 = vmul.f32 %v2156, %v2162
        %v2164 = vmul.f32 %v2158, %v2162
        %v2165 = vadd.f32 %v2153, %v2163
        %v2166 = vadd.f32 %v2154, %v2164
        %v2167 = vld [vmem:[#allocation2 + $0x14] sm:$0xff]
        %s2168 = scalar_lea.vmem %s1, 192
        %v2169 = vld [vmem:[%s2168] sm:$0x7f]
        %2170 = vrot.lane.b32.xlu0 %v2167, 19
        %v2171 = vpop.permute.xlu0 %2170
        %v2172 = vlaneseq
        %v2173 = vshrl.u32 %v2172, 7
        %v2174 = vsub.s32 0, %v2173
        %v2175 = vrot.slane %v2169, %v2174
        %v2176 = vmul.f32 %v1664, %v2175
        %v2177 = vmul.f32 %v2171, %v2175
        %v2178 = vadd.f32 %v2165, %v2176
        %v2179 = vadd.f32 %v2166, %v2177
        %2180 = vrot.lane.b32.xlu0 %v2167, 18
        %v2181 = vpop.permute.xlu0 %2180
        %v2182 = vlaneseq
        %v2183 = vshrl.u32 %v2182, 7
        %v2184 = vsub.s32 1, %v2183
        %v2185 = vrot.slane %v2169, %v2184
        %v2186 = vmul.f32 %v1674, %v2185
        %v2187 = vmul.f32 %v2181, %v2185
        %v2188 = vadd.f32 %v2178, %v2186
        %v2189 = vadd.f32 %v2179, %v2187
        %2190 = vrot.lane.b32.xlu0 %v2167, 17
        %v2191 = vpop.permute.xlu0 %2190
        %v2192 = vlaneseq
        %v2193 = vshrl.u32 %v2192, 7
        %v2194 = vsub.s32 2, %v2193
        %v2195 = vrot.slane %v2169, %v2194
        %v2196 = vmul.f32 %v1686, %v2195
        %v2197 = vmul.f32 %v2191, %v2195
        %v2198 = vadd.f32 %v2188, %v2196
        %v2199 = vadd.f32 %v2189, %v2197
        %2200 = vrot.lane.b32.xlu0 %v2167, 16
        %v2201 = vpop.permute.xlu0 %2200
        %v2202 = vlaneseq
        %v2203 = vshrl.u32 %v2202, 7
        %v2204 = vsub.s32 3, %v2203
        %v2205 = vrot.slane %v2169, %v2204
        %v2206 = vmul.f32 %v1698, %v2205
        %v2207 = vmul.f32 %v2201, %v2205
        %v2208 = vadd.f32 %v2198, %v2206
        %v2209 = vadd.f32 %v2199, %v2207
        %2210 = vrot.lane.b32.xlu0 %v2167, 15
        %v2211 = vpop.permute.xlu0 %2210
        %v2212 = vlaneseq
        %v2213 = vshrl.u32 %v2212, 7
        %v2214 = vsub.s32 4, %v2213
        %v2215 = vrot.slane %v2169, %v2214
        %v2216 = vmul.f32 %v1710, %v2215
        %v2217 = vmul.f32 %v2211, %v2215
        %v2218 = vadd.f32 %v2208, %v2216
        %v2219 = vadd.f32 %v2209, %v2217
        %2220 = vrot.lane.b32.xlu0 %v2167, 14
        %v2221 = vpop.permute.xlu0 %2220
        %v2222 = vlaneseq
        %v2223 = vshrl.u32 %v2222, 7
        %v2224 = vsub.s32 5, %v2223
        %v2225 = vrot.slane %v2169, %v2224
        %v2226 = vmul.f32 %v1722, %v2225
        %v2227 = vmul.f32 %v2221, %v2225
        %v2228 = vadd.f32 %v2218, %v2226
        %v2229 = vadd.f32 %v2219, %v2227
        %2230 = vrot.lane.b32.xlu0 %v2167, 13
        %v2231 = vpop.permute.xlu0 %2230
        %v2232 = vlaneseq
        %v2233 = vshrl.u32 %v2232, 7
        %v2234 = vsub.s32 6, %v2233
        %v2235 = vrot.slane %v2169, %v2234
        %v2236 = vmul.f32 %v1734, %v2235
        %v2237 = vmul.f32 %v2231, %v2235
        %v2238 = vadd.f32 %v2228, %v2236
        %v2239 = vadd.f32 %v2229, %v2237
        %s2240 = scalar_lea.vmem %s1, 200
        %v2241 = vld [vmem:[%s2240] sm:$0x7f]
        %2242 = vrot.lane.b32.xlu0 %v2167, 3
        %v2243 = vpop.permute.xlu0 %2242
        %v2244 = vlaneseq
        %v2245 = vshrl.u32 %v2244, 7
        %v2246 = vsub.s32 0, %v2245
        %v2247 = vrot.slane %v2241, %v2246
        %v2248 = vmul.f32 %v1748, %v2247
        %v2249 = vmul.f32 %v2243, %v2247
        %v2250 = vadd.f32 %v2238, %v2248
        %v2251 = vadd.f32 %v2239, %v2249
        %2252 = vrot.lane.b32.xlu0 %v2167, 2
        %v2253 = vpop.permute.xlu0 %2252
        %v2254 = vlaneseq
        %v2255 = vshrl.u32 %v2254, 7
        %v2256 = vsub.s32 1, %v2255
        %v2257 = vrot.slane %v2241, %v2256
        %v2258 = vmul.f32 %v1760, %v2257
        %v2259 = vmul.f32 %v2253, %v2257
        %v2260 = vadd.f32 %v2250, %v2258
        %v2261 = vadd.f32 %v2251, %v2259
        %2262 = vrot.lane.b32.xlu0 %v2167, 1
        %v2263 = vpop.permute.xlu0 %2262
        %v2264 = vlaneseq
        %v2265 = vshrl.u32 %v2264, 7
        %v2266 = vsub.s32 2, %v2265
        %v2267 = vrot.slane %v2241, %v2266
        %v2268 = vmul.f32 %v1772, %v2267
        %v2269 = vmul.f32 %v2263, %v2267
        %v2270 = vadd.f32 %v2260, %v2268
        %v2271 = vadd.f32 %v2261, %v2269
        %v2272 = vlaneseq
        %v2273 = vshrl.u32 %v2272, 7
        %v2274 = vsub.s32 3, %v2273
        %v2275 = vrot.slane %v2241, %v2274
        %v2276 = vmul.f32 %v1658, %v2275
        %v2277 = vmul.f32 %v2167, %v2275
        %v2278 = vadd.f32 %v2270, %v2276
        %v2279 = vadd.f32 %v2271, %v2277
        %2280 = vrot.lane.b32.xlu0 %v2167, 127
        %v2281 = vpop.permute.xlu0 %2280
        %v2282 = vlaneseq
        %v2283 = vshrl.u32 %v2282, 7
        %v2284 = vsub.s32 4, %v2283
        %v2285 = vrot.slane %v2241, %v2284
        %v2286 = vmul.f32 %v1792, %v2285
        %v2287 = vmul.f32 %v2281, %v2285
        %v2288 = vadd.f32 %v2278, %v2286
        %v2289 = vadd.f32 %v2279, %v2287
        %2290 = vrot.lane.b32.xlu0 %v2167, 126
        %v2291 = vpop.permute.xlu0 %2290
        %v2292 = vlaneseq
        %v2293 = vshrl.u32 %v2292, 7
        %v2294 = vsub.s32 5, %v2293
        %v2295 = vrot.slane %v2241, %v2294
        %v2296 = vmul.f32 %v1804, %v2295
        %v2297 = vmul.f32 %v2291, %v2295
        %v2298 = vadd.f32 %v2288, %v2296
        %v2299 = vadd.f32 %v2289, %v2297
        %2300 = vrot.lane.b32.xlu0 %v2167, 125
        %v2301 = vpop.permute.xlu0 %2300
        %v2302 = vlaneseq
        %v2303 = vshrl.u32 %v2302, 7
        %v2304 = vsub.s32 6, %v2303
        %v2305 = vrot.slane %v2241, %v2304
        %v2306 = vmul.f32 %v1816, %v2305
        %v2307 = vmul.f32 %v2301, %v2305
        %v2308 = vadd.f32 %v2298, %v2306
        %v2309 = vadd.f32 %v2299, %v2307
        %s2310 = scalar_lea.vmem %s1, 208
        %v2311 = vld [vmem:[%s2310] sm:$0x7f]
        %2312 = vrot.lane.b32.xlu0 %v2167, 115
        %v2313 = vpop.permute.xlu0 %2312
        %v2314 = vlaneseq
        %v2315 = vshrl.u32 %v2314, 7
        %v2316 = vsub.s32 0, %v2315
        %v2317 = vrot.slane %v2311, %v2316
        %v2318 = vmul.f32 %v1830, %v2317
        %v2319 = vmul.f32 %v2313, %v2317
        %v2320 = vadd.f32 %v2308, %v2318
        %v2321 = vadd.f32 %v2309, %v2319
        %2322 = vrot.lane.b32.xlu0 %v2167, 114
        %v2323 = vpop.permute.xlu0 %2322
        %v2324 = vlaneseq
        %v2325 = vshrl.u32 %v2324, 7
        %v2326 = vsub.s32 1, %v2325
        %v2327 = vrot.slane %v2311, %v2326
        %v2328 = vmul.f32 %v1842, %v2327
        %v2329 = vmul.f32 %v2323, %v2327
        %v2330 = vadd.f32 %v2320, %v2328
        %v2331 = vadd.f32 %v2321, %v2329
        %2332 = vrot.lane.b32.xlu0 %v2167, 113
        %v2333 = vpop.permute.xlu0 %2332
        %v2334 = vlaneseq
        %v2335 = vshrl.u32 %v2334, 7
        %v2336 = vsub.s32 2, %v2335
        %v2337 = vrot.slane %v2311, %v2336
        %v2338 = vmul.f32 %v1854, %v2337
        %v2339 = vmul.f32 %v2333, %v2337
        %v2340 = vadd.f32 %v2330, %v2338
        %v2341 = vadd.f32 %v2331, %v2339
        %2342 = vrot.lane.b32.xlu0 %v2167, 112
        %v2343 = vpop.permute.xlu0 %2342
        %v2344 = vlaneseq
        %v2345 = vshrl.u32 %v2344, 7
        %v2346 = vsub.s32 3, %v2345
        %v2347 = vrot.slane %v2311, %v2346
        %v2348 = vmul.f32 %v1866, %v2347
        %v2349 = vmul.f32 %v2343, %v2347
        %v2350 = vadd.f32 %v2340, %v2348
        %v2351 = vadd.f32 %v2341, %v2349
        %2352 = vrot.lane.b32.xlu0 %v2167, 111
        %v2353 = vpop.permute.xlu0 %2352
        %v2354 = vlaneseq
        %v2355 = vshrl.u32 %v2354, 7
        %v2356 = vsub.s32 4, %v2355
        %v2357 = vrot.slane %v2311, %v2356
        %v2358 = vmul.f32 %v1878, %v2357
        %v2359 = vmul.f32 %v2353, %v2357
        %v2360 = vadd.f32 %v2350, %v2358
        %v2361 = vadd.f32 %v2351, %v2359
        %2362 = vrot.lane.b32.xlu0 %v2167, 110
        %v2363 = vpop.permute.xlu0 %2362
        %v2364 = vlaneseq
        %v2365 = vshrl.u32 %v2364, 7
        %v2366 = vsub.s32 5, %v2365
        %v2367 = vrot.slane %v2311, %v2366
        %v2368 = vmul.f32 %v1890, %v2367
        %v2369 = vmul.f32 %v2363, %v2367
        %v2370 = vadd.f32 %v2360, %v2368
        %v2371 = vadd.f32 %v2361, %v2369
        %2372 = vrot.lane.b32.xlu0 %v2167, 109
        %v2373 = vpop.permute.xlu0 %2372
        %v2374 = vlaneseq
        %v2375 = vshrl.u32 %v2374, 7
        %v2376 = vsub.s32 6, %v2375
        %v2377 = vrot.slane %v2311, %v2376
        %v2378 = vmul.f32 %v1902, %v2377
        %v2379 = vmul.f32 %v2373, %v2377
        %v2380 = vadd.f32 %v2370, %v2378
        %v2381 = vadd.f32 %v2371, %v2379
        %v2382 = vld [vmem:[#allocation3] sm:$0xff]
        %v2383 = vld [vmem:[#allocation3 + $0x8] sm:$0xff]
        %2386 = vrot.lane.b32.xlu0 %v2380, 96
        %v2387 = vpop.permute.xlu0 %2386
        %2388 = vrot.lane.b32.xlu0 %v2381, 96
        %v2389 = vpop.permute.xlu0 %2388
        %v2392 = vadd.f32 %v2382, %v2387
        %v2393 = vadd.f32 %v2383, %v2389
        %2394 = vst.msk [vmem:[#allocation3] sm:$0xff] %vm152, %v2392
        %2395 = vst.msk [vmem:[#allocation3 + $0x8] sm:$0xff] %vm152, %v2393
        %2396 = vst.msk [vmem:[#allocation2 + $0x8] sm:$0xff] %vm163, %v2380
        %2397 = vst.msk [vmem:[#allocation2 + $0x10] sm:$0xff] %vm163, %v2381
        %v2398 = vld [vmem:[#allocation2] sm:$0xff]
        %v2399 = vld [vmem:[#allocation2 + $0x8] sm:$0xff]
        %s2400 = scalar_lea.vmem %s1, 216
        %v2401 = vld [vmem:[%s2400] sm:$0x7f]
        %2402 = vrot.lane.b32.xlu0 %v2398, 35
        %v2403 = vpop.permute.xlu0 %2402
        %2404 = vrot.lane.b32.xlu0 %v2399, 35
        %v2405 = vpop.permute.xlu0 %2404
        %v2406 = vlaneseq
        %v2407 = vshrl.u32 %v2406, 7
        %v2408 = vsub.s32 0, %v2407
        %v2409 = vrot.slane %v2401, %v2408
        %v2410 = vmul.f32 %v2403, %v2409
        %v2411 = vmul.f32 %v2405, %v2409
        %2412 = vrot.lane.b32.xlu0 %v2398, 34
        %v2413 = vpop.permute.xlu0 %2412
        %2414 = vrot.lane.b32.xlu0 %v2399, 34
        %v2415 = vpop.permute.xlu0 %2414
        %v2416 = vlaneseq
        %v2417 = vshrl.u32 %v2416, 7
        %v2418 = vsub.s32 1, %v2417
        %v2419 = vrot.slane %v2401, %v2418
        %v2420 = vmul.f32 %v2413, %v2419
        %v2421 = vmul.f32 %v2415, %v2419
        %v2422 = vadd.f32 %v2410, %v2420
        %v2423 = vadd.f32 %v2411, %v2421
        %2424 = vrot.lane.b32.xlu0 %v2398, 33
        %v2425 = vpop.permute.xlu0 %2424
        %2426 = vrot.lane.b32.xlu0 %v2399, 33
        %v2427 = vpop.permute.xlu0 %2426
        %v2428 = vlaneseq
        %v2429 = vshrl.u32 %v2428, 7
        %v2430 = vsub.s32 2, %v2429
        %v2431 = vrot.slane %v2401, %v2430
        %v2432 = vmul.f32 %v2425, %v2431
        %v2433 = vmul.f32 %v2427, %v2431
        %v2434 = vadd.f32 %v2422, %v2432
        %v2435 = vadd.f32 %v2423, %v2433
        %2436 = vrot.lane.b32.xlu0 %v2398, 32
        %v2437 = vpop.permute.xlu0 %2436
        %2438 = vrot.lane.b32.xlu0 %v2399, 32
        %v2439 = vpop.permute.xlu0 %2438
        %v2440 = vlaneseq
        %v2441 = vshrl.u32 %v2440, 7
        %v2442 = vsub.s32 3, %v2441
        %v2443 = vrot.slane %v2401, %v2442
        %v2444 = vmul.f32 %v2437, %v2443
        %v2445 = vmul.f32 %v2439, %v2443
        %v2446 = vadd.f32 %v2434, %v2444
        %v2447 = vadd.f32 %v2435, %v2445
        %2448 = vrot.lane.b32.xlu0 %v2398, 31
        %v2449 = vpop.permute.xlu0 %2448
        %2450 = vrot.lane.b32.xlu0 %v2399, 31
        %v2451 = vpop.permute.xlu0 %2450
        %v2452 = vlaneseq
        %v2453 = vshrl.u32 %v2452, 7
        %v2454 = vsub.s32 4, %v2453
        %v2455 = vrot.slane %v2401, %v2454
        %v2456 = vmul.f32 %v2449, %v2455
        %v2457 = vmul.f32 %v2451, %v2455
        %v2458 = vadd.f32 %v2446, %v2456
        %v2459 = vadd.f32 %v2447, %v2457
        %2460 = vrot.lane.b32.xlu0 %v2398, 30
        %v2461 = vpop.permute.xlu0 %2460
        %2462 = vrot.lane.b32.xlu0 %v2399, 30
        %v2463 = vpop.permute.xlu0 %2462
        %v2464 = vlaneseq
        %v2465 = vshrl.u32 %v2464, 7
        %v2466 = vsub.s32 5, %v2465
        %v2467 = vrot.slane %v2401, %v2466
        %v2468 = vmul.f32 %v2461, %v2467
        %v2469 = vmul.f32 %v2463, %v2467
        %v2470 = vadd.f32 %v2458, %v2468
        %v2471 = vadd.f32 %v2459, %v2469
        %2472 = vrot.lane.b32.xlu0 %v2398, 29
        %v2473 = vpop.permute.xlu0 %2472
        %2474 = vrot.lane.b32.xlu0 %v2399, 29
        %v2475 = vpop.permute.xlu0 %2474
        %v2476 = vlaneseq
        %v2477 = vshrl.u32 %v2476, 7
        %v2478 = vsub.s32 6, %v2477
        %v2479 = vrot.slane %v2401, %v2478
        %v2480 = vmul.f32 %v2473, %v2479
        %v2481 = vmul.f32 %v2475, %v2479
        %v2482 = vadd.f32 %v2470, %v2480
        %v2483 = vadd.f32 %v2471, %v2481
        %s2484 = scalar_lea.vmem %s1, 224
        %v2485 = vld [vmem:[%s2484] sm:$0x7f]
        %2486 = vrot.lane.b32.xlu0 %v2398, 3
        %v2487 = vpop.permute.xlu0 %2486
        %2488 = vrot.lane.b32.xlu0 %v2399, 3
        %v2489 = vpop.permute.xlu0 %2488
        %v2490 = vlaneseq
        %v2491 = vshrl.u32 %v2490, 7
        %v2492 = vsub.s32 0, %v2491
        %v2493 = vrot.slane %v2485, %v2492
        %v2494 = vmul.f32 %v2487, %v2493
        %v2495 = vmul.f32 %v2489, %v2493
        %v2496 = vadd.f32 %v2482, %v2494
        %v2497 = vadd.f32 %v2483, %v2495
        %2498 = vrot.lane.b32.xlu0 %v2398, 2
        %v2499 = vpop.permute.xlu0 %2498
        %2500 = vrot.lane.b32.xlu0 %v2399, 2
        %v2501 = vpop.permute.xlu0 %2500
        %v2502 = vlaneseq
        %v2503 = vshrl.u32 %v2502, 7
        %v2504 = vsub.s32 1, %v2503
        %v2505 = vrot.slane %v2485, %v2504
        %v2506 = vmul.f32 %v2499, %v2505
        %v2507 = vmul.f32 %v2501, %v2505
        %v2508 = vadd.f32 %v2496, %v2506
        %v2509 = vadd.f32 %v2497, %v2507
        %2510 = vrot.lane.b32.xlu0 %v2398, 1
        %v2511 = vpop.permute.xlu0 %2510
        %2512 = vrot.lane.b32.xlu0 %v2399, 1
        %v2513 = vpop.permute.xlu0 %2512
        %v2514 = vlaneseq
        %v2515 = vshrl.u32 %v2514, 7
        %v2516 = vsub.s32 2, %v2515
        %v2517 = vrot.slane %v2485, %v2516
        %v2518 = vmul.f32 %v2511, %v2517
        %v2519 = vmul.f32 %v2513, %v2517
        %v2520 = vadd.f32 %v2508, %v2518
        %v2521 = vadd.f32 %v2509, %v2519
        %v2522 = vlaneseq
        %v2523 = vshrl.u32 %v2522, 7
        %v2524 = vsub.s32 3, %v2523
        %v2525 = vrot.slane %v2485, %v2524
        %v2526 = vmul.f32 %v2398, %v2525
        %v2527 = vmul.f32 %v2399, %v2525
        %v2528 = vadd.f32 %v2520, %v2526
        %v2529 = vadd.f32 %v2521, %v2527
        %2530 = vrot.lane.b32.xlu0 %v2398, 127
        %v2531 = vpop.permute.xlu0 %2530
        %2532 = vrot.lane.b32.xlu0 %v2399, 127
        %v2533 = vpop.permute.xlu0 %2532
        %v2534 = vlaneseq
        %v2535 = vshrl.u32 %v2534, 7
        %v2536 = vsub.s32 4, %v2535
        %v2537 = vrot.slane %v2485, %v2536
        %v2538 = vmul.f32 %v2531, %v2537
        %v2539 = vmul.f32 %v2533, %v2537
        %v2540 = vadd.f32 %v2528, %v2538
        %v2541 = vadd.f32 %v2529, %v2539
        %2542 = vrot.lane.b32.xlu0 %v2398, 126
        %v2543 = vpop.permute.xlu0 %2542
        %2544 = vrot.lane.b32.xlu0 %v2399, 126
        %v2545 = vpop.permute.xlu0 %2544
        %v2546 = vlaneseq
        %v2547 = vshrl.u32 %v2546, 7
        %v2548 = vsub.s32 5, %v2547
        %v2549 = vrot.slane %v2485, %v2548
        %v2550 = vmul.f32 %v2543, %v2549
        %v2551 = vmul.f32 %v2545, %v2549
        %v2552 = vadd.f32 %v2540, %v2550
        %v2553 = vadd.f32 %v2541, %v2551
        %2554 = vrot.lane.b32.xlu0 %v2398, 125
        %v2555 = vpop.permute.xlu0 %2554
        %2556 = vrot.lane.b32.xlu0 %v2399, 125
        %v2557 = vpop.permute.xlu0 %2556
        %v2558 = vlaneseq
        %v2559 = vshrl.u32 %v2558, 7
        %v2560 = vsub.s32 6, %v2559
        %v2561 = vrot.slane %v2485, %v2560
        %v2562 = vmul.f32 %v2555, %v2561
        %v2563 = vmul.f32 %v2557, %v2561
        %v2564 = vadd.f32 %v2552, %v2562
        %v2565 = vadd.f32 %v2553, %v2563
        %s2566 = scalar_lea.vmem %s1, 232
        %v2567 = vld [vmem:[%s2566] sm:$0x7f]
        %2568 = vrot.lane.b32.xlu0 %v2398, 99
        %v2569 = vpop.permute.xlu0 %2568
        %2570 = vrot.lane.b32.xlu0 %v2399, 99
        %v2571 = vpop.permute.xlu0 %2570
        %v2572 = vlaneseq
        %v2573 = vshrl.u32 %v2572, 7
        %v2574 = vsub.s32 0, %v2573
        %v2575 = vrot.slane %v2567, %v2574
        %v2576 = vmul.f32 %v2569, %v2575
        %v2577 = vmul.f32 %v2571, %v2575
        %v2578 = vadd.f32 %v2564, %v2576
        %v2579 = vadd.f32 %v2565, %v2577
        %2580 = vrot.lane.b32.xlu0 %v2398, 98
        %v2581 = vpop.permute.xlu0 %2580
        %2582 = vrot.lane.b32.xlu0 %v2399, 98
        %v2583 = vpop.permute.xlu0 %2582
        %v2584 = vlaneseq
        %v2585 = vshrl.u32 %v2584, 7
        %v2586 = vsub.s32 1, %v2585
        %v2587 = vrot.slane %v2567, %v2586
        %v2588 = vmul.f32 %v2581, %v2587
        %v2589 = vmul.f32 %v2583, %v2587
        %v2590 = vadd.f32 %v2578, %v2588
        %v2591 = vadd.f32 %v2579, %v2589
        %2592 = vrot.lane.b32.xlu0 %v2398, 97
        %v2593 = vpop.permute.xlu0 %2592
        %2594 = vrot.lane.b32.xlu0 %v2399, 97
        %v2595 = vpop.permute.xlu0 %2594
        %v2596 = vlaneseq
        %v2597 = vshrl.u32 %v2596, 7
        %v2598 = vsub.s32 2, %v2597
        %v2599 = vrot.slane %v2567, %v2598
        %v2600 = vmul.f32 %v2593, %v2599
        %v2601 = vmul.f32 %v2595, %v2599
        %v2602 = vadd.f32 %v2590, %v2600
        %v2603 = vadd.f32 %v2591, %v2601
        %2604 = vrot.lane.b32.xlu0 %v2398, 96
        %v2605 = vpop.permute.xlu0 %2604
        %2606 = vrot.lane.b32.xlu0 %v2399, 96
        %v2607 = vpop.permute.xlu0 %2606
        %v2608 = vlaneseq
        %v2609 = vshrl.u32 %v2608, 7
        %v2610 = vsub.s32 3, %v2609
        %v2611 = vrot.slane %v2567, %v2610
        %v2612 = vmul.f32 %v2605, %v2611
        %v2613 = vmul.f32 %v2607, %v2611
        %v2614 = vadd.f32 %v2602, %v2612
        %v2615 = vadd.f32 %v2603, %v2613
        %2616 = vrot.lane.b32.xlu0 %v2398, 95
        %v2617 = vpop.permute.xlu0 %2616
        %2618 = vrot.lane.b32.xlu0 %v2399, 95
        %v2619 = vpop.permute.xlu0 %2618
        %v2620 = vlaneseq
        %v2621 = vshrl.u32 %v2620, 7
        %v2622 = vsub.s32 4, %v2621
        %v2623 = vrot.slane %v2567, %v2622
        %v2624 = vmul.f32 %v2617, %v2623
        %v2625 = vmul.f32 %v2619, %v2623
        %v2626 = vadd.f32 %v2614, %v2624
        %v2627 = vadd.f32 %v2615, %v2625
        %2628 = vrot.lane.b32.xlu0 %v2398, 94
        %v2629 = vpop.permute.xlu0 %2628
        %2630 = vrot.lane.b32.xlu0 %v2399, 94
        %v2631 = vpop.permute.xlu0 %2630
        %v2632 = vlaneseq
        %v2633 = vshrl.u32 %v2632, 7
        %v2634 = vsub.s32 5, %v2633
        %v2635 = vrot.slane %v2567, %v2634
        %v2636 = vmul.f32 %v2629, %v2635
        %v2637 = vmul.f32 %v2631, %v2635
        %v2638 = vadd.f32 %v2626, %v2636
        %v2639 = vadd.f32 %v2627, %v2637
        %2640 = vrot.lane.b32.xlu0 %v2398, 93
        %v2641 = vpop.permute.xlu0 %2640
        %2642 = vrot.lane.b32.xlu0 %v2399, 93
        %v2643 = vpop.permute.xlu0 %2642
        %v2644 = vlaneseq
        %v2645 = vshrl.u32 %v2644, 7
        %v2646 = vsub.s32 6, %v2645
        %v2647 = vrot.slane %v2567, %v2646
        %v2648 = vmul.f32 %v2641, %v2647
        %v2649 = vmul.f32 %v2643, %v2647
        %v2650 = vadd.f32 %v2638, %v2648
        %v2651 = vadd.f32 %v2639, %v2649
        %v2652 = vld [vmem:[#allocation2 + $0x10] sm:$0xff]
        %s2653 = scalar_lea.vmem %s1, 240
        %v2654 = vld [vmem:[%s2653] sm:$0x7f]
        %2655 = vrot.lane.b32.xlu0 %v2652, 35
        %v2656 = vpop.permute.xlu0 %2655
        %v2657 = vlaneseq
        %v2658 = vshrl.u32 %v2657, 7
        %v2659 = vsub.s32 0, %v2658
        %v2660 = vrot.slane %v2654, %v2659
        %v2661 = vmul.f32 %v2405, %v2660
        %v2662 = vmul.f32 %v2656, %v2660
        %v2663 = vadd.f32 %v2650, %v2661
        %v2664 = vadd.f32 %v2651, %v2662
        %2665 = vrot.lane.b32.xlu0 %v2652, 34
        %v2666 = vpop.permute.xlu0 %2665
        %v2667 = vlaneseq
        %v2668 = vshrl.u32 %v2667, 7
        %v2669 = vsub.s32 1, %v2668
        %v2670 = vrot.slane %v2654, %v2669
        %v2671 = vmul.f32 %v2415, %v2670
        %v2672 = vmul.f32 %v2666, %v2670
        %v2673 = vadd.f32 %v2663, %v2671
        %v2674 = vadd.f32 %v2664, %v2672
        %2675 = vrot.lane.b32.xlu0 %v2652, 33
        %v2676 = vpop.permute.xlu0 %2675
        %v2677 = vlaneseq
        %v2678 = vshrl.u32 %v2677, 7
        %v2679 = vsub.s32 2, %v2678
        %v2680 = vrot.slane %v2654, %v2679
        %v2681 = vmul.f32 %v2427, %v2680
        %v2682 = vmul.f32 %v2676, %v2680
        %v2683 = vadd.f32 %v2673, %v2681
        %v2684 = vadd.f32 %v2674, %v2682
        %2685 = vrot.lane.b32.xlu0 %v2652, 32
        %v2686 = vpop.permute.xlu0 %2685
        %v2687 = vlaneseq
        %v2688 = vshrl.u32 %v2687, 7
        %v2689 = vsub.s32 3, %v2688
        %v2690 = vrot.slane %v2654, %v2689
        %v2691 = vmul.f32 %v2439, %v2690
        %v2692 = vmul.f32 %v2686, %v2690
        %v2693 = vadd.f32 %v2683, %v2691
        %v2694 = vadd.f32 %v2684, %v2692
        %2695 = vrot.lane.b32.xlu0 %v2652, 31
        %v2696 = vpop.permute.xlu0 %2695
        %v2697 = vlaneseq
        %v2698 = vshrl.u32 %v2697, 7
        %v2699 = vsub.s32 4, %v2698
        %v2700 = vrot.slane %v2654, %v2699
        %v2701 = vmul.f32 %v2451, %v2700
        %v2702 = vmul.f32 %v2696, %v2700
        %v2703 = vadd.f32 %v2693, %v2701
        %v2704 = vadd.f32 %v2694, %v2702
        %2705 = vrot.lane.b32.xlu0 %v2652, 30
        %v2706 = vpop.permute.xlu0 %2705
        %v2707 = vlaneseq
        %v2708 = vshrl.u32 %v2707, 7
        %v2709 = vsub.s32 5, %v2708
        %v2710 = vrot.slane %v2654, %v2709
        %v2711 = vmul.f32 %v2463, %v2710
        %v2712 = vmul.f32 %v2706, %v2710
        %v2713 = vadd.f32 %v2703, %v2711
        %v2714 = vadd.f32 %v2704, %v2712
        %2715 = vrot.lane.b32.xlu0 %v2652, 29
        %v2716 = vpop.permute.xlu0 %2715
        %v2717 = vlaneseq
        %v2718 = vshrl.u32 %v2717, 7
        %v2719 = vsub.s32 6, %v2718
        %v2720 = vrot.slane %v2654, %v2719
        %v2721 = vmul.f32 %v2475, %v2720
        %v2722 = vmul.f32 %v2716, %v2720
        %v2723 = vadd.f32 %v2713, %v2721
        %v2724 = vadd.f32 %v2714, %v2722
        %s2725 = scalar_lea.vmem %s1, 248
        %v2726 = vld [vmem:[%s2725] sm:$0x7f]
        %2727 = vrot.lane.b32.xlu0 %v2652, 3
        %v2728 = vpop.permute.xlu0 %2727
        %v2729 = vlaneseq
        %v2730 = vshrl.u32 %v2729, 7
        %v2731 = vsub.s32 0, %v2730
        %v2732 = vrot.slane %v2726, %v2731
        %v2733 = vmul.f32 %v2489, %v2732
        %v2734 = vmul.f32 %v2728, %v2732
        %v2735 = vadd.f32 %v2723, %v2733
        %v2736 = vadd.f32 %v2724, %v2734
        %2737 = vrot.lane.b32.xlu0 %v2652, 2
        %v2738 = vpop.permute.xlu0 %2737
        %v2739 = vlaneseq
        %v2740 = vshrl.u32 %v2739, 7
        %v2741 = vsub.s32 1, %v2740
        %v2742 = vrot.slane %v2726, %v2741
        %v2743 = vmul.f32 %v2501, %v2742
        %v2744 = vmul.f32 %v2738, %v2742
        %v2745 = vadd.f32 %v2735, %v2743
        %v2746 = vadd.f32 %v2736, %v2744
        %2747 = vrot.lane.b32.xlu0 %v2652, 1
        %v2748 = vpop.permute.xlu0 %2747
        %v2749 = vlaneseq
        %v2750 = vshrl.u32 %v2749, 7
        %v2751 = vsub.s32 2, %v2750
        %v2752 = vrot.slane %v2726, %v2751
        %v2753 = vmul.f32 %v2513, %v2752
        %v2754 = vmul.f32 %v2748, %v2752
        %v2755 = vadd.f32 %v2745, %v2753
        %v2756 = vadd.f32 %v2746, %v2754
        %v2757 = vlaneseq
        %v2758 = vshrl.u32 %v2757, 7
        %v2759 = vsub.s32 3, %v2758
        %v2760 = vrot.slane %v2726, %v2759
        %v2761 = vmul.f32 %v2399, %v2760
        %v2762 = vmul.f32 %v2652, %v2760
        %v2763 = vadd.f32 %v2755, %v2761
        %v2764 = vadd.f32 %v2756, %v2762
        %2765 = vrot.lane.b32.xlu0 %v2652, 127
        %v2766 = vpop.permute.xlu0 %2765
        %v2767 = vlaneseq
        %v2768 = vshrl.u32 %v2767, 7
        %v2769 = vsub.s32 4, %v2768
        %v2770 = vrot.slane %v2726, %v2769
        %v2771 = vmul.f32 %v2533, %v2770
        %v2772 = vmul.f32 %v2766, %v2770
        %v2773 = vadd.f32 %v2763, %v2771
        %v2774 = vadd.f32 %v2764, %v2772
        %2775 = vrot.lane.b32.xlu0 %v2652, 126
        %v2776 = vpop.permute.xlu0 %2775
        %v2777 = vlaneseq
        %v2778 = vshrl.u32 %v2777, 7
        %v2779 = vsub.s32 5, %v2778
        %v2780 = vrot.slane %v2726, %v2779
        %v2781 = vmul.f32 %v2545, %v2780
        %v2782 = vmul.f32 %v2776, %v2780
        %v2783 = vadd.f32 %v2773, %v2781
        %v2784 = vadd.f32 %v2774, %v2782
        %2785 = vrot.lane.b32.xlu0 %v2652, 125
        %v2786 = vpop.permute.xlu0 %2785
        %v2787 = vlaneseq
        %v2788 = vshrl.u32 %v2787, 7
        %v2789 = vsub.s32 6, %v2788
        %v2790 = vrot.slane %v2726, %v2789
        %v2791 = vmul.f32 %v2557, %v2790
        %v2792 = vmul.f32 %v2786, %v2790
        %v2793 = vadd.f32 %v2783, %v2791
        %v2794 = vadd.f32 %v2784, %v2792
        %s2795 = scalar_lea.vmem %s1, 256
        %v2796 = vld [vmem:[%s2795] sm:$0x7f]
        %2797 = vrot.lane.b32.xlu0 %v2652, 99
        %v2798 = vpop.permute.xlu0 %2797
        %v2799 = vlaneseq
        %v2800 = vshrl.u32 %v2799, 7
        %v2801 = vsub.s32 0, %v2800
        %v2802 = vrot.slane %v2796, %v2801
        %v2803 = vmul.f32 %v2571, %v2802
        %v2804 = vmul.f32 %v2798, %v2802
        %v2805 = vadd.f32 %v2793, %v2803
        %v2806 = vadd.f32 %v2794, %v2804
        %2807 = vrot.lane.b32.xlu0 %v2652, 98
        %v2808 = vpop.permute.xlu0 %2807
        %v2809 = vlaneseq
        %v2810 = vshrl.u32 %v2809, 7
        %v2811 = vsub.s32 1, %v2810
        %v2812 = vrot.slane %v2796, %v2811
        %v2813 = vmul.f32 %v2583, %v2812
        %v2814 = vmul.f32 %v2808, %v2812
        %v2815 = vadd.f32 %v2805, %v2813
        %v2816 = vadd.f32 %v2806, %v2814
        %2817 = vrot.lane.b32.xlu0 %v2652, 97
        %v2818 = vpop.permute.xlu0 %2817
        %v2819 = vlaneseq
        %v2820 = vshrl.u32 %v2819, 7
        %v2821 = vsub.s32 2, %v2820
        %v2822 = vrot.slane %v2796, %v2821
        %v2823 = vmul.f32 %v2595, %v2822
        %v2824 = vmul.f32 %v2818, %v2822
        %v2825 = vadd.f32 %v2815, %v2823
        %v2826 = vadd.f32 %v2816, %v2824
        %2827 = vrot.lane.b32.xlu0 %v2652, 96
        %v2828 = vpop.permute.xlu0 %2827
        %v2829 = vlaneseq
        %v2830 = vshrl.u32 %v2829, 7
        %v2831 = vsub.s32 3, %v2830
        %v2832 = vrot.slane %v2796, %v2831
        %v2833 = vmul.f32 %v2607, %v2832
        %v2834 = vmul.f32 %v2828, %v2832
        %v2835 = vadd.f32 %v2825, %v2833
        %v2836 = vadd.f32 %v2826, %v2834
        %2837 = vrot.lane.b32.xlu0 %v2652, 95
        %v2838 = vpop.permute.xlu0 %2837
        %v2839 = vlaneseq
        %v2840 = vshrl.u32 %v2839, 7
        %v2841 = vsub.s32 4, %v2840
        %v2842 = vrot.slane %v2796, %v2841
        %v2843 = vmul.f32 %v2619, %v2842
        %v2844 = vmul.f32 %v2838, %v2842
        %v2845 = vadd.f32 %v2835, %v2843
        %v2846 = vadd.f32 %v2836, %v2844
        %2847 = vrot.lane.b32.xlu0 %v2652, 94
        %v2848 = vpop.permute.xlu0 %2847
        %v2849 = vlaneseq
        %v2850 = vshrl.u32 %v2849, 7
        %v2851 = vsub.s32 5, %v2850
        %v2852 = vrot.slane %v2796, %v2851
        %v2853 = vmul.f32 %v2631, %v2852
        %v2854 = vmul.f32 %v2848, %v2852
        %v2855 = vadd.f32 %v2845, %v2853
        %v2856 = vadd.f32 %v2846, %v2854
        %2857 = vrot.lane.b32.xlu0 %v2652, 93
        %v2858 = vpop.permute.xlu0 %2857
        %v2859 = vlaneseq
        %v2860 = vshrl.u32 %v2859, 7
        %v2861 = vsub.s32 6, %v2860
        %v2862 = vrot.slane %v2796, %v2861
        %v2863 = vmul.f32 %v2643, %v2862
        %v2864 = vmul.f32 %v2858, %v2862
        %v2865 = vadd.f32 %v2855, %v2863
        %v2866 = vadd.f32 %v2856, %v2864
        %v2867 = vld [vmem:[#allocation2 + $0x10] sm:$0xff]
        %v2868 = vld [vmem:[#allocation2 + $0x18] sm:$0xff]
        %s2869 = scalar_lea.vmem %s1, 264
        %v2870 = vld [vmem:[%s2869] sm:$0x7f]
        %2871 = vrot.lane.b32.xlu0 %v2867, 35
        %v2872 = vpop.permute.xlu0 %2871
        %2873 = vrot.lane.b32.xlu0 %v2868, 35
        %v2874 = vpop.permute.xlu0 %2873
        %v2875 = vlaneseq
        %v2876 = vshrl.u32 %v2875, 7
        %v2877 = vsub.s32 0, %v2876
        %v2878 = vrot.slane %v2870, %v2877
        %v2879 = vmul.f32 %v2872, %v2878
        %v2880 = vmul.f32 %v2874, %v2878
        %v2881 = vadd.f32 %v2865, %v2879
        %v2882 = vadd.f32 %v2866, %v2880
        %2883 = vrot.lane.b32.xlu0 %v2867, 34
        %v2884 = vpop.permute.xlu0 %2883
        %2885 = vrot.lane.b32.xlu0 %v2868, 34
        %v2886 = vpop.permute.xlu0 %2885
        %v2887 = vlaneseq
        %v2888 = vshrl.u32 %v2887, 7
        %v2889 = vsub.s32 1, %v2888
        %v2890 = vrot.slane %v2870, %v2889
        %v2891 = vmul.f32 %v2884, %v2890
        %v2892 = vmul.f32 %v2886, %v2890
        %v2893 = vadd.f32 %v2881, %v2891
        %v2894 = vadd.f32 %v2882, %v2892
        %2895 = vrot.lane.b32.xlu0 %v2867, 33
        %v2896 = vpop.permute.xlu0 %2895
        %2897 = vrot.lane.b32.xlu0 %v2868, 33
        %v2898 = vpop.permute.xlu0 %2897
        %v2899 = vlaneseq
        %v2900 = vshrl.u32 %v2899, 7
        %v2901 = vsub.s32 2, %v2900
        %v2902 = vrot.slane %v2870, %v2901
        %v2903 = vmul.f32 %v2896, %v2902
        %v2904 = vmul.f32 %v2898, %v2902
        %v2905 = vadd.f32 %v2893, %v2903
        %v2906 = vadd.f32 %v2894, %v2904
        %2907 = vrot.lane.b32.xlu0 %v2867, 32
        %v2908 = vpop.permute.xlu0 %2907
        %2909 = vrot.lane.b32.xlu0 %v2868, 32
        %v2910 = vpop.permute.xlu0 %2909
        %v2911 = vlaneseq
        %v2912 = vshrl.u32 %v2911, 7
        %v2913 = vsub.s32 3, %v2912
        %v2914 = vrot.slane %v2870, %v2913
        %v2915 = vmul.f32 %v2908, %v2914
        %v2916 = vmul.f32 %v2910, %v2914
        %v2917 = vadd.f32 %v2905, %v2915
        %v2918 = vadd.f32 %v2906, %v2916
        %2919 = vrot.lane.b32.xlu0 %v2867, 31
        %v2920 = vpop.permute.xlu0 %2919
        %2921 = vrot.lane.b32.xlu0 %v2868, 31
        %v2922 = vpop.permute.xlu0 %2921
        %v2923 = vlaneseq
        %v2924 = vshrl.u32 %v2923, 7
        %v2925 = vsub.s32 4, %v2924
        %v2926 = vrot.slane %v2870, %v2925
        %v2927 = vmul.f32 %v2920, %v2926
        %v2928 = vmul.f32 %v2922, %v2926
        %v2929 = vadd.f32 %v2917, %v2927
        %v2930 = vadd.f32 %v2918, %v2928
        %2931 = vrot.lane.b32.xlu0 %v2867, 30
        %v2932 = vpop.permute.xlu0 %2931
        %2933 = vrot.lane.b32.xlu0 %v2868, 30
        %v2934 = vpop.permute.xlu0 %2933
        %v2935 = vlaneseq
        %v2936 = vshrl.u32 %v2935, 7
        %v2937 = vsub.s32 5, %v2936
        %v2938 = vrot.slane %v2870, %v2937
        %v2939 = vmul.f32 %v2932, %v2938
        %v2940 = vmul.f32 %v2934, %v2938
        %v2941 = vadd.f32 %v2929, %v2939
        %v2942 = vadd.f32 %v2930, %v2940
        %2943 = vrot.lane.b32.xlu0 %v2867, 29
        %v2944 = vpop.permute.xlu0 %2943
        %2945 = vrot.lane.b32.xlu0 %v2868, 29
        %v2946 = vpop.permute.xlu0 %2945
        %v2947 = vlaneseq
        %v2948 = vshrl.u32 %v2947, 7
        %v2949 = vsub.s32 6, %v2948
        %v2950 = vrot.slane %v2870, %v2949
        %v2951 = vmul.f32 %v2944, %v2950
        %v2952 = vmul.f32 %v2946, %v2950
        %v2953 = vadd.f32 %v2941, %v2951
        %v2954 = vadd.f32 %v2942, %v2952
        %s2955 = scalar_lea.vmem %s1, 272
        %v2956 = vld [vmem:[%s2955] sm:$0x7f]
        %2957 = vrot.lane.b32.xlu0 %v2867, 3
        %v2958 = vpop.permute.xlu0 %2957
        %2959 = vrot.lane.b32.xlu0 %v2868, 3
        %v2960 = vpop.permute.xlu0 %2959
        %v2961 = vlaneseq
        %v2962 = vshrl.u32 %v2961, 7
        %v2963 = vsub.s32 0, %v2962
        %v2964 = vrot.slane %v2956, %v2963
        %v2965 = vmul.f32 %v2958, %v2964
        %v2966 = vmul.f32 %v2960, %v2964
        %v2967 = vadd.f32 %v2953, %v2965
        %v2968 = vadd.f32 %v2954, %v2966
        %2969 = vrot.lane.b32.xlu0 %v2867, 2
        %v2970 = vpop.permute.xlu0 %2969
        %2971 = vrot.lane.b32.xlu0 %v2868, 2
        %v2972 = vpop.permute.xlu0 %2971
        %v2973 = vlaneseq
        %v2974 = vshrl.u32 %v2973, 7
        %v2975 = vsub.s32 1, %v2974
        %v2976 = vrot.slane %v2956, %v2975
        %v2977 = vmul.f32 %v2970, %v2976
        %v2978 = vmul.f32 %v2972, %v2976
        %v2979 = vadd.f32 %v2967, %v2977
        %v2980 = vadd.f32 %v2968, %v2978
        %2981 = vrot.lane.b32.xlu0 %v2867, 1
        %v2982 = vpop.permute.xlu0 %2981
        %2983 = vrot.lane.b32.xlu0 %v2868, 1
        %v2984 = vpop.permute.xlu0 %2983
        %v2985 = vlaneseq
        %v2986 = vshrl.u32 %v2985, 7
        %v2987 = vsub.s32 2, %v2986
        %v2988 = vrot.slane %v2956, %v2987
        %v2989 = vmul.f32 %v2982, %v2988
        %v2990 = vmul.f32 %v2984, %v2988
        %v2991 = vadd.f32 %v2979, %v2989
        %v2992 = vadd.f32 %v2980, %v2990
        %v2993 = vlaneseq
        %v2994 = vshrl.u32 %v2993, 7
        %v2995 = vsub.s32 3, %v2994
        %v2996 = vrot.slane %v2956, %v2995
        %v2997 = vmul.f32 %v2867, %v2996
        %v2998 = vmul.f32 %v2868, %v2996
        %v2999 = vadd.f32 %v2991, %v2997
        %v3000 = vadd.f32 %v2992, %v2998
        %3001 = vrot.lane.b32.xlu0 %v2867, 127
        %v3002 = vpop.permute.xlu0 %3001
        %3003 = vrot.lane.b32.xlu0 %v2868, 127
        %v3004 = vpop.permute.xlu0 %3003
        %v3005 = vlaneseq
        %v3006 = vshrl.u32 %v3005, 7
        %v3007 = vsub.s32 4, %v3006
        %v3008 = vrot.slane %v2956, %v3007
        %v3009 = vmul.f32 %v3002, %v3008
        %v3010 = vmul.f32 %v3004, %v3008
        %v3011 = vadd.f32 %v2999, %v3009
        %v3012 = vadd.f32 %v3000, %v3010
        %3013 = vrot.lane.b32.xlu0 %v2867, 126
        %v3014 = vpop.permute.xlu0 %3013
        %3015 = vrot.lane.b32.xlu0 %v2868, 126
        %v3016 = vpop.permute.xlu0 %3015
        %v3017 = vlaneseq
        %v3018 = vshrl.u32 %v3017, 7
        %v3019 = vsub.s32 5, %v3018
        %v3020 = vrot.slane %v2956, %v3019
        %v3021 = vmul.f32 %v3014, %v3020
        %v3022 = vmul.f32 %v3016, %v3020
        %v3023 = vadd.f32 %v3011, %v3021
        %v3024 = vadd.f32 %v3012, %v3022
        %3025 = vrot.lane.b32.xlu0 %v2867, 125
        %v3026 = vpop.permute.xlu0 %3025
        %3027 = vrot.lane.b32.xlu0 %v2868, 125
        %v3028 = vpop.permute.xlu0 %3027
        %v3029 = vlaneseq
        %v3030 = vshrl.u32 %v3029, 7
        %v3031 = vsub.s32 6, %v3030
        %v3032 = vrot.slane %v2956, %v3031
        %v3033 = vmul.f32 %v3026, %v3032
        %v3034 = vmul.f32 %v3028, %v3032
        %v3035 = vadd.f32 %v3023, %v3033
        %v3036 = vadd.f32 %v3024, %v3034
        %s3037 = scalar_lea.vmem %s1, 280
        %v3038 = vld [vmem:[%s3037] sm:$0x7f]
        %3039 = vrot.lane.b32.xlu0 %v2867, 99
        %v3040 = vpop.permute.xlu0 %3039
        %3041 = vrot.lane.b32.xlu0 %v2868, 99
        %v3042 = vpop.permute.xlu0 %3041
        %v3043 = vlaneseq
        %v3044 = vshrl.u32 %v3043, 7
        %v3045 = vsub.s32 0, %v3044
        %v3046 = vrot.slane %v3038, %v3045
        %v3047 = vmul.f32 %v3040, %v3046
        %v3048 = vmul.f32 %v3042, %v3046
        %v3049 = vadd.f32 %v3035, %v3047
        %v3050 = vadd.f32 %v3036, %v3048
        %3051 = vrot.lane.b32.xlu0 %v2867, 98
        %v3052 = vpop.permute.xlu0 %3051
        %3053 = vrot.lane.b32.xlu0 %v2868, 98
        %v3054 = vpop.permute.xlu0 %3053
        %v3055 = vlaneseq
        %v3056 = vshrl.u32 %v3055, 7
        %v3057 = vsub.s32 1, %v3056
        %v3058 = vrot.slane %v3038, %v3057
        %v3059 = vmul.f32 %v3052, %v3058
        %v3060 = vmul.f32 %v3054, %v3058
        %v3061 = vadd.f32 %v3049, %v3059
        %v3062 = vadd.f32 %v3050, %v3060
        %3063 = vrot.lane.b32.xlu0 %v2867, 97
        %v3064 = vpop.permute.xlu0 %3063
        %3065 = vrot.lane.b32.xlu0 %v2868, 97
        %v3066 = vpop.permute.xlu0 %3065
        %v3067 = vlaneseq
        %v3068 = vshrl.u32 %v3067, 7
        %v3069 = vsub.s32 2, %v3068
        %v3070 = vrot.slane %v3038, %v3069
        %v3071 = vmul.f32 %v3064, %v3070
        %v3072 = vmul.f32 %v3066, %v3070
        %v3073 = vadd.f32 %v3061, %v3071
        %v3074 = vadd.f32 %v3062, %v3072
        %3075 = vrot.lane.b32.xlu0 %v2867, 96
        %v3076 = vpop.permute.xlu0 %3075
        %3077 = vrot.lane.b32.xlu0 %v2868, 96
        %v3078 = vpop.permute.xlu0 %3077
        %v3079 = vlaneseq
        %v3080 = vshrl.u32 %v3079, 7
        %v3081 = vsub.s32 3, %v3080
        %v3082 = vrot.slane %v3038, %v3081
        %v3083 = vmul.f32 %v3076, %v3082
        %v3084 = vmul.f32 %v3078, %v3082
        %v3085 = vadd.f32 %v3073, %v3083
        %v3086 = vadd.f32 %v3074, %v3084
        %3087 = vrot.lane.b32.xlu0 %v2867, 95
        %v3088 = vpop.permute.xlu0 %3087
        %3089 = vrot.lane.b32.xlu0 %v2868, 95
        %v3090 = vpop.permute.xlu0 %3089
        %v3091 = vlaneseq
        %v3092 = vshrl.u32 %v3091, 7
        %v3093 = vsub.s32 4, %v3092
        %v3094 = vrot.slane %v3038, %v3093
        %v3095 = vmul.f32 %v3088, %v3094
        %v3096 = vmul.f32 %v3090, %v3094
        %v3097 = vadd.f32 %v3085, %v3095
        %v3098 = vadd.f32 %v3086, %v3096
        %3099 = vrot.lane.b32.xlu0 %v2867, 94
        %v3100 = vpop.permute.xlu0 %3099
        %3101 = vrot.lane.b32.xlu0 %v2868, 94
        %v3102 = vpop.permute.xlu0 %3101
        %v3103 = vlaneseq
        %v3104 = vshrl.u32 %v3103, 7
        %v3105 = vsub.s32 5, %v3104
        %v3106 = vrot.slane %v3038, %v3105
        %v3107 = vmul.f32 %v3100, %v3106
        %v3108 = vmul.f32 %v3102, %v3106
        %v3109 = vadd.f32 %v3097, %v3107
        %v3110 = vadd.f32 %v3098, %v3108
        %3111 = vrot.lane.b32.xlu0 %v2867, 93
        %v3112 = vpop.permute.xlu0 %3111
        %3113 = vrot.lane.b32.xlu0 %v2868, 93
        %v3114 = vpop.permute.xlu0 %3113
        %v3115 = vlaneseq
        %v3116 = vshrl.u32 %v3115, 7
        %v3117 = vsub.s32 6, %v3116
        %v3118 = vrot.slane %v3038, %v3117
        %v3119 = vmul.f32 %v3112, %v3118
        %v3120 = vmul.f32 %v3114, %v3118
        %v3121 = vadd.f32 %v3109, %v3119
        %v3122 = vadd.f32 %v3110, %v3120
        %v3123 = vld [vmem:[#allocation3] sm:$0xff]
        %v3124 = vld [vmem:[#allocation3 + $0x8] sm:$0xff]
        %3127 = vrot.lane.b32.xlu0 %v3121, 96
        %v3128 = vpop.permute.xlu0 %3127
        %3129 = vrot.lane.b32.xlu0 %v3122, 96
        %v3130 = vpop.permute.xlu0 %3129
        %v3133 = vadd.f32 %v3123, %v3128
        %v3134 = vadd.f32 %v3124, %v3130
        %3135 = vst.msk [vmem:[#allocation3] sm:$0xff] %vm152, %v3133
        %3136 = vst.msk [vmem:[#allocation3 + $0x8] sm:$0xff] %vm152, %v3134
        %v3137 = vld [vmem:[#allocation3] sm:$0xff]
        %v3138 = vld [vmem:[#allocation3 + $0x8] sm:$0xff]
        %3139 = vst.msk [vmem:[%s136] sm:$0xff] %vm152, %v3137
        %3140 = vst.msk [vmem:[%s136 + $0x8] sm:$0xff] %vm152, %v3138
        %s3141 = sand.u32 %s71, 1
        %s3142 = scalar_lea.sflag [#allocation5], %s3141
        %s3143 = sand.u32 %s71, 1
        %s3144 = smul.addr %s3143, 16
        %s3145 = scalar_lea.vmem [#allocation4], %s3144
        // Predicated region
        $region29: #{tpu_custom_call.1} parent=27 // pred_check
          %p3146 = pneg %p81
        $region30: #{tpu_custom_call.1} parent=27 // pred_check_branch
          %3148 = sbr.rel (%p3146) target = $region32
        $region31: #{tpu_custom_call.1} parent=27 // pred_region
          %s3150 = ssub.s32 256, 256
          %3151 = vsyncadd %s3142, %s3150
          %s3152 = smul.addr %s16, 2
          %s3153 = smul.addr %s3152, 128
          %s3154 = scalar_lea.hbm %s2, %s3153
          %s3155 = sshll.u32 %s3145, 4
          %s3156 = int_to_ptr.vmem [resolvable:$true] %s3155
          %3161 = dma.vmem_to_hbm [thread:$0]  %s3156, 256, %s3154, %s3142, 128, 128, 8
        $region32: #{tpu_custom_call.1} parent=27 // pred_fallthru
          _
      $region28: #{tpu_custom_call.1} parent=5 // pred_fallthru
        _
      %p3162 = scmp.le.s32.totalorder 2, %s11
      // Predicated region
      $region33: #{tpu_custom_call.1} parent=5 // pred_check
        %p3163 = pneg %p3162
      $region34: #{tpu_custom_call.1} parent=5 // pred_check_branch
        %3165 = sbr.rel (%p3163) target = $region36
      $region35: #{tpu_custom_call.1} parent=5 // pred_region
        %s3166 = ssub.s32 %s11, 2
        // Predicated region
        $region37: #{tpu_custom_call.1} parent=35 // pred_check
          %p3167 = pneg %p87
        $region38: #{tpu_custom_call.1} parent=35 // pred_check_branch
          %3169 = sbr.rel (%p3167) target = $region40
        $region39: #{tpu_custom_call.1} parent=35 // pred_region
          %s3170 = sand.u32 %s72, 1
          %s3171 = scalar_lea.sflag [#allocation5], %s3170
          %s3172 = sand.u32 %s72, 1
          %s3173 = smul.addr %s3172, 16
          %s3174 = scalar_lea.vmem [#allocation4], %s3173
          %3175 = dma.done %s3171, 256
        $region40: #{tpu_custom_call.1} parent=35 // pred_fallthru
          _
      $region36: #{tpu_custom_call.1} parent=5 // pred_fallthru
        _
    $region6: #{tpu_custom_call.1} parent=1 // loop_footer
      %s15 = sadd.s32 1, %s11
    $region7: #{tpu_custom_call.1} parent=1 // loop_footer_branch
      %10 = sbr.rel target = $region3
    $region8: #{tpu_custom_call.1} parent=1 // loop_exit
      _
    %3176 = vsyncpa [#allocation5], 1
    %s3177 = scalar_lea.sflag [#allocation5], 1
    %3178 = vsyncpa %s3177, 1

</llo_original>
